<compile_context>
chip_gen: v7x
topology: tpu7x:2x2x1
jax: 0.10.0
libtpu: 0.0.40
codegen_flags: <defaults>
</compile_context>

<pallas_src>
import functools

import jax
import jax.numpy as jnp
from jax.experimental import pallas as pl
from jax.experimental.pallas import tpu as pltpu

# ----------------------------- configuration ------------------------------
VOCAB = 64          # synthetic vocab
MAX_POS = 16
TYPE_VOCAB = 2
H = 128             # hidden size (stands in for 768; lane-aligned & small)
NHEAD = 2
HEAD_DIM = H // NHEAD          # 64
PH = 128                       # lane-padded per-head block width (zero-padded 64..127)
QKVW = 3 * NHEAD * PH          # fused QKV width: [Q_h0|Q_h1|K_h0|K_h1|V_h0|V_h1]
FF = 256                       # feed-forward (intermediate) size
NLAYERS = 2
NUM_LABELS = 8
LANE = 128                     # lane-dense padding for the logits output
LN_EPS = 1e-12
NEG_INF = -1e9


# ------------------------------ kernel helpers -----------------------------
def _layernorm_bf16(x, gamma, beta, eps=LN_EPS):
    """f32 statistics / scale-shift, bf16 (matmul-ready) output."""
    mu = jnp.mean(x, axis=-1, keepdims=True)
    var = jnp.mean((x - mu) ** 2, axis=-1, keepdims=True)
    y = (x - mu) * jax.lax.rsqrt(var + eps) * gamma + beta
    return y.astype(jnp.bfloat16)


# ------------------------------ fused kernel -------------------------------
def _fused_kernel(emb_ref, maskbd_ref, embln_ref,
                  wqkv_ref, wo_ref, w1_ref, w2_ref, vecs_ref,
                  clsw_ref, clsb_ref, logits_ref):
    BS = emb_ref.shape[0]
    scale = 1.0 / (HEAD_DIM ** 0.5)
    mask_bd = maskbd_ref[...]                                   # (BS, BS) block-diag additive

    # embedding LayerNorm -> resident bf16 hidden state (plain value; single grid step)
    x = _layernorm_bf16(emb_ref[...], embln_ref[0:1, :], embln_ref[1:2, :])

    for l in range(NLAYERS):                                    # static unroll; weights resident
        vecs = vecs_ref[l]                                      # (8, QKVW) packed per-layer vecs
        bqkv = vecs[0:1, :]
        bo = vecs[1:2, :H]
        b1 = vecs[2:3, :FF]
        b2 = vecs[3:4, :H]
        ln1g, ln1b = vecs[4:5, :H], vecs[5:6, :H]
        ln2g, ln2b = vecs[6:7, :H], vecs[7:8, :H]

        # fused head-padded QKV projection; every head block is 128-lane aligned and the
        # padded lanes (64..127 of each head) are exactly zero (weights AND bias).
        qkv = jnp.dot(x, wqkv_ref[l], preferred_element_type=jnp.float32) + bqkv

        wo_l = wo_ref[l]                                        # (NHEAD*PH, H), zero pad rows
        attn = jnp.zeros((BS, H), jnp.float32)
        for h in range(NHEAD):                                  # static unroll; aligned slices
            q = qkv[:, h * PH:(h + 1) * PH].astype(jnp.bfloat16)
            k = qkv[:, (NHEAD + h) * PH:(NHEAD + h + 1) * PH].astype(jnp.bfloat16)
            v = qkv[:, (2 * NHEAD + h) * PH:(2 * NHEAD + h + 1) * PH].astype(jnp.bfloat16)
            # all batch elements at once: (BS, BS) scores; cross-batch / padded-key pairs
            # are killed by the block-diagonal additive mask.
            scores = jax.lax.dot_general(q, k, (((1,), (1,)), ((), ())),
                                         preferred_element_type=jnp.float32)
            scores = scores * scale + mask_bd
            scores = scores - jnp.max(scores, axis=-1, keepdims=True)
            p = jnp.exp(scores)
            p = p / jnp.sum(p, axis=-1, keepdims=True)          # exact normalization
            ctx = jnp.dot(p.astype(jnp.bfloat16), v, preferred_element_type=jnp.float32)
            # ctx @ Wo_h accumulates directly -> no sublane concatenate
            attn = attn + jnp.dot(ctx.astype(jnp.bfloat16), wo_l[h * PH:(h + 1) * PH, :],
                                  preferred_element_type=jnp.float32)
        attn = attn + bo

        h1 = _layernorm_bf16(x.astype(jnp.float32) + attn, ln1g, ln1b)

        ff = jnp.dot(h1, w1_ref[l], preferred_element_type=jnp.float32) + b1
        # TODO(synk): HF ELECTRA uses exact erf-GELU; tanh approximation used here.
        ff = jax.nn.gelu(ff, approximate=True)
        ff2 = jnp.dot(ff.astype(jnp.bfloat16), w2_ref[l],
                      preferred_element_type=jnp.float32) + b2

        x = _layernorm_bf16(h1.astype(jnp.float32) + ff2, ln2g, ln2b)

    # classification head on the CLS token of batch element 0 (reference: hidden[0, 0, :],
    # NOT per-batch [:, 0] pooling -> logits shape (1, num_labels) regardless of B).
    pooled = x[0:1, :]
    # Reference's pre_classifier+ReLU result is discarded (dead code) -> not computed.
    # TODO(synk): dropout(p=0.1) treated as identity (inference mode).
    logits_ref[...] = (jnp.dot(pooled, clsw_ref[...], preferred_element_type=jnp.float32)
                       + clsb_ref[...])


# ------------------------------ pallas wrapper ------------------------------
def electra_fused_forward(emb_flat, mask_bd, kp):
    BS = emb_flat.shape[0]

    def full(shape):
        return pl.BlockSpec(shape, lambda i: (0,) * len(shape))

    return pl.pallas_call(
        _fused_kernel,
        out_shape=jax.ShapeDtypeStruct((1, LANE), jnp.float32),
        grid=(1,),                                   # whole forward in one resident step
        in_specs=[
            full((BS, H)),                           # embeddings (flattened, post-sum)
            full((BS, BS)),                          # block-diagonal additive mask
            full((2, H)),                            # embedding LN gamma/beta
            full((NLAYERS, H, QKVW)),                # fused, head-padded QKV weights (bf16)
            full((NLAYERS, NHEAD * PH, H)),          # per-head padded output proj (bf16)
            full((NLAYERS, H, FF)),                  # FF up (bf16)
            full((NLAYERS, FF, H)),                  # FF down (bf16)
            full((NLAYERS, 8, QKVW)),                # packed per-layer biases / LN params
            full((H, LANE)),                         # classifier W (lane-padded, bf16)
            full((1, LANE)),                         # classifier b (lane-padded)
        ],
        out_specs=pl.BlockSpec((1, LANE), lambda i: (0, 0)),
        compiler_params=pltpu.CompilerParams(dimension_semantics=("arbitrary",)),
    )(emb_flat, mask_bd, kp["embln"], kp["wqkv"], kp["wo"], kp["w1"], kp["w2"],
      kp["vecs"], kp["cls_w"], kp["cls_b"])


# ------------------------------ model assembly -----------------------------
def init_params(key):
    keys = iter(jax.random.split(key, 24))

    def normal(shape, scale=0.02):
        return (scale * jax.random.normal(next(keys), shape)).astype(jnp.float32)

    return {
        "word_emb": normal((VOCAB, H)),
        "pos_emb": normal((MAX_POS, H)),
        "type_emb": normal((TYPE_VOCAB, H)),
        "emb_ln_g": jnp.ones((H,), jnp.float32),
        "emb_ln_b": jnp.zeros((H,), jnp.float32),
        "wqkv": normal((NLAYERS, H, 3 * H)),
        "bqkv": jnp.zeros((NLAYERS, 3 * H), jnp.float32),
        "wo": normal((NLAYERS, H, H)),
        "bo": jnp.zeros((NLAYERS, H), jnp.float32),
        "ln1_g": jnp.ones((NLAYERS, H), jnp.float32),
        "ln1_b": jnp.zeros((NLAYERS, H), jnp.float32),
        "w1": normal((NLAYERS, H, FF)),
        "b1": jnp.zeros((NLAYERS, FF), jnp.float32),
        "w2": normal((NLAYERS, FF, H)),
        "b2": jnp.zeros((NLAYERS, H), jnp.float32),
        "ln2_g": jnp.ones((NLAYERS, H), jnp.float32),
        "ln2_b": jnp.zeros((NLAYERS, H), jnp.float32),
        # pre_classifier kept for module parity; its output is dead code in the forward.
        "pre_w": normal((H, H)),
        "pre_b": jnp.zeros((H,), jnp.float32),
        "cls_w": normal((H, NUM_LABELS)),
        "cls_b": jnp.zeros((NUM_LABELS,), jnp.float32),
    }


def pack_params(p):
    """One-time host-side repack into the lane-aligned, head-padded kernel layout."""
    # fused QKV: columns [Q_h0|Q_h1|K_h0|K_h1|V_h0|V_h1], each head block 128 wide,
    # lanes HEAD_DIM..PH-1 are exact zeros (weights and bias) so results are unchanged.
    wqkv = p["wqkv"].reshape(NLAYERS, H, 3, NHEAD, HEAD_DIM)
    wqkv_pad = jnp.zeros((NLAYERS, H, 3, NHEAD, PH), jnp.float32)
    wqkv_pad = wqkv_pad.at[..., :HEAD_DIM].set(wqkv).reshape(NLAYERS, H, QKVW)
    bqkv = p["bqkv"].reshape(NLAYERS, 3, NHEAD, HEAD_DIM)
    bqkv_pad = jnp.zeros((NLAYERS, 3, NHEAD, PH), jnp.float32)
    bqkv_pad = bqkv_pad.at[..., :HEAD_DIM].set(bqkv).reshape(NLAYERS, QKVW)

    # output projection with matching zero rows for the padded head lanes
    wo = p["wo"].reshape(NLAYERS, NHEAD, HEAD_DIM, H)
    wo_pad = jnp.zeros((NLAYERS, NHEAD, PH, H), jnp.float32)
    wo_pad = wo_pad.at[:, :, :HEAD_DIM, :].set(wo).reshape(NLAYERS, NHEAD * PH, H)

    # all small per-layer vectors packed into one (NLAYERS, 8, QKVW) array
    vecs = jnp.zeros((NLAYERS, 8, QKVW), jnp.float32)
    vecs = vecs.at[:, 0, :].set(bqkv_pad)
    vecs = vecs.at[:, 1, :H].set(p["bo"])
    vecs = vecs.at[:, 2, :FF].set(p["b1"])
    vecs = vecs.at[:, 3, :H].set(p["b2"])
    vecs = vecs.at[:, 4, :H].set(p["ln1_g"])
    vecs = vecs.at[:, 5, :H].set(p["ln1_b"])
    vecs = vecs.at[:, 6, :H].set(p["ln2_g"])
    vecs = vecs.at[:, 7, :H].set(p["ln2_b"])

    embln = jnp.stack([p["emb_ln_g"], p["emb_ln_b"]], axis=0)           # (2, H)

    cls_w_pad = jnp.zeros((H, LANE), jnp.float32).at[:, :NUM_LABELS].set(p["cls_w"])
    cls_b_pad = jnp.zeros((1, LANE), jnp.float32).at[0, :NUM_LABELS].set(p["cls_b"])

    return {
        "word_emb": p["word_emb"], "pos_emb": p["pos_emb"], "type_emb": p["type_emb"],
        "embln": embln,
        "wqkv": wqkv_pad.astype(jnp.bfloat16),
        "wo": wo_pad.astype(jnp.bfloat16),
        "w1": p["w1"].astype(jnp.bfloat16),
        "w2": p["w2"].astype(jnp.bfloat16),
        "vecs": vecs,
        "cls_w": cls_w_pad.astype(jnp.bfloat16),
        "cls_b": cls_b_pad,
    }


def bert_for_multilabel_forward(kp, input_ids, attention_mask, token_type_ids=None):
    B, S = input_ids.shape
    if token_type_ids is None:
        token_type_ids = jnp.zeros_like(input_ids)

    # ---- embeddings (gather is glue, done in plain JAX) ----
    pos_ids = jnp.arange(S)
    emb = (jnp.take(kp["word_emb"], input_ids, axis=0)
           + kp["pos_emb"][pos_ids][None, :, :]
           + jnp.take(kp["type_emb"], token_type_ids, axis=0))
    emb_flat = emb.reshape(B * S, H).astype(jnp.float32)

    # block-diagonal additive mask over the flattened (B*S, B*S) score matrix:
    # -1e9 for cross-batch pairs and for padded key tokens, 0 otherwise.
    batch_id = jnp.arange(B * S) // S
    same_batch = batch_id[:, None] == batch_id[None, :]
    key_valid = attention_mask.reshape(B * S).astype(bool)[None, :]
    mask_bd = jnp.where(same_batch & key_valid, 0.0, NEG_INF).astype(jnp.float32)

    logits_pad = electra_fused_forward(emb_flat, mask_bd, kp)
    return logits_pad[:, :NUM_LABELS]                                   # (1, num_labels)


# ----------------------------------- main ----------------------------------
if __name__ == "__main__":
    key = jax.random.PRNGKey(0)
    pkey, ikey = jax.random.split(key)
    params = pack_params(init_params(pkey))

    B, S = 2, 8
    input_ids = jax.random.randint(ikey, (B, S), 0, VOCAB, dtype=jnp.int32)
    attention_mask = jnp.array([[1, 1, 1, 1, 1, 1, 0, 0],
                                [1, 1, 1, 1, 1, 1, 1, 1]], dtype=jnp.int32)

    fwd = jax.jit(functools.partial(bert_for_multilabel_forward, params))
    logits = fwd(input_ids, attention_mask)
    jax.block_until_ready(logits)

    assert logits.shape == (1, NUM_LABELS), logits.shape
    assert logits.dtype == jnp.float32
    assert bool(jnp.all(jnp.isfinite(logits)))
    print("KERNEL_OK")
</pallas_src>

<mosaic_0001>
module attributes {stable_mosaic.version = 11 : i64} {
  func.func @_fused_kernel(%arg0: i32, %arg1: memref<16x128xf32, #tpu.memory_space<vmem>>, %arg2: memref<16x16xf32, #tpu.memory_space<vmem>>, %arg3: memref<2x128xf32, #tpu.memory_space<vmem>>, %arg4: memref<2x128x768xbf16, #tpu.memory_space<vmem>>, %arg5: memref<2x256x128xbf16, #tpu.memory_space<vmem>>, %arg6: memref<2x128x256xbf16, #tpu.memory_space<vmem>>, %arg7: memref<2x256x128xbf16, #tpu.memory_space<vmem>>, %arg8: memref<2x8x768xf32, #tpu.memory_space<vmem>>, %arg9: memref<128x128xbf16, #tpu.memory_space<vmem>>, %arg10: memref<1x128xf32, #tpu.memory_space<vmem>>, %arg11: memref<1x128xf32, #tpu.memory_space<vmem>>) attributes {dimension_semantics = [#tpu.dimension_semantics<arbitrary>], iteration_bounds = array<i64: 1>, scalar_prefetch = 0 : i64, scratch_operands = 0 : i64, tpu.core_type = #tpu.core_type<tc>, window_params = [{pipeline_mode = #tpu.pipeline_mode<synchronous>, transform_indices = @transform_0, window_bounds = array<i64: 16, 128>}, {pipeline_mode = #tpu.pipeline_mode<synchronous>, transform_indices = @transform_1, window_bounds = array<i64: 16, 16>}, {pipeline_mode = #tpu.pipeline_mode<synchronous>, transform_indices = @transform_2, window_bounds = array<i64: 2, 128>}, {pipeline_mode = #tpu.pipeline_mode<synchronous>, transform_indices = @transform_3, window_bounds = array<i64: 2, 128, 768>}, {pipeline_mode = #tpu.pipeline_mode<synchronous>, transform_indices = @transform_4, window_bounds = array<i64: 2, 256, 128>}, {pipeline_mode = #tpu.pipeline_mode<synchronous>, transform_indices = @transform_5, window_bounds = array<i64: 2, 128, 256>}, {pipeline_mode = #tpu.pipeline_mode<synchronous>, transform_indices = @transform_6, window_bounds = array<i64: 2, 256, 128>}, {pipeline_mode = #tpu.pipeline_mode<synchronous>, transform_indices = @transform_7, window_bounds = array<i64: 2, 8, 768>}, {pipeline_mode = #tpu.pipeline_mode<synchronous>, transform_indices = @transform_8, window_bounds = array<i64: 128, 128>}, {pipeline_mode = #tpu.pipeline_mode<synchronous>, transform_indices = @transform_9, window_bounds = array<i64: 1, 128>}, {pipeline_mode = #tpu.pipeline_mode<synchronous>, transform_indices = @transform_10, window_bounds = array<i64: 1, 128>}]} {
    %c0 = arith.constant 0 : index
    %c0_0 = arith.constant 0 : index
    %0 = vector.load %arg2[%c0, %c0_0] : memref<16x16xf32, #tpu.memory_space<vmem>>, vector<16x16xf32>
    %c0_1 = arith.constant 0 : index
    %c0_2 = arith.constant 0 : index
    %1 = vector.load %arg1[%c0_1, %c0_2] : memref<16x128xf32, #tpu.memory_space<vmem>>, vector<16x128xf32>
    %c0_3 = arith.constant 0 : index
    %c0_4 = arith.constant 0 : index
    %2 = vector.load %arg3[%c0_3, %c0_4] : memref<2x128xf32, #tpu.memory_space<vmem>>, vector<1x128xf32>
    %c1 = arith.constant 1 : index
    %c0_5 = arith.constant 0 : index
    %3 = vector.load %arg3[%c1, %c0_5] : memref<2x128xf32, #tpu.memory_space<vmem>>, vector<1x128xf32>
    %cst = arith.constant dense<0.000000e+00> : vector<16xf32>
    %4 = vector.multi_reduction <add>, %1, %cst [1] : vector<16x128xf32> to vector<16xf32>
    %5 = vector.shape_cast %4 : vector<16xf32> to vector<16x1xf32>
    %cst_6 = arith.constant 1.280000e+02 : f32
    %6 = vector.broadcast %cst_6 : f32 to vector<16x1xf32>
    %7 = arith.divf %5, %6 : vector<16x1xf32>
    %8 = vector.broadcast %7 : vector<16x1xf32> to vector<16x128xf32>
    %9 = arith.subf %1, %8 : vector<16x128xf32>
    %10 = arith.mulf %9, %9 : vector<16x128xf32>
    %cst_7 = arith.constant dense<0.000000e+00> : vector<16xf32>
    %11 = vector.multi_reduction <add>, %10, %cst_7 [1] : vector<16x128xf32> to vector<16xf32>
    %12 = vector.shape_cast %11 : vector<16xf32> to vector<16x1xf32>
    %cst_8 = arith.constant 1.280000e+02 : f32
    %13 = vector.broadcast %cst_8 : f32 to vector<16x1xf32>
    %14 = arith.divf %12, %13 : vector<16x1xf32>
    %15 = vector.broadcast %7 : vector<16x1xf32> to vector<16x128xf32>
    %16 = arith.subf %1, %15 : vector<16x128xf32>
    %cst_9 = arith.constant 9.99999996E-13 : f32
    %17 = vector.broadcast %cst_9 : f32 to vector<16x1xf32>
    %18 = arith.addf %14, %17 : vector<16x1xf32>
    %19 = math.rsqrt %18 : vector<16x1xf32>
    %20 = vector.broadcast %19 : vector<16x1xf32> to vector<16x128xf32>
    %21 = arith.mulf %16, %20 : vector<16x128xf32>
    %22 = vector.broadcast %2 : vector<1x128xf32> to vector<16x128xf32>
    %23 = arith.mulf %21, %22 : vector<16x128xf32>
    %24 = vector.broadcast %3 : vector<1x128xf32> to vector<16x128xf32>
    %25 = arith.addf %23, %24 : vector<16x128xf32>
    %26 = arith.truncf %25 : vector<16x128xf32> to vector<16x128xbf16>
    %c0_10 = arith.constant 0 : index
    %c0_11 = arith.constant 0 : index
    %c0_12 = arith.constant 0 : index
    %27 = vector.load %arg8[%c0_10, %c0_11, %c0_12] : memref<2x8x768xf32, #tpu.memory_space<vmem>>, vector<1x8x768xf32>
    %28 = vector.shape_cast %27 : vector<1x8x768xf32> to vector<8x768xf32>
    %29 = vector.extract_strided_slice %28 {offsets = [0, 0], sizes = [1, 768], strides = [1, 1]} : vector<8x768xf32> to vector<1x768xf32>
    %30 = vector.extract_strided_slice %28 {offsets = [1, 0], sizes = [1, 128], strides = [1, 1]} : vector<8x768xf32> to vector<1x128xf32>
    %31 = vector.extract_strided_slice %28 {offsets = [2, 0], sizes = [1, 256], strides = [1, 1]} : vector<8x768xf32> to vector<1x256xf32>
    %32 = vector.extract_strided_slice %28 {offsets = [3, 0], sizes = [1, 128], strides = [1, 1]} : vector<8x768xf32> to vector<1x128xf32>
    %33 = vector.extract_strided_slice %28 {offsets = [4, 0], sizes = [1, 128], strides = [1, 1]} : vector<8x768xf32> to vector<1x128xf32>
    %34 = vector.extract_strided_slice %28 {offsets = [5, 0], sizes = [1, 128], strides = [1, 1]} : vector<8x768xf32> to vector<1x128xf32>
    %35 = vector.extract_strided_slice %28 {offsets = [6, 0], sizes = [1, 128], strides = [1, 1]} : vector<8x768xf32> to vector<1x128xf32>
    %36 = vector.extract_strided_slice %28 {offsets = [7, 0], sizes = [1, 128], strides = [1, 1]} : vector<8x768xf32> to vector<1x128xf32>
    %c0_13 = arith.constant 0 : index
    %c0_14 = arith.constant 0 : index
    %c0_15 = arith.constant 0 : index
    %37 = vector.load %arg4[%c0_13, %c0_14, %c0_15] : memref<2x128x768xbf16, #tpu.memory_space<vmem>>, vector<1x128x768xbf16>
    %38 = vector.shape_cast %37 : vector<1x128x768xbf16> to vector<128x768xbf16>
    %cst_16 = arith.constant dense<0.000000e+00> : vector<16x768xf32>
    %39 = tpu.matmul %26, %38, %cst_16 {dimension_numbers = #tpu.dot_dimension_numbers<[1], [0], [0], [1], [0, 0, 1, 1], [], []>} : vector<16x128xbf16>, vector<128x768xbf16>, vector<16x768xf32> -> vector<16x768xf32>
    %40 = vector.broadcast %29 : vector<1x768xf32> to vector<16x768xf32>
    %41 = arith.addf %39, %40 : vector<16x768xf32>
    %c0_17 = arith.constant 0 : index
    %c0_18 = arith.constant 0 : index
    %c0_19 = arith.constant 0 : index
    %42 = vector.load %arg5[%c0_17, %c0_18, %c0_19] : memref<2x256x128xbf16, #tpu.memory_space<vmem>>, vector<1x256x128xbf16>
    %43 = vector.shape_cast %42 : vector<1x256x128xbf16> to vector<256x128xbf16>
    %cst_20 = arith.constant 0.000000e+00 : f32
    %44 = vector.broadcast %cst_20 : f32 to vector<16x128xf32>
    %45 = vector.extract_strided_slice %41 {offsets = [0, 0], sizes = [16, 128], strides = [1, 1]} : vector<16x768xf32> to vector<16x128xf32>
    %46 = arith.truncf %45 : vector<16x128xf32> to vector<16x128xbf16>
    %47 = vector.extract_strided_slice %41 {offsets = [0, 256], sizes = [16, 128], strides = [1, 1]} : vector<16x768xf32> to vector<16x128xf32>
    %48 = arith.truncf %47 : vector<16x128xf32> to vector<16x128xbf16>
    %49 = vector.extract_strided_slice %41 {offsets = [0, 512], sizes = [16, 128], strides = [1, 1]} : vector<16x768xf32> to vector<16x128xf32>
    %50 = arith.truncf %49 : vector<16x128xf32> to vector<16x128xbf16>
    %cst_21 = arith.constant dense<0.000000e+00> : vector<16x16xf32>
    %51 = tpu.matmul %46, %48, %cst_21 {dimension_numbers = #tpu.dot_dimension_numbers<[1], [1], [0], [0], [0, 0, 1, 0], [], []>} : vector<16x128xbf16>, vector<16x128xbf16>, vector<16x16xf32> -> vector<16x16xf32>
    %cst_22 = arith.constant 1.250000e-01 : f32
    %52 = vector.broadcast %cst_22 : f32 to vector<16x16xf32>
    %53 = arith.mulf %51, %52 : vector<16x16xf32>
    %54 = arith.addf %53, %0 : vector<16x16xf32>
    %cst_23 = arith.constant dense<0xFF800000> : vector<16xf32>
    %55 = vector.multi_reduction <maximumf>, %54, %cst_23 [1] : vector<16x16xf32> to vector<16xf32>
    %56 = vector.shape_cast %55 : vector<16xf32> to vector<16x1xf32>
    %57 = vector.broadcast %56 : vector<16x1xf32> to vector<16x16xf32>
    %58 = arith.subf %54, %57 : vector<16x16xf32>
    %59 = math.exp %58 : vector<16x16xf32>
    %cst_24 = arith.constant dense<0.000000e+00> : vector<16xf32>
    %60 = vector.multi_reduction <add>, %59, %cst_24 [1] : vector<16x16xf32> to vector<16xf32>
    %61 = vector.shape_cast %60 : vector<16xf32> to vector<16x1xf32>
    %62 = vector.broadcast %61 : vector<16x1xf32> to vector<16x16xf32>
    %63 = arith.divf %59, %62 : vector<16x16xf32>
    %64 = arith.truncf %63 : vector<16x16xf32> to vector<16x16xbf16>
    %cst_25 = arith.constant dense<0.000000e+00> : vector<16x128xf32>
    %65 = tpu.matmul %64, %50, %cst_25 {dimension_numbers = #tpu.dot_dimension_numbers<[1], [0], [0], [1], [0, 0, 1, 1], [], []>} : vector<16x16xbf16>, vector<16x128xbf16>, vector<16x128xf32> -> vector<16x128xf32>
    %66 = arith.truncf %65 : vector<16x128xf32> to vector<16x128xbf16>
    %67 = vector.extract_strided_slice %43 {offsets = [0, 0], sizes = [128, 128], strides = [1, 1]} : vector<256x128xbf16> to vector<128x128xbf16>
    %cst_26 = arith.constant dense<0.000000e+00> : vector<16x128xf32>
    %68 = tpu.matmul %66, %67, %cst_26 {dimension_numbers = #tpu.dot_dimension_numbers<[1], [0], [0], [1], [0, 0, 1, 1], [], []>} : vector<16x128xbf16>, vector<128x128xbf16>, vector<16x128xf32> -> vector<16x128xf32>
    %69 = arith.addf %44, %68 : vector<16x128xf32>
    %70 = vector.extract_strided_slice %41 {offsets = [0, 128], sizes = [16, 128], strides = [1, 1]} : vector<16x768xf32> to vector<16x128xf32>
    %71 = arith.truncf %70 : vector<16x128xf32> to vector<16x128xbf16>
    %72 = vector.extract_strided_slice %41 {offsets = [0, 384], sizes = [16, 128], strides = [1, 1]} : vector<16x768xf32> to vector<16x128xf32>
    %73 = arith.truncf %72 : vector<16x128xf32> to vector<16x128xbf16>
    %74 = vector.extract_strided_slice %41 {offsets = [0, 640], sizes = [16, 128], strides = [1, 1]} : vector<16x768xf32> to vector<16x128xf32>
    %75 = arith.truncf %74 : vector<16x128xf32> to vector<16x128xbf16>
    %cst_27 = arith.constant dense<0.000000e+00> : vector<16x16xf32>
    %76 = tpu.matmul %71, %73, %cst_27 {dimension_numbers = #tpu.dot_dimension_numbers<[1], [1], [0], [0], [0, 0, 1, 0], [], []>} : vector<16x128xbf16>, vector<16x128xbf16>, vector<16x16xf32> -> vector<16x16xf32>
    %cst_28 = arith.constant 1.250000e-01 : f32
    %77 = vector.broadcast %cst_28 : f32 to vector<16x16xf32>
    %78 = arith.mulf %76, %77 : vector<16x16xf32>
    %79 = arith.addf %78, %0 : vector<16x16xf32>
    %cst_29 = arith.constant dense<0xFF800000> : vector<16xf32>
    %80 = vector.multi_reduction <maximumf>, %79, %cst_29 [1] : vector<16x16xf32> to vector<16xf32>
    %81 = vector.shape_cast %80 : vector<16xf32> to vector<16x1xf32>
    %82 = vector.broadcast %81 : vector<16x1xf32> to vector<16x16xf32>
    %83 = arith.subf %79, %82 : vector<16x16xf32>
    %84 = math.exp %83 : vector<16x16xf32>
    %cst_30 = arith.constant dense<0.000000e+00> : vector<16xf32>
    %85 = vector.multi_reduction <add>, %84, %cst_30 [1] : vector<16x16xf32> to vector<16xf32>
    %86 = vector.shape_cast %85 : vector<16xf32> to vector<16x1xf32>
    %87 = vector.broadcast %86 : vector<16x1xf32> to vector<16x16xf32>
    %88 = arith.divf %84, %87 : vector<16x16xf32>
    %89 = arith.truncf %88 : vector<16x16xf32> to vector<16x16xbf16>
    %cst_31 = arith.constant dense<0.000000e+00> : vector<16x128xf32>
    %90 = tpu.matmul %89, %75, %cst_31 {dimension_numbers = #tpu.dot_dimension_numbers<[1], [0], [0], [1], [0, 0, 1, 1], [], []>} : vector<16x16xbf16>, vector<16x128xbf16>, vector<16x128xf32> -> vector<16x128xf32>
    %91 = arith.truncf %90 : vector<16x128xf32> to vector<16x128xbf16>
    %92 = vector.extract_strided_slice %43 {offsets = [128, 0], sizes = [128, 128], strides = [1, 1]} : vector<256x128xbf16> to vector<128x128xbf16>
    %cst_32 = arith.constant dense<0.000000e+00> : vector<16x128xf32>
    %93 = tpu.matmul %91, %92, %cst_32 {dimension_numbers = #tpu.dot_dimension_numbers<[1], [0], [0], [1], [0, 0, 1, 1], [], []>} : vector<16x128xbf16>, vector<128x128xbf16>, vector<16x128xf32> -> vector<16x128xf32>
    %94 = arith.addf %69, %93 : vector<16x128xf32>
    %95 = vector.broadcast %30 : vector<1x128xf32> to vector<16x128xf32>
    %96 = arith.addf %94, %95 : vector<16x128xf32>
    %97 = arith.extf %26 : vector<16x128xbf16> to vector<16x128xf32>
    %98 = arith.addf %97, %96 : vector<16x128xf32>
    %cst_33 = arith.constant dense<0.000000e+00> : vector<16xf32>
    %99 = vector.multi_reduction <add>, %98, %cst_33 [1] : vector<16x128xf32> to vector<16xf32>
    %100 = vector.shape_cast %99 : vector<16xf32> to vector<16x1xf32>
    %cst_34 = arith.constant 1.280000e+02 : f32
    %101 = vector.broadcast %cst_34 : f32 to vector<16x1xf32>
    %102 = arith.divf %100, %101 : vector<16x1xf32>
    %103 = vector.broadcast %102 : vector<16x1xf32> to vector<16x128xf32>
    %104 = arith.subf %98, %103 : vector<16x128xf32>
    %105 = arith.mulf %104, %104 : vector<16x128xf32>
    %cst_35 = arith.constant dense<0.000000e+00> : vector<16xf32>
    %106 = vector.multi_reduction <add>, %105, %cst_35 [1] : vector<16x128xf32> to vector<16xf32>
    %107 = vector.shape_cast %106 : vector<16xf32> to vector<16x1xf32>
    %cst_36 = arith.constant 1.280000e+02 : f32
    %108 = vector.broadcast %cst_36 : f32 to vector<16x1xf32>
    %109 = arith.divf %107, %108 : vector<16x1xf32>
    %110 = vector.broadcast %102 : vector<16x1xf32> to vector<16x128xf32>
    %111 = arith.subf %98, %110 : vector<16x128xf32>
    %cst_37 = arith.constant 9.99999996E-13 : f32
    %112 = vector.broadcast %cst_37 : f32 to vector<16x1xf32>
    %113 = arith.addf %109, %112 : vector<16x1xf32>
    %114 = math.rsqrt %113 : vector<16x1xf32>
    %115 = vector.broadcast %114 : vector<16x1xf32> to vector<16x128xf32>
    %116 = arith.mulf %111, %115 : vector<16x128xf32>
    %117 = vector.broadcast %33 : vector<1x128xf32> to vector<16x128xf32>
    %118 = arith.mulf %116, %117 : vector<16x128xf32>
    %119 = vector.broadcast %34 : vector<1x128xf32> to vector<16x128xf32>
    %120 = arith.addf %118, %119 : vector<16x128xf32>
    %121 = arith.truncf %120 : vector<16x128xf32> to vector<16x128xbf16>
    %c0_38 = arith.constant 0 : index
    %c0_39 = arith.constant 0 : index
    %c0_40 = arith.constant 0 : index
    %122 = vector.load %arg6[%c0_38, %c0_39, %c0_40] : memref<2x128x256xbf16, #tpu.memory_space<vmem>>, vector<1x128x256xbf16>
    %123 = vector.shape_cast %122 : vector<1x128x256xbf16> to vector<128x256xbf16>
    %cst_41 = arith.constant dense<0.000000e+00> : vector<16x256xf32>
    %124 = tpu.matmul %121, %123, %cst_41 {dimension_numbers = #tpu.dot_dimension_numbers<[1], [0], [0], [1], [0, 0, 1, 1], [], []>} : vector<16x128xbf16>, vector<128x256xbf16>, vector<16x256xf32> -> vector<16x256xf32>
    %125 = vector.broadcast %31 : vector<1x256xf32> to vector<16x256xf32>
    %126 = arith.addf %124, %125 : vector<16x256xf32>
    %127 = arith.mulf %126, %126 : vector<16x256xf32>
    %128 = arith.mulf %126, %127 : vector<16x256xf32>
    %cst_42 = arith.constant 4.471500e-02 : f32
    %129 = vector.broadcast %cst_42 : f32 to vector<16x256xf32>
    %130 = arith.mulf %129, %128 : vector<16x256xf32>
    %131 = arith.addf %126, %130 : vector<16x256xf32>
    %cst_43 = arith.constant 0.797884583 : f32
    %132 = vector.broadcast %cst_43 : f32 to vector<16x256xf32>
    %133 = arith.mulf %132, %131 : vector<16x256xf32>
    %134 = math.tanh %133 : vector<16x256xf32>
    %cst_44 = arith.constant 1.000000e+00 : f32
    %135 = vector.broadcast %cst_44 : f32 to vector<16x256xf32>
    %136 = arith.addf %135, %134 : vector<16x256xf32>
    %cst_45 = arith.constant 5.000000e-01 : f32
    %137 = vector.broadcast %cst_45 : f32 to vector<16x256xf32>
    %138 = arith.mulf %137, %136 : vector<16x256xf32>
    %139 = arith.mulf %126, %138 : vector<16x256xf32>
    %140 = arith.truncf %139 : vector<16x256xf32> to vector<16x256xbf16>
    %c0_46 = arith.constant 0 : index
    %c0_47 = arith.constant 0 : index
    %c0_48 = arith.constant 0 : index
    %141 = vector.load %arg7[%c0_46, %c0_47, %c0_48] : memref<2x256x128xbf16, #tpu.memory_space<vmem>>, vector<1x256x128xbf16>
    %142 = vector.shape_cast %141 : vector<1x256x128xbf16> to vector<256x128xbf16>
    %cst_49 = arith.constant dense<0.000000e+00> : vector<16x128xf32>
    %143 = tpu.matmul %140, %142, %cst_49 {dimension_numbers = #tpu.dot_dimension_numbers<[1], [0], [0], [1], [0, 0, 1, 1], [], []>} : vector<16x256xbf16>, vector<256x128xbf16>, vector<16x128xf32> -> vector<16x128xf32>
    %144 = vector.broadcast %32 : vector<1x128xf32> to vector<16x128xf32>
    %145 = arith.addf %143, %144 : vector<16x128xf32>
    %146 = arith.extf %121 : vector<16x128xbf16> to vector<16x128xf32>
    %147 = arith.addf %146, %145 : vector<16x128xf32>
    %cst_50 = arith.constant dense<0.000000e+00> : vector<16xf32>
    %148 = vector.multi_reduction <add>, %147, %cst_50 [1] : vector<16x128xf32> to vector<16xf32>
    %149 = vector.shape_cast %148 : vector<16xf32> to vector<16x1xf32>
    %cst_51 = arith.constant 1.280000e+02 : f32
    %150 = vector.broadcast %cst_51 : f32 to vector<16x1xf32>
    %151 = arith.divf %149, %150 : vector<16x1xf32>
    %152 = vector.broadcast %151 : vector<16x1xf32> to vector<16x128xf32>
    %153 = arith.subf %147, %152 : vector<16x128xf32>
    %154 = arith.mulf %153, %153 : vector<16x128xf32>
    %cst_52 = arith.constant dense<0.000000e+00> : vector<16xf32>
    %155 = vector.multi_reduction <add>, %154, %cst_52 [1] : vector<16x128xf32> to vector<16xf32>
    %156 = vector.shape_cast %155 : vector<16xf32> to vector<16x1xf32>
    %cst_53 = arith.constant 1.280000e+02 : f32
    %157 = vector.broadcast %cst_53 : f32 to vector<16x1xf32>
    %158 = arith.divf %156, %157 : vector<16x1xf32>
    %159 = vector.broadcast %151 : vector<16x1xf32> to vector<16x128xf32>
    %160 = arith.subf %147, %159 : vector<16x128xf32>
    %cst_54 = arith.constant 9.99999996E-13 : f32
    %161 = vector.broadcast %cst_54 : f32 to vector<16x1xf32>
    %162 = arith.addf %158, %161 : vector<16x1xf32>
    %163 = math.rsqrt %162 : vector<16x1xf32>
    %164 = vector.broadcast %163 : vector<16x1xf32> to vector<16x128xf32>
    %165 = arith.mulf %160, %164 : vector<16x128xf32>
    %166 = vector.broadcast %35 : vector<1x128xf32> to vector<16x128xf32>
    %167 = arith.mulf %165, %166 : vector<16x128xf32>
    %168 = vector.broadcast %36 : vector<1x128xf32> to vector<16x128xf32>
    %169 = arith.addf %167, %168 : vector<16x128xf32>
    %170 = arith.truncf %169 : vector<16x128xf32> to vector<16x128xbf16>
    %c1_55 = arith.constant 1 : index
    %c0_56 = arith.constant 0 : index
    %c0_57 = arith.constant 0 : index
    %171 = vector.load %arg8[%c1_55, %c0_56, %c0_57] : memref<2x8x768xf32, #tpu.memory_space<vmem>>, vector<1x8x768xf32>
    %172 = vector.shape_cast %171 : vector<1x8x768xf32> to vector<8x768xf32>
    %173 = vector.extract_strided_slice %172 {offsets = [0, 0], sizes = [1, 768], strides = [1, 1]} : vector<8x768xf32> to vector<1x768xf32>
    %174 = vector.extract_strided_slice %172 {offsets = [1, 0], sizes = [1, 128], strides = [1, 1]} : vector<8x768xf32> to vector<1x128xf32>
    %175 = vector.extract_strided_slice %172 {offsets = [2, 0], sizes = [1, 256], strides = [1, 1]} : vector<8x768xf32> to vector<1x256xf32>
    %176 = vector.extract_strided_slice %172 {offsets = [3, 0], sizes = [1, 128], strides = [1, 1]} : vector<8x768xf32> to vector<1x128xf32>
    %177 = vector.extract_strided_slice %172 {offsets = [4, 0], sizes = [1, 128], strides = [1, 1]} : vector<8x768xf32> to vector<1x128xf32>
    %178 = vector.extract_strided_slice %172 {offsets = [5, 0], sizes = [1, 128], strides = [1, 1]} : vector<8x768xf32> to vector<1x128xf32>
    %179 = vector.extract_strided_slice %172 {offsets = [6, 0], sizes = [1, 128], strides = [1, 1]} : vector<8x768xf32> to vector<1x128xf32>
    %180 = vector.extract_strided_slice %172 {offsets = [7, 0], sizes = [1, 128], strides = [1, 1]} : vector<8x768xf32> to vector<1x128xf32>
    %c1_58 = arith.constant 1 : index
    %c0_59 = arith.constant 0 : index
    %c0_60 = arith.constant 0 : index
    %181 = vector.load %arg4[%c1_58, %c0_59, %c0_60] : memref<2x128x768xbf16, #tpu.memory_space<vmem>>, vector<1x128x768xbf16>
    %182 = vector.shape_cast %181 : vector<1x128x768xbf16> to vector<128x768xbf16>
    %cst_61 = arith.constant dense<0.000000e+00> : vector<16x768xf32>
    %183 = tpu.matmul %170, %182, %cst_61 {dimension_numbers = #tpu.dot_dimension_numbers<[1], [0], [0], [1], [0, 0, 1, 1], [], []>} : vector<16x128xbf16>, vector<128x768xbf16>, vector<16x768xf32> -> vector<16x768xf32>
    %184 = vector.broadcast %173 : vector<1x768xf32> to vector<16x768xf32>
    %185 = arith.addf %183, %184 : vector<16x768xf32>
    %c1_62 = arith.constant 1 : index
    %c0_63 = arith.constant 0 : index
    %c0_64 = arith.constant 0 : index
    %186 = vector.load %arg5[%c1_62, %c0_63, %c0_64] : memref<2x256x128xbf16, #tpu.memory_space<vmem>>, vector<1x256x128xbf16>
    %187 = vector.shape_cast %186 : vector<1x256x128xbf16> to vector<256x128xbf16>
    %cst_65 = arith.constant 0.000000e+00 : f32
    %188 = vector.broadcast %cst_65 : f32 to vector<16x128xf32>
    %189 = vector.extract_strided_slice %185 {offsets = [0, 0], sizes = [16, 128], strides = [1, 1]} : vector<16x768xf32> to vector<16x128xf32>
    %190 = arith.truncf %189 : vector<16x128xf32> to vector<16x128xbf16>
    %191 = vector.extract_strided_slice %185 {offsets = [0, 256], sizes = [16, 128], strides = [1, 1]} : vector<16x768xf32> to vector<16x128xf32>
    %192 = arith.truncf %191 : vector<16x128xf32> to vector<16x128xbf16>
    %193 = vector.extract_strided_slice %185 {offsets = [0, 512], sizes = [16, 128], strides = [1, 1]} : vector<16x768xf32> to vector<16x128xf32>
    %194 = arith.truncf %193 : vector<16x128xf32> to vector<16x128xbf16>
    %cst_66 = arith.constant dense<0.000000e+00> : vector<16x16xf32>
    %195 = tpu.matmul %190, %192, %cst_66 {dimension_numbers = #tpu.dot_dimension_numbers<[1], [1], [0], [0], [0, 0, 1, 0], [], []>} : vector<16x128xbf16>, vector<16x128xbf16>, vector<16x16xf32> -> vector<16x16xf32>
    %cst_67 = arith.constant 1.250000e-01 : f32
    %196 = vector.broadcast %cst_67 : f32 to vector<16x16xf32>
    %197 = arith.mulf %195, %196 : vector<16x16xf32>
    %198 = arith.addf %197, %0 : vector<16x16xf32>
    %cst_68 = arith.constant dense<0xFF800000> : vector<16xf32>
    %199 = vector.multi_reduction <maximumf>, %198, %cst_68 [1] : vector<16x16xf32> to vector<16xf32>
    %200 = vector.shape_cast %199 : vector<16xf32> to vector<16x1xf32>
    %201 = vector.broadcast %200 : vector<16x1xf32> to vector<16x16xf32>
    %202 = arith.subf %198, %201 : vector<16x16xf32>
    %203 = math.exp %202 : vector<16x16xf32>
    %cst_69 = arith.constant dense<0.000000e+00> : vector<16xf32>
    %204 = vector.multi_reduction <add>, %203, %cst_69 [1] : vector<16x16xf32> to vector<16xf32>
    %205 = vector.shape_cast %204 : vector<16xf32> to vector<16x1xf32>
    %206 = vector.broadcast %205 : vector<16x1xf32> to vector<16x16xf32>
    %207 = arith.divf %203, %206 : vector<16x16xf32>
    %208 = arith.truncf %207 : vector<16x16xf32> to vector<16x16xbf16>
    %cst_70 = arith.constant dense<0.000000e+00> : vector<16x128xf32>
    %209 = tpu.matmul %208, %194, %cst_70 {dimension_numbers = #tpu.dot_dimension_numbers<[1], [0], [0], [1], [0, 0, 1, 1], [], []>} : vector<16x16xbf16>, vector<16x128xbf16>, vector<16x128xf32> -> vector<16x128xf32>
    %210 = arith.truncf %209 : vector<16x128xf32> to vector<16x128xbf16>
    %211 = vector.extract_strided_slice %187 {offsets = [0, 0], sizes = [128, 128], strides = [1, 1]} : vector<256x128xbf16> to vector<128x128xbf16>
    %cst_71 = arith.constant dense<0.000000e+00> : vector<16x128xf32>
    %212 = tpu.matmul %210, %211, %cst_71 {dimension_numbers = #tpu.dot_dimension_numbers<[1], [0], [0], [1], [0, 0, 1, 1], [], []>} : vector<16x128xbf16>, vector<128x128xbf16>, vector<16x128xf32> -> vector<16x128xf32>
    %213 = arith.addf %188, %212 : vector<16x128xf32>
    %214 = vector.extract_strided_slice %185 {offsets = [0, 128], sizes = [16, 128], strides = [1, 1]} : vector<16x768xf32> to vector<16x128xf32>
    %215 = arith.truncf %214 : vector<16x128xf32> to vector<16x128xbf16>
    %216 = vector.extract_strided_slice %185 {offsets = [0, 384], sizes = [16, 128], strides = [1, 1]} : vector<16x768xf32> to vector<16x128xf32>
    %217 = arith.truncf %216 : vector<16x128xf32> to vector<16x128xbf16>
    %218 = vector.extract_strided_slice %185 {offsets = [0, 640], sizes = [16, 128], strides = [1, 1]} : vector<16x768xf32> to vector<16x128xf32>
    %219 = arith.truncf %218 : vector<16x128xf32> to vector<16x128xbf16>
    %cst_72 = arith.constant dense<0.000000e+00> : vector<16x16xf32>
    %220 = tpu.matmul %215, %217, %cst_72 {dimension_numbers = #tpu.dot_dimension_numbers<[1], [1], [0], [0], [0, 0, 1, 0], [], []>} : vector<16x128xbf16>, vector<16x128xbf16>, vector<16x16xf32> -> vector<16x16xf32>
    %cst_73 = arith.constant 1.250000e-01 : f32
    %221 = vector.broadcast %cst_73 : f32 to vector<16x16xf32>
    %222 = arith.mulf %220, %221 : vector<16x16xf32>
    %223 = arith.addf %222, %0 : vector<16x16xf32>
    %cst_74 = arith.constant dense<0xFF800000> : vector<16xf32>
    %224 = vector.multi_reduction <maximumf>, %223, %cst_74 [1] : vector<16x16xf32> to vector<16xf32>
    %225 = vector.shape_cast %224 : vector<16xf32> to vector<16x1xf32>
    %226 = vector.broadcast %225 : vector<16x1xf32> to vector<16x16xf32>
    %227 = arith.subf %223, %226 : vector<16x16xf32>
    %228 = math.exp %227 : vector<16x16xf32>
    %cst_75 = arith.constant dense<0.000000e+00> : vector<16xf32>
    %229 = vector.multi_reduction <add>, %228, %cst_75 [1] : vector<16x16xf32> to vector<16xf32>
    %230 = vector.shape_cast %229 : vector<16xf32> to vector<16x1xf32>
    %231 = vector.broadcast %230 : vector<16x1xf32> to vector<16x16xf32>
    %232 = arith.divf %228, %231 : vector<16x16xf32>
    %233 = arith.truncf %232 : vector<16x16xf32> to vector<16x16xbf16>
    %cst_76 = arith.constant dense<0.000000e+00> : vector<16x128xf32>
    %234 = tpu.matmul %233, %219, %cst_76 {dimension_numbers = #tpu.dot_dimension_numbers<[1], [0], [0], [1], [0, 0, 1, 1], [], []>} : vector<16x16xbf16>, vector<16x128xbf16>, vector<16x128xf32> -> vector<16x128xf32>
    %235 = arith.truncf %234 : vector<16x128xf32> to vector<16x128xbf16>
    %236 = vector.extract_strided_slice %187 {offsets = [128, 0], sizes = [128, 128], strides = [1, 1]} : vector<256x128xbf16> to vector<128x128xbf16>
    %cst_77 = arith.constant dense<0.000000e+00> : vector<16x128xf32>
    %237 = tpu.matmul %235, %236, %cst_77 {dimension_numbers = #tpu.dot_dimension_numbers<[1], [0], [0], [1], [0, 0, 1, 1], [], []>} : vector<16x128xbf16>, vector<128x128xbf16>, vector<16x128xf32> -> vector<16x128xf32>
    %238 = arith.addf %213, %237 : vector<16x128xf32>
    %239 = vector.broadcast %174 : vector<1x128xf32> to vector<16x128xf32>
    %240 = arith.addf %238, %239 : vector<16x128xf32>
    %241 = arith.extf %170 : vector<16x128xbf16> to vector<16x128xf32>
    %242 = arith.addf %241, %240 : vector<16x128xf32>
    %cst_78 = arith.constant dense<0.000000e+00> : vector<16xf32>
    %243 = vector.multi_reduction <add>, %242, %cst_78 [1] : vector<16x128xf32> to vector<16xf32>
    %244 = vector.shape_cast %243 : vector<16xf32> to vector<16x1xf32>
    %cst_79 = arith.constant 1.280000e+02 : f32
    %245 = vector.broadcast %cst_79 : f32 to vector<16x1xf32>
    %246 = arith.divf %244, %245 : vector<16x1xf32>
    %247 = vector.broadcast %246 : vector<16x1xf32> to vector<16x128xf32>
    %248 = arith.subf %242, %247 : vector<16x128xf32>
    %249 = arith.mulf %248, %248 : vector<16x128xf32>
    %cst_80 = arith.constant dense<0.000000e+00> : vector<16xf32>
    %250 = vector.multi_reduction <add>, %249, %cst_80 [1] : vector<16x128xf32> to vector<16xf32>
    %251 = vector.shape_cast %250 : vector<16xf32> to vector<16x1xf32>
    %cst_81 = arith.constant 1.280000e+02 : f32
    %252 = vector.broadcast %cst_81 : f32 to vector<16x1xf32>
    %253 = arith.divf %251, %252 : vector<16x1xf32>
    %254 = vector.broadcast %246 : vector<16x1xf32> to vector<16x128xf32>
    %255 = arith.subf %242, %254 : vector<16x128xf32>
    %cst_82 = arith.constant 9.99999996E-13 : f32
    %256 = vector.broadcast %cst_82 : f32 to vector<16x1xf32>
    %257 = arith.addf %253, %256 : vector<16x1xf32>
    %258 = math.rsqrt %257 : vector<16x1xf32>
    %259 = vector.broadcast %258 : vector<16x1xf32> to vector<16x128xf32>
    %260 = arith.mulf %255, %259 : vector<16x128xf32>
    %261 = vector.broadcast %177 : vector<1x128xf32> to vector<16x128xf32>
    %262 = arith.mulf %260, %261 : vector<16x128xf32>
    %263 = vector.broadcast %178 : vector<1x128xf32> to vector<16x128xf32>
    %264 = arith.addf %262, %263 : vector<16x128xf32>
    %265 = arith.truncf %264 : vector<16x128xf32> to vector<16x128xbf16>
    %c1_83 = arith.constant 1 : index
    %c0_84 = arith.constant 0 : index
    %c0_85 = arith.constant 0 : index
    %266 = vector.load %arg6[%c1_83, %c0_84, %c0_85] : memref<2x128x256xbf16, #tpu.memory_space<vmem>>, vector<1x128x256xbf16>
    %267 = vector.shape_cast %266 : vector<1x128x256xbf16> to vector<128x256xbf16>
    %cst_86 = arith.constant dense<0.000000e+00> : vector<16x256xf32>
    %268 = tpu.matmul %265, %267, %cst_86 {dimension_numbers = #tpu.dot_dimension_numbers<[1], [0], [0], [1], [0, 0, 1, 1], [], []>} : vector<16x128xbf16>, vector<128x256xbf16>, vector<16x256xf32> -> vector<16x256xf32>
    %269 = vector.broadcast %175 : vector<1x256xf32> to vector<16x256xf32>
    %270 = arith.addf %268, %269 : vector<16x256xf32>
    %271 = arith.mulf %270, %270 : vector<16x256xf32>
    %272 = arith.mulf %270, %271 : vector<16x256xf32>
    %cst_87 = arith.constant 4.471500e-02 : f32
    %273 = vector.broadcast %cst_87 : f32 to vector<16x256xf32>
    %274 = arith.mulf %273, %272 : vector<16x256xf32>
    %275 = arith.addf %270, %274 : vector<16x256xf32>
    %cst_88 = arith.constant 0.797884583 : f32
    %276 = vector.broadcast %cst_88 : f32 to vector<16x256xf32>
    %277 = arith.mulf %276, %275 : vector<16x256xf32>
    %278 = math.tanh %277 : vector<16x256xf32>
    %cst_89 = arith.constant 1.000000e+00 : f32
    %279 = vector.broadcast %cst_89 : f32 to vector<16x256xf32>
    %280 = arith.addf %279, %278 : vector<16x256xf32>
    %cst_90 = arith.constant 5.000000e-01 : f32
    %281 = vector.broadcast %cst_90 : f32 to vector<16x256xf32>
    %282 = arith.mulf %281, %280 : vector<16x256xf32>
    %283 = arith.mulf %270, %282 : vector<16x256xf32>
    %284 = arith.truncf %283 : vector<16x256xf32> to vector<16x256xbf16>
    %c1_91 = arith.constant 1 : index
    %c0_92 = arith.constant 0 : index
    %c0_93 = arith.constant 0 : index
    %285 = vector.load %arg7[%c1_91, %c0_92, %c0_93] : memref<2x256x128xbf16, #tpu.memory_space<vmem>>, vector<1x256x128xbf16>
    %286 = vector.shape_cast %285 : vector<1x256x128xbf16> to vector<256x128xbf16>
    %cst_94 = arith.constant dense<0.000000e+00> : vector<16x128xf32>
    %287 = tpu.matmul %284, %286, %cst_94 {dimension_numbers = #tpu.dot_dimension_numbers<[1], [0], [0], [1], [0, 0, 1, 1], [], []>} : vector<16x256xbf16>, vector<256x128xbf16>, vector<16x128xf32> -> vector<16x128xf32>
    %288 = vector.broadcast %176 : vector<1x128xf32> to vector<16x128xf32>
    %289 = arith.addf %287, %288 : vector<16x128xf32>
    %290 = arith.extf %265 : vector<16x128xbf16> to vector<16x128xf32>
    %291 = arith.addf %290, %289 : vector<16x128xf32>
    %cst_95 = arith.constant dense<0.000000e+00> : vector<16xf32>
    %292 = vector.multi_reduction <add>, %291, %cst_95 [1] : vector<16x128xf32> to vector<16xf32>
    %293 = vector.shape_cast %292 : vector<16xf32> to vector<16x1xf32>
    %cst_96 = arith.constant 1.280000e+02 : f32
    %294 = vector.broadcast %cst_96 : f32 to vector<16x1xf32>
    %295 = arith.divf %293, %294 : vector<16x1xf32>
    %296 = vector.broadcast %295 : vector<16x1xf32> to vector<16x128xf32>
    %297 = arith.subf %291, %296 : vector<16x128xf32>
    %298 = arith.mulf %297, %297 : vector<16x128xf32>
    %cst_97 = arith.constant dense<0.000000e+00> : vector<16xf32>
    %299 = vector.multi_reduction <add>, %298, %cst_97 [1] : vector<16x128xf32> to vector<16xf32>
    %300 = vector.shape_cast %299 : vector<16xf32> to vector<16x1xf32>
    %cst_98 = arith.constant 1.280000e+02 : f32
    %301 = vector.broadcast %cst_98 : f32 to vector<16x1xf32>
    %302 = arith.divf %300, %301 : vector<16x1xf32>
    %303 = vector.broadcast %295 : vector<16x1xf32> to vector<16x128xf32>
    %304 = arith.subf %291, %303 : vector<16x128xf32>
    %cst_99 = arith.constant 9.99999996E-13 : f32
    %305 = vector.broadcast %cst_99 : f32 to vector<16x1xf32>
    %306 = arith.addf %302, %305 : vector<16x1xf32>
    %307 = math.rsqrt %306 : vector<16x1xf32>
    %308 = vector.broadcast %307 : vector<16x1xf32> to vector<16x128xf32>
    %309 = arith.mulf %304, %308 : vector<16x128xf32>
    %310 = vector.broadcast %179 : vector<1x128xf32> to vector<16x128xf32>
    %311 = arith.mulf %309, %310 : vector<16x128xf32>
    %312 = vector.broadcast %180 : vector<1x128xf32> to vector<16x128xf32>
    %313 = arith.addf %311, %312 : vector<16x128xf32>
    %314 = arith.truncf %313 : vector<16x128xf32> to vector<16x128xbf16>
    %315 = vector.extract_strided_slice %314 {offsets = [0, 0], sizes = [1, 128], strides = [1, 1]} : vector<16x128xbf16> to vector<1x128xbf16>
    %c0_100 = arith.constant 0 : index
    %c0_101 = arith.constant 0 : index
    %316 = vector.load %arg9[%c0_100, %c0_101] : memref<128x128xbf16, #tpu.memory_space<vmem>>, vector<128x128xbf16>
    %cst_102 = arith.constant dense<0.000000e+00> : vector<1x128xf32>
    %317 = tpu.matmul %315, %316, %cst_102 {dimension_numbers = #tpu.dot_dimension_numbers<[1], [0], [0], [1], [0, 0, 1, 1], [], []>} : vector<1x128xbf16>, vector<128x128xbf16>, vector<1x128xf32> -> vector<1x128xf32>
    %c0_103 = arith.constant 0 : index
    %c0_104 = arith.constant 0 : index
    %318 = vector.load %arg10[%c0_103, %c0_104] : memref<1x128xf32, #tpu.memory_space<vmem>>, vector<1x128xf32>
    %319 = arith.addf %317, %318 : vector<1x128xf32>
    %c0_105 = arith.constant 0 : index
    %c0_106 = arith.constant 0 : index
    %320 = vector.load %arg11[%c0_105, %c0_106] : memref<1x128xf32, #tpu.memory_space<vmem>>, vector<1x128xf32>
    tpu.vector_store %arg11[%c0_105, %c0_106], %319 {strides = array<i32>} : memref<1x128xf32, #tpu.memory_space<vmem>>, vector<1x128xf32>,
    return
  }
  func.func @transform_0(%arg0: i32) -> (i32, i32) {
    %c0_i32 = arith.constant 0 : i32
    %c0_i32_0 = arith.constant 0 : i32
    %c0_i32_1 = arith.constant 0 : i32
    return %c0_i32, %c0_i32_0 : i32, i32
  }
  func.func @transform_1(%arg0: i32) -> (i32, i32) {
    %c0_i32 = arith.constant 0 : i32
    %c0_i32_0 = arith.constant 0 : i32
    %c0_i32_1 = arith.constant 0 : i32
    return %c0_i32, %c0_i32_0 : i32, i32
  }
  func.func @transform_2(%arg0: i32) -> (i32, i32) {
    %c0_i32 = arith.constant 0 : i32
    %c0_i32_0 = arith.constant 0 : i32
    %c0_i32_1 = arith.constant 0 : i32
    return %c0_i32, %c0_i32_0 : i32, i32
  }
  func.func @transform_3(%arg0: i32) -> (i32, i32, i32) {
    %c0_i32 = arith.constant 0 : i32
    %c0_i32_0 = arith.constant 0 : i32
    %c0_i32_1 = arith.constant 0 : i32
    %c0_i32_2 = arith.constant 0 : i32
    return %c0_i32, %c0_i32_0, %c0_i32_1 : i32, i32, i32
  }
  func.func @transform_4(%arg0: i32) -> (i32, i32, i32) {
    %c0_i32 = arith.constant 0 : i32
    %c0_i32_0 = arith.constant 0 : i32
    %c0_i32_1 = arith.constant 0 : i32
    %c0_i32_2 = arith.constant 0 : i32
    return %c0_i32, %c0_i32_0, %c0_i32_1 : i32, i32, i32
  }
  func.func @transform_5(%arg0: i32) -> (i32, i32, i32) {
    %c0_i32 = arith.constant 0 : i32
    %c0_i32_0 = arith.constant 0 : i32
    %c0_i32_1 = arith.constant 0 : i32
    %c0_i32_2 = arith.constant 0 : i32
    return %c0_i32, %c0_i32_0, %c0_i32_1 : i32, i32, i32
  }
  func.func @transform_6(%arg0: i32) -> (i32, i32, i32) {
    %c0_i32 = arith.constant 0 : i32
    %c0_i32_0 = arith.constant 0 : i32
    %c0_i32_1 = arith.constant 0 : i32
    %c0_i32_2 = arith.constant 0 : i32
    return %c0_i32, %c0_i32_0, %c0_i32_1 : i32, i32, i32
  }
  func.func @transform_7(%arg0: i32) -> (i32, i32, i32) {
    %c0_i32 = arith.constant 0 : i32
    %c0_i32_0 = arith.constant 0 : i32
    %c0_i32_1 = arith.constant 0 : i32
    %c0_i32_2 = arith.constant 0 : i32
    return %c0_i32, %c0_i32_0, %c0_i32_1 : i32, i32, i32
  }
  func.func @transform_8(%arg0: i32) -> (i32, i32) {
    %c0_i32 = arith.constant 0 : i32
    %c0_i32_0 = arith.constant 0 : i32
    %c0_i32_1 = arith.constant 0 : i32
    return %c0_i32, %c0_i32_0 : i32, i32
  }
  func.func @transform_9(%arg0: i32) -> (i32, i32) {
    %c0_i32 = arith.constant 0 : i32
    %c0_i32_0 = arith.constant 0 : i32
    %c0_i32_1 = arith.constant 0 : i32
    return %c0_i32, %c0_i32_0 : i32, i32
  }
  func.func @transform_10(%arg0: i32) -> (i32, i32) {
    %c0_i32 = arith.constant 0 : i32
    %c0_i32_0 = arith.constant 0 : i32
    %c0_i32_1 = arith.constant 0 : i32
    return %c0_i32, %c0_i32_0 : i32, i32
  }
}

</mosaic_0001>

<llo_original>
// kernel: bert_for_multilabel_forward.1
$region0: #{bert_for_multilabel_forward.1}
  #allocation0 [shape = 'u32[]', space=smem, size = 0x4, offset = 0x4, fixed_abs, tag = 'smem constant byte address 0x4 - core index']
  #allocation1 [shape = 'u32[144,128]{1,0:T(1,128)}', space=vmem, size = 0x12000, scoped, tag = 'internal scratch']
  %s0 = inlined_call_operand.vmem [shape: f32[16,128], index: 0, kind: input, shape index: {}]
  %s1 = inlined_call_operand.vmem [shape: f32[16,16], index: 1, kind: input, shape index: {}]
  %s2 = inlined_call_operand.vmem [shape: f32[2,128], index: 2, kind: input, shape index: {}]
  %s3 = inlined_call_operand.vmem [shape: bf16[2,128,768], index: 3, kind: input, shape index: {}]
  %s4 = inlined_call_operand.vmem [shape: bf16[2,256,128], index: 4, kind: input, shape index: {}]
  %s5 = inlined_call_operand.vmem [shape: bf16[2,128,256], index: 5, kind: input, shape index: {}]
  %s6 = inlined_call_operand.vmem [shape: bf16[2,256,128], index: 6, kind: input, shape index: {}]
  %s7 = inlined_call_operand.vmem [shape: f32[2,8,768], index: 7, kind: input, shape index: {}]
  %s8 = inlined_call_operand.vmem [shape: bf16[128,128], index: 8, kind: input, shape index: {}]
  %s9 = inlined_call_operand.vmem [shape: f32[1,128], index: 9, kind: input, shape index: {}]
  %s10 = inlined_call_operand.hbm [shape: f32[1,128], index: 10, kind: output, shape index: {}]
  %s11 = sld [smem:[#allocation0]]
  $region50: #{bert_for_multilabel_forward.1} parent=0
    _
  %s13 = ssub.s32 1, %s11
  %s14 = scalar_select 0, %s13, %s11
  $region1: #{bert_for_multilabel_forward.1} parent=0
    #allocation2 [shape = 'u8[512]{0}', space=vmem, size = 0x400, scoped, tag = 'output window, operand 0, single buffered']
    #allocation3 [shape = 's32[1]{0}', space=sflag, size = 0x4, scoped, tag = 'scoped memory for bert_for_multilabel_forward.1']
    %15 = vsyncpa [#allocation3], 0
    // Predicated region
    $region2: #{bert_for_multilabel_forward.1} parent=1 // pred_check
      _
    $region3: #{bert_for_multilabel_forward.1} parent=1 // pred_check_branch
      %17 = sbr.rel (0) target = $region5
    $region4: #{bert_for_multilabel_forward.1} parent=1 // pred_region
      _
    $region5: #{bert_for_multilabel_forward.1} parent=1 // pred_fallthru
      _
    // Predicated region
    $region6: #{bert_for_multilabel_forward.1} parent=1 // pred_check
      _
    $region7: #{bert_for_multilabel_forward.1} parent=1 // pred_check_branch
      %19 = sbr.rel (0) target = $region9
    $region8: #{bert_for_multilabel_forward.1} parent=1 // pred_region
      _
    $region9: #{bert_for_multilabel_forward.1} parent=1 // pred_fallthru
      _
    // Predicated region
    $region10: #{bert_for_multilabel_forward.1} parent=1 // pred_check
      _
    $region11: #{bert_for_multilabel_forward.1} parent=1 // pred_check_branch
      %21 = sbr.rel (0) target = $region13
    $region12: #{bert_for_multilabel_forward.1} parent=1 // pred_region
      _
    $region13: #{bert_for_multilabel_forward.1} parent=1 // pred_fallthru
      _
    // Predicated region
    $region14: #{bert_for_multilabel_forward.1} parent=1 // pred_check
      _
    $region15: #{bert_for_multilabel_forward.1} parent=1 // pred_check_branch
      %23 = sbr.rel (0) target = $region17
    $region16: #{bert_for_multilabel_forward.1} parent=1 // pred_region
      _
    $region17: #{bert_for_multilabel_forward.1} parent=1 // pred_fallthru
      _
    // Predicated region
    $region18: #{bert_for_multilabel_forward.1} parent=1 // pred_check
      _
    $region19: #{bert_for_multilabel_forward.1} parent=1 // pred_check_branch
      %25 = sbr.rel (0) target = $region21
    $region20: #{bert_for_multilabel_forward.1} parent=1 // pred_region
      _
    $region21: #{bert_for_multilabel_forward.1} parent=1 // pred_fallthru
      _
    // Predicated region
    $region22: #{bert_for_multilabel_forward.1} parent=1 // pred_check
      _
    $region23: #{bert_for_multilabel_forward.1} parent=1 // pred_check_branch
      %27 = sbr.rel (0) target = $region25
    $region24: #{bert_for_multilabel_forward.1} parent=1 // pred_region
      _
    $region25: #{bert_for_multilabel_forward.1} parent=1 // pred_fallthru
      _
    // Predicated region
    $region26: #{bert_for_multilabel_forward.1} parent=1 // pred_check
      _
    $region27: #{bert_for_multilabel_forward.1} parent=1 // pred_check_branch
      %29 = sbr.rel (0) target = $region29
    $region28: #{bert_for_multilabel_forward.1} parent=1 // pred_region
      _
    $region29: #{bert_for_multilabel_forward.1} parent=1 // pred_fallthru
      _
    // Predicated region
    $region30: #{bert_for_multilabel_forward.1} parent=1 // pred_check
      _
    $region31: #{bert_for_multilabel_forward.1} parent=1 // pred_check_branch
      %31 = sbr.rel (0) target = $region33
    $region32: #{bert_for_multilabel_forward.1} parent=1 // pred_region
      _
    $region33: #{bert_for_multilabel_forward.1} parent=1 // pred_fallthru
      _
    // Predicated region
    $region34: #{bert_for_multilabel_forward.1} parent=1 // pred_check
      _
    $region35: #{bert_for_multilabel_forward.1} parent=1 // pred_check_branch
      %33 = sbr.rel (0) target = $region37
    $region36: #{bert_for_multilabel_forward.1} parent=1 // pred_region
      _
    $region37: #{bert_for_multilabel_forward.1} parent=1 // pred_fallthru
      _
    // Predicated region
    $region38: #{bert_for_multilabel_forward.1} parent=1 // pred_check
      _
    $region39: #{bert_for_multilabel_forward.1} parent=1 // pred_check_branch
      %35 = sbr.rel (0) target = $region41
    $region40: #{bert_for_multilabel_forward.1} parent=1 // pred_region
      _
    $region41: #{bert_for_multilabel_forward.1} parent=1 // pred_fallthru
      _
    %v37 = vld [vmem:[%s1] sm:$0xff]
    %v38 = vld [vmem:[%s1 + $0x8] sm:$0xff]
    %v39 = vld [vmem:[%s0] sm:$0xff]
    %v40 = vld [vmem:[%s0 + $0x8] sm:$0xff]
    %v41 = vld [vmem:[%s2] sm:$0x1]
    %v42 = vld [vmem:[%s2 + $0x1] sm:$0x1]
    %43 = vadd.xlane.f32.xlu0 %v39
    %v44 = vpop.xlane.xlu0 %43
    %45 = vadd.xlane.f32.xlu0 %v40
    %v46 = vpop.xlane.xlu0 %45
    %v47 = vrcp.pop 128.0
    %v48 = vmul.f32 %v44, %v47
    %v49 = vmul.f32 %v46, %v47
    %v50 = vsub.f32 %v39, %v48
    %v51 = vsub.f32 %v40, %v49
    %v52 = vmul.f32 %v50, %v50
    %v53 = vmul.f32 %v51, %v51
    %54 = vadd.xlane.f32.xlu0 %v52
    %v55 = vpop.xlane.xlu0 %54
    %56 = vadd.xlane.f32.xlu0 %v53
    %v57 = vpop.xlane.xlu0 %56
    %v58 = vmul.f32 %v55, %v47
    %v59 = vmul.f32 %v57, %v47
    %v60 = vadd.f32 %v58, 1e-12
    %v61 = vadd.f32 %v59, 1e-12
    %v62 = vrsqrt.pop %v60
    %v63 = vrsqrt.pop %v61
    %v64 = vmul.f32 %v50, %v62
    %v65 = vmul.f32 %v51, %v63
    %v66 = vlaneseq
    %v67 = vshrl.u32 %v66, 7
    %v68 = vsub.s32 0, %v67
    %v69 = vrot.slane %v41, %v68
    %v70 = vmul.f32 %v64, %v69
    %v71 = vmul.f32 %v65, %v69
    %v72 = vlaneseq
    %v73 = vshrl.u32 %v72, 7
    %v74 = vsub.s32 0, %v73
    %v75 = vrot.slane %v42, %v74
    %v76 = vadd.f32 %v70, %v75
    %v77 = vadd.f32 %v71, %v75
    %v78 = vpack.c.bf16 %v77, %v76
    %v79 = vld [vmem:[%s7] sm:$0xff]
    %v80 = vld [vmem:[%s7 + $0x8] sm:$0xff]
    %v81 = vld [vmem:[%s7 + $0x10] sm:$0xff]
    %v82 = vld [vmem:[%s7 + $0x18] sm:$0xff]
    %v83 = vld [vmem:[%s7 + $0x20] sm:$0xff]
    %v84 = vld [vmem:[%s7 + $0x28] sm:$0xff]
    %v85 = vld [vmem:[%s3] sm:$0xff]
    %v86 = vld [vmem:[%s3 + $0x8] sm:$0xff]
    %v87 = vld [vmem:[%s3 + $0x10] sm:$0xff]
    %v88 = vld [vmem:[%s3 + $0x18] sm:$0xff]
    %v89 = vld [vmem:[%s3 + $0x20] sm:$0xff]
    %v90 = vld [vmem:[%s3 + $0x28] sm:$0xff]
    %v91 = vld [vmem:[%s3 + $0x30] sm:$0xff]
    %v92 = vld [vmem:[%s3 + $0x38] sm:$0xff]
    %v93 = vld [vmem:[%s3 + $0x40] sm:$0xff]
    %v94 = vld [vmem:[%s3 + $0x48] sm:$0xff]
    %v95 = vld [vmem:[%s3 + $0x50] sm:$0xff]
    %v96 = vld [vmem:[%s3 + $0x58] sm:$0xff]
    %v97 = vld [vmem:[%s3 + $0x60] sm:$0xff]
    %v98 = vld [vmem:[%s3 + $0x68] sm:$0xff]
    %v99 = vld [vmem:[%s3 + $0x70] sm:$0xff]
    %v100 = vld [vmem:[%s3 + $0x78] sm:$0xff]
    %v101 = vld [vmem:[%s3 + $0x80] sm:$0xff]
    %v102 = vld [vmem:[%s3 + $0x88] sm:$0xff]
    %v103 = vld [vmem:[%s3 + $0x90] sm:$0xff]
    %v104 = vld [vmem:[%s3 + $0x98] sm:$0xff]
    %v105 = vld [vmem:[%s3 + $0xa0] sm:$0xff]
    %v106 = vld [vmem:[%s3 + $0xa8] sm:$0xff]
    %v107 = vld [vmem:[%s3 + $0xb0] sm:$0xff]
    %v108 = vld [vmem:[%s3 + $0xb8] sm:$0xff]
    %v109 = vld [vmem:[%s3 + $0xc0] sm:$0xff]
    %v110 = vld [vmem:[%s3 + $0xc8] sm:$0xff]
    %v111 = vld [vmem:[%s3 + $0xd0] sm:$0xff]
    %v112 = vld [vmem:[%s3 + $0xd8] sm:$0xff]
    %v113 = vld [vmem:[%s3 + $0xe0] sm:$0xff]
    %v114 = vld [vmem:[%s3 + $0xe8] sm:$0xff]
    %v115 = vld [vmem:[%s3 + $0xf0] sm:$0xff]
    %v116 = vld [vmem:[%s3 + $0xf8] sm:$0xff]
    %v117 = vld [vmem:[%s3 + $0x100] sm:$0xff]
    %v118 = vld [vmem:[%s3 + $0x108] sm:$0xff]
    %v119 = vld [vmem:[%s3 + $0x110] sm:$0xff]
    %v120 = vld [vmem:[%s3 + $0x118] sm:$0xff]
    %v121 = vld [vmem:[%s3 + $0x120] sm:$0xff]
    %v122 = vld [vmem:[%s3 + $0x128] sm:$0xff]
    %v123 = vld [vmem:[%s3 + $0x130] sm:$0xff]
    %v124 = vld [vmem:[%s3 + $0x138] sm:$0xff]
    %v125 = vld [vmem:[%s3 + $0x140] sm:$0xff]
    %v126 = vld [vmem:[%s3 + $0x148] sm:$0xff]
    %v127 = vld [vmem:[%s3 + $0x150] sm:$0xff]
    %v128 = vld [vmem:[%s3 + $0x158] sm:$0xff]
    %v129 = vld [vmem:[%s3 + $0x160] sm:$0xff]
    %v130 = vld [vmem:[%s3 + $0x168] sm:$0xff]
    %v131 = vld [vmem:[%s3 + $0x170] sm:$0xff]
    %v132 = vld [vmem:[%s3 + $0x178] sm:$0xff]
    %v133 = vlaneseq
    %v134 = vshrl.u32 %v133, 7
    %v135 = vsub.s32 0, %v134
    %v136 = vrot.slane %v79, %v135
    %v137 = vlaneseq
    %v138 = vshrl.u32 %v137, 7
    %v139 = vsub.s32 0, %v138
    %v140 = vrot.slane %v80, %v139
    %v141 = vlaneseq
    %v142 = vshrl.u32 %v141, 7
    %v143 = vsub.s32 0, %v142
    %v144 = vrot.slane %v81, %v143
    %v145 = vlaneseq
    %v146 = vshrl.u32 %v145, 7
    %v147 = vsub.s32 0, %v146
    %v148 = vrot.slane %v82, %v147
    %v149 = vlaneseq
    %v150 = vshrl.u32 %v149, 7
    %v151 = vsub.s32 0, %v150
    %v152 = vrot.slane %v83, %v151
    %v153 = vlaneseq
    %v154 = vshrl.u32 %v153, 7
    %v155 = vsub.s32 0, %v154
    %v156 = vrot.slane %v84, %v155
    %v205 = vunpack.c.l.b16 %v85
    %v206 = vunpack.c.h.b16 %v85
    %v207 = vunpack.c.l.b16 %v86
    %v208 = vunpack.c.h.b16 %v86
    %v209 = vunpack.c.l.b16 %v87
    %v210 = vunpack.c.h.b16 %v87
    %v211 = vunpack.c.l.b16 %v88
    %v212 = vunpack.c.h.b16 %v88
    %v213 = vunpack.c.l.b16 %v89
    %v214 = vunpack.c.h.b16 %v89
    %v215 = vunpack.c.l.b16 %v90
    %v216 = vunpack.c.h.b16 %v90
    %v217 = vunpack.c.l.b16 %v91
    %v218 = vunpack.c.h.b16 %v91
    %v219 = vunpack.c.l.b16 %v92
    %v220 = vunpack.c.h.b16 %v92
    %v221 = vunpack.c.l.b16 %v93
    %v222 = vunpack.c.h.b16 %v93
    %v223 = vunpack.c.l.b16 %v94
    %v224 = vunpack.c.h.b16 %v94
    %v225 = vunpack.c.l.b16 %v95
    %v226 = vunpack.c.h.b16 %v95
    %v227 = vunpack.c.l.b16 %v96
    %v228 = vunpack.c.h.b16 %v96
    %v229 = vunpack.c.l.b16 %v97
    %v230 = vunpack.c.h.b16 %v97
    %v231 = vunpack.c.l.b16 %v98
    %v232 = vunpack.c.h.b16 %v98
    %v233 = vunpack.c.l.b16 %v99
    %v234 = vunpack.c.h.b16 %v99
    %v235 = vunpack.c.l.b16 %v100
    %v236 = vunpack.c.h.b16 %v100
    %v237 = vunpack.c.l.b16 %v101
    %v238 = vunpack.c.h.b16 %v101
    %v239 = vunpack.c.l.b16 %v102
    %v240 = vunpack.c.h.b16 %v102
    %v241 = vunpack.c.l.b16 %v103
    %v242 = vunpack.c.h.b16 %v103
    %v243 = vunpack.c.l.b16 %v104
    %v244 = vunpack.c.h.b16 %v104
    %v245 = vunpack.c.l.b16 %v105
    %v246 = vunpack.c.h.b16 %v105
    %v247 = vunpack.c.l.b16 %v106
    %v248 = vunpack.c.h.b16 %v106
    %v249 = vunpack.c.l.b16 %v107
    %v250 = vunpack.c.h.b16 %v107
    %v251 = vunpack.c.l.b16 %v108
    %v252 = vunpack.c.h.b16 %v108
    %v253 = vunpack.c.l.b16 %v109
    %v254 = vunpack.c.h.b16 %v109
    %v255 = vunpack.c.l.b16 %v110
    %v256 = vunpack.c.h.b16 %v110
    %v257 = vunpack.c.l.b16 %v111
    %v258 = vunpack.c.h.b16 %v111
    %v259 = vunpack.c.l.b16 %v112
    %v260 = vunpack.c.h.b16 %v112
    %v261 = vunpack.c.l.b16 %v113
    %v262 = vunpack.c.h.b16 %v113
    %v263 = vunpack.c.l.b16 %v114
    %v264 = vunpack.c.h.b16 %v114
    %v265 = vunpack.c.l.b16 %v115
    %v266 = vunpack.c.h.b16 %v115
    %v267 = vunpack.c.l.b16 %v116
    %v268 = vunpack.c.h.b16 %v116
    %v269 = vunpack.c.l.b16 %v117
    %v270 = vunpack.c.h.b16 %v117
    %v271 = vunpack.c.l.b16 %v118
    %v272 = vunpack.c.h.b16 %v118
    %v273 = vunpack.c.l.b16 %v119
    %v274 = vunpack.c.h.b16 %v119
    %v275 = vunpack.c.l.b16 %v120
    %v276 = vunpack.c.h.b16 %v120
    %v277 = vunpack.c.l.b16 %v121
    %v278 = vunpack.c.h.b16 %v121
    %v279 = vunpack.c.l.b16 %v122
    %v280 = vunpack.c.h.b16 %v122
    %v281 = vunpack.c.l.b16 %v123
    %v282 = vunpack.c.h.b16 %v123
    %v283 = vunpack.c.l.b16 %v124
    %v284 = vunpack.c.h.b16 %v124
    %v285 = vunpack.c.l.b16 %v125
    %v286 = vunpack.c.h.b16 %v125
    %v287 = vunpack.c.l.b16 %v126
    %v288 = vunpack.c.h.b16 %v126
    %v289 = vunpack.c.l.b16 %v127
    %v290 = vunpack.c.h.b16 %v127
    %v291 = vunpack.c.l.b16 %v128
    %v292 = vunpack.c.h.b16 %v128
    %v293 = vunpack.c.l.b16 %v129
    %v294 = vunpack.c.h.b16 %v129
    %v295 = vunpack.c.l.b16 %v130
    %v296 = vunpack.c.h.b16 %v130
    %v297 = vunpack.c.l.b16 %v131
    %v298 = vunpack.c.h.b16 %v131
    %v299 = vunpack.c.l.b16 %v132
    %v300 = vunpack.c.h.b16 %v132
    %v301 = vpack.c.b16 %v211, %v205
    %v302 = vpack.c.b16 %v212, %v206
    %v303 = vpack.c.b16 %v213, %v207
    %v304 = vpack.c.b16 %v214, %v208
    %v305 = vpack.c.b16 %v215, %v209
    %v306 = vpack.c.b16 %v216, %v210
    %v307 = vpack.c.b16 %v223, %v217
    %v308 = vpack.c.b16 %v224, %v218
    %v309 = vpack.c.b16 %v225, %v219
    %v310 = vpack.c.b16 %v226, %v220
    %v311 = vpack.c.b16 %v227, %v221
    %v312 = vpack.c.b16 %v228, %v222
    %v313 = vpack.c.b16 %v235, %v229
    %v314 = vpack.c.b16 %v236, %v230
    %v315 = vpack.c.b16 %v237, %v231
    %v316 = vpack.c.b16 %v238, %v232
    %v317 = vpack.c.b16 %v239, %v233
    %v318 = vpack.c.b16 %v240, %v234
    %v319 = vpack.c.b16 %v247, %v241
    %v320 = vpack.c.b16 %v248, %v242
    %v321 = vpack.c.b16 %v249, %v243
    %v322 = vpack.c.b16 %v250, %v244
    %v323 = vpack.c.b16 %v251, %v245
    %v324 = vpack.c.b16 %v252, %v246
    %v325 = vpack.c.b16 %v259, %v253
    %v326 = vpack.c.b16 %v260, %v254
    %v327 = vpack.c.b16 %v261, %v255
    %v328 = vpack.c.b16 %v262, %v256
    %v329 = vpack.c.b16 %v263, %v257
    %v330 = vpack.c.b16 %v264, %v258
    %v331 = vpack.c.b16 %v271, %v265
    %v332 = vpack.c.b16 %v272, %v266
    %v333 = vpack.c.b16 %v273, %v267
    %v334 = vpack.c.b16 %v274, %v268
    %v335 = vpack.c.b16 %v275, %v269
    %v336 = vpack.c.b16 %v276, %v270
    %v337 = vpack.c.b16 %v283, %v277
    %v338 = vpack.c.b16 %v284, %v278
    %v339 = vpack.c.b16 %v285, %v279
    %v340 = vpack.c.b16 %v286, %v280
    %v341 = vpack.c.b16 %v287, %v281
    %v342 = vpack.c.b16 %v288, %v282
    %v343 = vpack.c.b16 %v295, %v289
    %v344 = vpack.c.b16 %v296, %v290
    %v345 = vpack.c.b16 %v297, %v291
    %v346 = vpack.c.b16 %v298, %v292
    %v347 = vpack.c.b16 %v299, %v293
    %v348 = vpack.c.b16 %v300, %v294
    %397 = vmatprep.subr.bf16.mxu0 %v302
    %398 = vmatpush1.bf16.msra.mxu0 %v301
    %399 = vmatprep.subr.bf16.mxu0 %v308
    %400 = vmatpush1.bf16.msra.mxu0 %v307
    %401 = vmatprep.subr.bf16.mxu0 %v314
    %402 = vmatpush1.bf16.msra.mxu0 %v313
    %403 = vmatprep.subr.bf16.mxu0 %v320
    %404 = vmatpush1.bf16.msra.mxu0 %v319
    %405 = vmatprep.subr.bf16.mxu0 %v326
    %406 = vmatpush1.bf16.msra.mxu0 %v325
    %407 = vmatprep.subr.bf16.mxu0 %v332
    %408 = vmatpush1.bf16.msra.mxu0 %v331
    %409 = vmatprep.subr.bf16.mxu0 %v338
    %410 = vmatpush1.bf16.msra.mxu0 %v337
    %411 = vmatprep.subr.bf16.mxu0 %v344
    %412 = vmatpush1.bf16.msra.mxu0 %v343
    %413 = vmatprep.subr.bf16.mxu0 0
    %414 = vmatpush1.bf16.msra.mxu0 0
    %415 = vmatprep.subr.bf16.mxu0 0
    %416 = vmatpush1.bf16.msra.mxu0 0
    %417 = vmatprep.subr.bf16.mxu0 0
    %418 = vmatpush1.bf16.msra.mxu0 0
    %419 = vmatprep.subr.bf16.mxu0 0
    %420 = vmatpush1.bf16.msra.mxu0 0
    %421 = vmatprep.subr.bf16.mxu0 0
    %422 = vmatpush1.bf16.msra.mxu0 0
    %423 = vmatprep.subr.bf16.mxu0 0
    %424 = vmatpush1.bf16.msra.mxu0 0
    %425 = vmatprep.subr.bf16.mxu0 0
    %426 = vmatpush1.bf16.msra.mxu0 0
    %427 = vmatprep.subr.bf16.mxu0 0
    %428 = vmatpush1.bf16.msra.mxu0 0
    %429 = vmatprep.mubr.bf16.mxu0 0
    %430 = vmatmul.mubr.bf16.gmra.mrb[0].mxu0 %v78
    %v431 = vpop.f32.mrb[0].mxu0
    %v432 = vadd.f32 %v136, %v431
    %v433 = vpop.f32.mrb[0].mxu0
    %v434 = vadd.f32 %v140, %v433
    %v435 = vpop.f32.mrb[0].mxu0
    %v436 = vadd.f32 %v136, %v435
    %v437 = vpop.f32.mrb[0].mxu0
    %v438 = vadd.f32 %v140, %v437
    %439 = vdwg.mxu0
    %440 = vmatprep.subr.bf16.mxu0 %v304
    %441 = vmatpush1.bf16.msra.mxu0 %v303
    %442 = vmatprep.subr.bf16.mxu0 %v310
    %443 = vmatpush1.bf16.msra.mxu0 %v309
    %444 = vmatprep.subr.bf16.mxu0 %v316
    %445 = vmatpush1.bf16.msra.mxu0 %v315
    %446 = vmatprep.subr.bf16.mxu0 %v322
    %447 = vmatpush1.bf16.msra.mxu0 %v321
    %448 = vmatprep.subr.bf16.mxu0 %v328
    %449 = vmatpush1.bf16.msra.mxu0 %v327
    %450 = vmatprep.subr.bf16.mxu0 %v334
    %451 = vmatpush1.bf16.msra.mxu0 %v333
    %452 = vmatprep.subr.bf16.mxu0 %v340
    %453 = vmatpush1.bf16.msra.mxu0 %v339
    %454 = vmatprep.subr.bf16.mxu0 %v346
    %455 = vmatpush1.bf16.msra.mxu0 %v345
    %456 = vmatprep.subr.bf16.mxu0 0
    %457 = vmatpush1.bf16.msra.mxu0 0
    %458 = vmatprep.subr.bf16.mxu0 0
    %459 = vmatpush1.bf16.msra.mxu0 0
    %460 = vmatprep.subr.bf16.mxu0 0
    %461 = vmatpush1.bf16.msra.mxu0 0
    %462 = vmatprep.subr.bf16.mxu0 0
    %463 = vmatpush1.bf16.msra.mxu0 0
    %464 = vmatprep.subr.bf16.mxu0 0
    %465 = vmatpush1.bf16.msra.mxu0 0
    %466 = vmatprep.subr.bf16.mxu0 0
    %467 = vmatpush1.bf16.msra.mxu0 0
    %468 = vmatprep.subr.bf16.mxu0 0
    %469 = vmatpush1.bf16.msra.mxu0 0
    %470 = vmatprep.subr.bf16.mxu0 0
    %471 = vmatpush1.bf16.msra.mxu0 0
    %472 = vmatprep.mubr.bf16.mxu0 0
    %473 = vmatmul.mubr.bf16.gmra.mrb[0].mxu0 %v78
    %v474 = vpop.f32.mrb[0].mxu0
    %v475 = vadd.f32 %v144, %v474
    %v476 = vpop.f32.mrb[0].mxu0
    %v477 = vadd.f32 %v148, %v476
    %v478 = vpop.f32.mrb[0].mxu0
    %v479 = vadd.f32 %v144, %v478
    %v480 = vpop.f32.mrb[0].mxu0
    %v481 = vadd.f32 %v148, %v480
    %482 = vdwg.mxu0
    %483 = vmatprep.subr.bf16.mxu0 %v306
    %484 = vmatpush1.bf16.msra.mxu0 %v305
    %485 = vmatprep.subr.bf16.mxu0 %v312
    %486 = vmatpush1.bf16.msra.mxu0 %v311
    %487 = vmatprep.subr.bf16.mxu0 %v318
    %488 = vmatpush1.bf16.msra.mxu0 %v317
    %489 = vmatprep.subr.bf16.mxu0 %v324
    %490 = vmatpush1.bf16.msra.mxu0 %v323
    %491 = vmatprep.subr.bf16.mxu0 %v330
    %492 = vmatpush1.bf16.msra.mxu0 %v329
    %493 = vmatprep.subr.bf16.mxu0 %v336
    %494 = vmatpush1.bf16.msra.mxu0 %v335
    %495 = vmatprep.subr.bf16.mxu0 %v342
    %496 = vmatpush1.bf16.msra.mxu0 %v341
    %497 = vmatprep.subr.bf16.mxu0 %v348
    %498 = vmatpush1.bf16.msra.mxu0 %v347
    %499 = vmatprep.subr.bf16.mxu0 0
    %500 = vmatpush1.bf16.msra.mxu0 0
    %501 = vmatprep.subr.bf16.mxu0 0
    %502 = vmatpush1.bf16.msra.mxu0 0
    %503 = vmatprep.subr.bf16.mxu0 0
    %504 = vmatpush1.bf16.msra.mxu0 0
    %505 = vmatprep.subr.bf16.mxu0 0
    %506 = vmatpush1.bf16.msra.mxu0 0
    %507 = vmatprep.subr.bf16.mxu0 0
    %508 = vmatpush1.bf16.msra.mxu0 0
    %509 = vmatprep.subr.bf16.mxu0 0
    %510 = vmatpush1.bf16.msra.mxu0 0
    %511 = vmatprep.subr.bf16.mxu0 0
    %512 = vmatpush1.bf16.msra.mxu0 0
    %513 = vmatprep.subr.bf16.mxu0 0
    %514 = vmatpush1.bf16.msra.mxu0 0
    %515 = vmatprep.mubr.bf16.mxu0 0
    %516 = vmatmul.mubr.bf16.gmra.mrb[0].mxu0 %v78
    %v517 = vpop.f32.mrb[0].mxu0
    %v518 = vadd.f32 %v152, %v517
    %v519 = vpop.f32.mrb[0].mxu0
    %v520 = vadd.f32 %v156, %v519
    %v521 = vpop.f32.mrb[0].mxu0
    %v522 = vadd.f32 %v152, %v521
    %v523 = vpop.f32.mrb[0].mxu0
    %v524 = vadd.f32 %v156, %v523
    %525 = vdwg.mxu0
    %v526 = vld [vmem:[%s4] sm:$0xf]
    %v527 = vld [vmem:[%s4 + $0x4] sm:$0xf]
    %v528 = vld [vmem:[%s4 + $0x8] sm:$0xf]
    %v529 = vld [vmem:[%s4 + $0xc] sm:$0xf]
    %v530 = vld [vmem:[%s4 + $0x10] sm:$0xf]
    %v531 = vld [vmem:[%s4 + $0x14] sm:$0xf]
    %v532 = vld [vmem:[%s4 + $0x18] sm:$0xf]
    %v533 = vld [vmem:[%s4 + $0x1c] sm:$0xf]
    %v534 = vld [vmem:[%s4 + $0x20] sm:$0xf]
    %v535 = vld [vmem:[%s4 + $0x24] sm:$0xf]
    %v536 = vld [vmem:[%s4 + $0x28] sm:$0xf]
    %v537 = vld [vmem:[%s4 + $0x2c] sm:$0xf]
    %v538 = vld [vmem:[%s4 + $0x30] sm:$0xf]
    %v539 = vld [vmem:[%s4 + $0x34] sm:$0xf]
    %v540 = vld [vmem:[%s4 + $0x38] sm:$0xf]
    %v541 = vld [vmem:[%s4 + $0x3c] sm:$0xf]
    %v542 = vld [vmem:[%s4 + $0x40] sm:$0xf]
    %v543 = vld [vmem:[%s4 + $0x44] sm:$0xf]
    %v544 = vld [vmem:[%s4 + $0x48] sm:$0xf]
    %v545 = vld [vmem:[%s4 + $0x4c] sm:$0xf]
    %v546 = vld [vmem:[%s4 + $0x50] sm:$0xf]
    %v547 = vld [vmem:[%s4 + $0x54] sm:$0xf]
    %v548 = vld [vmem:[%s4 + $0x58] sm:$0xf]
    %v549 = vld [vmem:[%s4 + $0x5c] sm:$0xf]
    %v550 = vld [vmem:[%s4 + $0x60] sm:$0xf]
    %v551 = vld [vmem:[%s4 + $0x64] sm:$0xf]
    %v552 = vld [vmem:[%s4 + $0x68] sm:$0xf]
    %v553 = vld [vmem:[%s4 + $0x6c] sm:$0xf]
    %v554 = vld [vmem:[%s4 + $0x70] sm:$0xf]
    %v555 = vld [vmem:[%s4 + $0x74] sm:$0xf]
    %v556 = vld [vmem:[%s4 + $0x78] sm:$0xf]
    %v557 = vld [vmem:[%s4 + $0x7c] sm:$0xf]
    %v558 = vpack.c.bf16 %v436, %v432
    %v559 = vpack.c.bf16 %v479, %v475
    %v560 = vpack.c.bf16 %v522, %v518
    %561 = vmatprep.subr.bf16.mxu0 0
    %562 = vmatpush1.bf16.xpose.msra.mxu0 %v559
    %563 = vmatprep.subr.bf16.mxu0 0
    %564 = vmatpush1.bf16.xpose.msra.mxu0 0
    %565 = vmatprep.subr.bf16.mxu0 0
    %566 = vmatpush1.bf16.xpose.msra.mxu0 0
    %567 = vmatprep.subr.bf16.mxu0 0
    %568 = vmatpush1.bf16.xpose.msra.mxu0 0
    %569 = vmatprep.subr.bf16.mxu0 0
    %570 = vmatpush1.bf16.xpose.msra.mxu0 0
    %571 = vmatprep.subr.bf16.mxu0 0
    %572 = vmatpush1.bf16.xpose.msra.mxu0 0
    %573 = vmatprep.subr.bf16.mxu0 0
    %574 = vmatpush1.bf16.xpose.msra.mxu0 0
    %575 = vmatprep.subr.bf16.mxu0 0
    %576 = vmatpush1.bf16.xpose.msra.mxu0 0
    %577 = vmatprep.subr.bf16.mxu0 0
    %578 = vmatpush1.bf16.xpose.msra.mxu0 0
    %579 = vmatprep.subr.bf16.mxu0 0
    %580 = vmatpush1.bf16.xpose.msra.mxu0 0
    %581 = vmatprep.subr.bf16.mxu0 0
    %582 = vmatpush1.bf16.xpose.msra.mxu0 0
    %583 = vmatprep.subr.bf16.mxu0 0
    %584 = vmatpush1.bf16.xpose.msra.mxu0 0
    %585 = vmatprep.subr.bf16.mxu0 0
    %586 = vmatpush1.bf16.xpose.msra.mxu0 0
    %587 = vmatprep.subr.bf16.mxu0 0
    %588 = vmatpush1.bf16.xpose.msra.mxu0 0
    %589 = vmatprep.subr.bf16.mxu0 0
    %590 = vmatpush1.bf16.xpose.msra.mxu0 0
    %591 = vmatprep.subr.bf16.mxu0 0
    %592 = vmatpush1.bf16.xpose.msra.mxu0 0
    %593 = vmatprep.mubr.bf16.mxu0 0
    %594 = vmatmul.mubr.bf16.gmra.mrb[0].mxu0 %v558
    %v595 = vpop.f32.mrb[0].mxu0
    %v596 = vadd.f32 0.0, %v595
    %v597 = vpop.f32.mrb[0].mxu0
    %v598 = vpop.f32.mrb[0].mxu0
    %v599 = vadd.f32 0.0, %v598
    %v600 = vpop.f32.mrb[0].mxu0
    %601 = vdwg.mxu0
    %v602 = vmul.f32 %v596, 0.125
    %v603 = vmul.f32 %v599, 0.125
    %v604 = vadd.f32 %v602, %v37
    %v605 = vadd.f32 %v603, %v38
    %vm606 = vcmask 130048
    %v607 = vsel %vm606, %v604, -inf
    %608 = vmax.xlane.f32.xlu0 %v607
    %v609 = vpop.xlane.xlu0 %608
    %v610 = vsel %vm606, %v605, -inf
    %611 = vmax.xlane.f32.xlu0 %v610
    %v612 = vpop.xlane.xlu0 %611
    %v613 = vsub.f32 %v604, %v609
    %v614 = vsub.f32 %v605, %v612
    %v615 = vmul.f32 %v613, 1.442695
    %v616 = vpow.pop %v615
    %v617 = vmul.f32 %v614, 1.442695
    %v618 = vpow.pop %v617
    %v619 = vsel %vm606, %v616, 0.0
    %620 = vadd.xlane.f32.xlu0 %v619
    %v621 = vpop.xlane.xlu0 %620
    %v622 = vsel %vm606, %v618, 0.0
    %623 = vadd.xlane.f32.xlu0 %v622
    %v624 = vpop.xlane.xlu0 %623
    %v625 = vrcp.pop %v621
    %v626 = vmul.f32 %v616, %v625
    %v627 = vrcp.pop %v624
    %v628 = vmul.f32 %v618, %v627
    %v629 = vpack.c.bf16 %v628, %v626
    %v631 = vsel %vm606, %v629, 0
    %633 = vmatprep.subr.bf16.mxu0 0
    %634 = vmatpush1.bf16.msra.mxu0 %v560
    %635 = vmatprep.subr.bf16.mxu0 0
    %636 = vmatpush1.bf16.msra.mxu0 0
    %637 = vmatprep.subr.bf16.mxu0 0
    %638 = vmatpush1.bf16.msra.mxu0 0
    %639 = vmatprep.subr.bf16.mxu0 0
    %640 = vmatpush1.bf16.msra.mxu0 0
    %641 = vmatprep.subr.bf16.mxu0 0
    %642 = vmatpush1.bf16.msra.mxu0 0
    %643 = vmatprep.subr.bf16.mxu0 0
    %644 = vmatpush1.bf16.msra.mxu0 0
    %645 = vmatprep.subr.bf16.mxu0 0
    %646 = vmatpush1.bf16.msra.mxu0 0
    %647 = vmatprep.subr.bf16.mxu0 0
    %648 = vmatpush1.bf16.msra.mxu0 0
    %649 = vmatprep.subr.bf16.mxu0 0
    %650 = vmatpush1.bf16.msra.mxu0 0
    %651 = vmatprep.subr.bf16.mxu0 0
    %652 = vmatpush1.bf16.msra.mxu0 0
    %653 = vmatprep.subr.bf16.mxu0 0
    %654 = vmatpush1.bf16.msra.mxu0 0
    %655 = vmatprep.subr.bf16.mxu0 0
    %656 = vmatpush1.bf16.msra.mxu0 0
    %657 = vmatprep.subr.bf16.mxu0 0
    %658 = vmatpush1.bf16.msra.mxu0 0
    %659 = vmatprep.subr.bf16.mxu0 0
    %660 = vmatpush1.bf16.msra.mxu0 0
    %661 = vmatprep.subr.bf16.mxu0 0
    %662 = vmatpush1.bf16.msra.mxu0 0
    %663 = vmatprep.subr.bf16.mxu0 0
    %664 = vmatpush1.bf16.msra.mxu0 0
    %665 = vmatprep.mubr.bf16.mxu0 0
    %666 = vmatmul.mubr.bf16.gmra.mrb[0].mxu0 %v631
    %v667 = vpop.f32.mrb[0].mxu0
    %v668 = vadd.f32 0.0, %v667
    %v669 = vpop.f32.mrb[0].mxu0
    %v670 = vpop.f32.mrb[0].mxu0
    %v671 = vadd.f32 0.0, %v670
    %v672 = vpop.f32.mrb[0].mxu0
    %673 = vdwg.mxu0
    %v674 = vpack.c.bf16 %v671, %v668
    %v675 = vpack.c.bf16 %v438, %v434
    %v676 = vpack.c.bf16 %v481, %v477
    %v677 = vpack.c.bf16 %v524, %v520
    %678 = vmatprep.subr.bf16.mxu0 0
    %679 = vmatpush1.bf16.xpose.msra.mxu0 %v676
    %680 = vmatprep.subr.bf16.mxu0 0
    %681 = vmatpush1.bf16.xpose.msra.mxu0 0
    %682 = vmatprep.subr.bf16.mxu0 0
    %683 = vmatpush1.bf16.xpose.msra.mxu0 0
    %684 = vmatprep.subr.bf16.mxu0 0
    %685 = vmatpush1.bf16.xpose.msra.mxu0 0
    %686 = vmatprep.subr.bf16.mxu0 0
    %687 = vmatpush1.bf16.xpose.msra.mxu0 0
    %688 = vmatprep.subr.bf16.mxu0 0
    %689 = vmatpush1.bf16.xpose.msra.mxu0 0
    %690 = vmatprep.subr.bf16.mxu0 0
    %691 = vmatpush1.bf16.xpose.msra.mxu0 0
    %692 = vmatprep.subr.bf16.mxu0 0
    %693 = vmatpush1.bf16.xpose.msra.mxu0 0
    %694 = vmatprep.subr.bf16.mxu0 0
    %695 = vmatpush1.bf16.xpose.msra.mxu0 0
    %696 = vmatprep.subr.bf16.mxu0 0
    %697 = vmatpush1.bf16.xpose.msra.mxu0 0
    %698 = vmatprep.subr.bf16.mxu0 0
    %699 = vmatpush1.bf16.xpose.msra.mxu0 0
    %700 = vmatprep.subr.bf16.mxu0 0
    %701 = vmatpush1.bf16.xpose.msra.mxu0 0
    %702 = vmatprep.subr.bf16.mxu0 0
    %703 = vmatpush1.bf16.xpose.msra.mxu0 0
    %704 = vmatprep.subr.bf16.mxu0 0
    %705 = vmatpush1.bf16.xpose.msra.mxu0 0
    %706 = vmatprep.subr.bf16.mxu0 0
    %707 = vmatpush1.bf16.xpose.msra.mxu0 0
    %708 = vmatprep.subr.bf16.mxu0 0
    %709 = vmatpush1.bf16.xpose.msra.mxu0 0
    %710 = vmatprep.mubr.bf16.mxu0 0
    %711 = vmatmul.mubr.bf16.gmra.mrb[0].mxu0 %v675
    %v712 = vpop.f32.mrb[0].mxu0
    %v713 = vadd.f32 0.0, %v712
    %v714 = vpop.f32.mrb[0].mxu0
    %v715 = vpop.f32.mrb[0].mxu0
    %v716 = vadd.f32 0.0, %v715
    %v717 = vpop.f32.mrb[0].mxu0
    %718 = vdwg.mxu0
    %v719 = vmul.f32 %v713, 0.125
    %v720 = vmul.f32 %v716, 0.125
    %v721 = vadd.f32 %v719, %v37
    %v722 = vadd.f32 %v720, %v38
    %v723 = vsel %vm606, %v721, -inf
    %724 = vmax.xlane.f32.xlu0 %v723
    %v725 = vpop.xlane.xlu0 %724
    %v726 = vsel %vm606, %v722, -inf
    %727 = vmax.xlane.f32.xlu0 %v726
    %v728 = vpop.xlane.xlu0 %727
    %v729 = vsub.f32 %v721, %v725
    %v730 = vsub.f32 %v722, %v728
    %v731 = vmul.f32 %v729, 1.442695
    %v732 = vpow.pop %v731
    %v733 = vmul.f32 %v730, 1.442695
    %v734 = vpow.pop %v733
    %v735 = vsel %vm606, %v732, 0.0
    %736 = vadd.xlane.f32.xlu0 %v735
    %v737 = vpop.xlane.xlu0 %736
    %v738 = vsel %vm606, %v734, 0.0
    %739 = vadd.xlane.f32.xlu0 %v738
    %v740 = vpop.xlane.xlu0 %739
    %v741 = vrcp.pop %v737
    %v742 = vmul.f32 %v732, %v741
    %v743 = vrcp.pop %v740
    %v744 = vmul.f32 %v734, %v743
    %v745 = vpack.c.bf16 %v744, %v742
    %v747 = vsel %vm606, %v745, 0
    %749 = vmatprep.subr.bf16.mxu0 0
    %750 = vmatpush1.bf16.msra.mxu0 %v677
    %751 = vmatprep.subr.bf16.mxu0 0
    %752 = vmatpush1.bf16.msra.mxu0 0
    %753 = vmatprep.subr.bf16.mxu0 0
    %754 = vmatpush1.bf16.msra.mxu0 0
    %755 = vmatprep.subr.bf16.mxu0 0
    %756 = vmatpush1.bf16.msra.mxu0 0
    %757 = vmatprep.subr.bf16.mxu0 0
    %758 = vmatpush1.bf16.msra.mxu0 0
    %759 = vmatprep.subr.bf16.mxu0 0
    %760 = vmatpush1.bf16.msra.mxu0 0
    %761 = vmatprep.subr.bf16.mxu0 0
    %762 = vmatpush1.bf16.msra.mxu0 0
    %763 = vmatprep.subr.bf16.mxu0 0
    %764 = vmatpush1.bf16.msra.mxu0 0
    %765 = vmatprep.subr.bf16.mxu0 0
    %766 = vmatpush1.bf16.msra.mxu0 0
    %767 = vmatprep.subr.bf16.mxu0 0
    %768 = vmatpush1.bf16.msra.mxu0 0
    %769 = vmatprep.subr.bf16.mxu0 0
    %770 = vmatpush1.bf16.msra.mxu0 0
    %771 = vmatprep.subr.bf16.mxu0 0
    %772 = vmatpush1.bf16.msra.mxu0 0
    %773 = vmatprep.subr.bf16.mxu0 0
    %774 = vmatpush1.bf16.msra.mxu0 0
    %775 = vmatprep.subr.bf16.mxu0 0
    %776 = vmatpush1.bf16.msra.mxu0 0
    %777 = vmatprep.subr.bf16.mxu0 0
    %778 = vmatpush1.bf16.msra.mxu0 0
    %779 = vmatprep.subr.bf16.mxu0 0
    %780 = vmatpush1.bf16.msra.mxu0 0
    %781 = vmatprep.mubr.bf16.mxu0 0
    %782 = vmatmul.mubr.bf16.gmra.mrb[0].mxu0 %v747
    %v783 = vpop.f32.mrb[0].mxu0
    %v784 = vadd.f32 0.0, %v783
    %v785 = vpop.f32.mrb[0].mxu0
    %v786 = vpop.f32.mrb[0].mxu0
    %v787 = vadd.f32 0.0, %v786
    %v788 = vpop.f32.mrb[0].mxu0
    %789 = vdwg.mxu0
    %v790 = vpack.c.bf16 %v787, %v784
    %v807 = vunpack.c.l.b16 %v542
    %v808 = vunpack.c.l.b16 %v543
    %v809 = vunpack.c.l.b16 %v544
    %v810 = vunpack.c.l.b16 %v545
    %v811 = vunpack.c.l.b16 %v546
    %v812 = vunpack.c.l.b16 %v547
    %v813 = vunpack.c.l.b16 %v548
    %v814 = vunpack.c.l.b16 %v549
    %v815 = vunpack.c.l.b16 %v550
    %v816 = vunpack.c.l.b16 %v551
    %v817 = vunpack.c.l.b16 %v552
    %v818 = vunpack.c.l.b16 %v553
    %v819 = vunpack.c.l.b16 %v554
    %v820 = vunpack.c.l.b16 %v555
    %v821 = vunpack.c.l.b16 %v556
    %v822 = vunpack.c.l.b16 %v557
    %v823 = vpack.c.b16 %v808, %v807
    %v824 = vpack.c.b16 %v810, %v809
    %v825 = vpack.c.b16 %v812, %v811
    %v826 = vpack.c.b16 %v814, %v813
    %v827 = vpack.c.b16 %v816, %v815
    %v828 = vpack.c.b16 %v818, %v817
    %v829 = vpack.c.b16 %v820, %v819
    %v830 = vpack.c.b16 %v822, %v821
    %839 = vmatprep.subr.bf16.mxu0 0
    %840 = vmatpush1.bf16.msra.mxu0 %v823
    %841 = vmatprep.subr.bf16.mxu0 0
    %842 = vmatpush1.bf16.msra.mxu0 %v824
    %843 = vmatprep.subr.bf16.mxu0 0
    %844 = vmatpush1.bf16.msra.mxu0 %v825
    %845 = vmatprep.subr.bf16.mxu0 0
    %846 = vmatpush1.bf16.msra.mxu0 %v826
    %847 = vmatprep.subr.bf16.mxu0 0
    %848 = vmatpush1.bf16.msra.mxu0 %v827
    %849 = vmatprep.subr.bf16.mxu0 0
    %850 = vmatpush1.bf16.msra.mxu0 %v828
    %851 = vmatprep.subr.bf16.mxu0 0
    %852 = vmatpush1.bf16.msra.mxu0 %v829
    %853 = vmatprep.subr.bf16.mxu0 0
    %854 = vmatpush1.bf16.msra.mxu0 %v830
    %855 = vmatprep.subr.bf16.mxu0 0
    %856 = vmatpush1.bf16.msra.mxu0 0
    %857 = vmatprep.subr.bf16.mxu0 0
    %858 = vmatpush1.bf16.msra.mxu0 0
    %859 = vmatprep.subr.bf16.mxu0 0
    %860 = vmatpush1.bf16.msra.mxu0 0
    %861 = vmatprep.subr.bf16.mxu0 0
    %862 = vmatpush1.bf16.msra.mxu0 0
    %863 = vmatprep.subr.bf16.mxu0 0
    %864 = vmatpush1.bf16.msra.mxu0 0
    %865 = vmatprep.subr.bf16.mxu0 0
    %866 = vmatpush1.bf16.msra.mxu0 0
    %867 = vmatprep.subr.bf16.mxu0 0
    %868 = vmatpush1.bf16.msra.mxu0 0
    %869 = vmatprep.subr.bf16.mxu0 0
    %870 = vmatpush1.bf16.msra.mxu0 0
    %871 = vmatprep.mubr.bf16.mxu0 0
    %872 = vmatmul.mubr.bf16.gmra.mrb[0].mxu0 %v790
    %v873 = vpop.f32.mrb[0].mxu0
    %v874 = vadd.f32 0.0, %v873
    %v875 = vpop.f32.mrb[0].mxu0
    %v876 = vpop.f32.mrb[0].mxu0
    %v877 = vadd.f32 0.0, %v876
    %v878 = vpop.f32.mrb[0].mxu0
    %879 = vdwg.mxu0
    %v896 = vunpack.c.l.b16 %v526
    %v897 = vunpack.c.l.b16 %v527
    %v898 = vunpack.c.l.b16 %v528
    %v899 = vunpack.c.l.b16 %v529
    %v900 = vunpack.c.l.b16 %v530
    %v901 = vunpack.c.l.b16 %v531
    %v902 = vunpack.c.l.b16 %v532
    %v903 = vunpack.c.l.b16 %v533
    %v904 = vunpack.c.l.b16 %v534
    %v905 = vunpack.c.l.b16 %v535
    %v906 = vunpack.c.l.b16 %v536
    %v907 = vunpack.c.l.b16 %v537
    %v908 = vunpack.c.l.b16 %v538
    %v909 = vunpack.c.l.b16 %v539
    %v910 = vunpack.c.l.b16 %v540
    %v911 = vunpack.c.l.b16 %v541
    %v912 = vpack.c.b16 %v897, %v896
    %v913 = vpack.c.b16 %v899, %v898
    %v914 = vpack.c.b16 %v901, %v900
    %v915 = vpack.c.b16 %v903, %v902
    %v916 = vpack.c.b16 %v905, %v904
    %v917 = vpack.c.b16 %v907, %v906
    %v918 = vpack.c.b16 %v909, %v908
    %v919 = vpack.c.b16 %v911, %v910
    %928 = vmatprep.subr.bf16.mxu0 0
    %929 = vmatpush1.bf16.msra.mxu0 %v912
    %930 = vmatprep.subr.bf16.mxu0 0
    %931 = vmatpush1.bf16.msra.mxu0 %v913
    %932 = vmatprep.subr.bf16.mxu0 0
    %933 = vmatpush1.bf16.msra.mxu0 %v914
    %934 = vmatprep.subr.bf16.mxu0 0
    %935 = vmatpush1.bf16.msra.mxu0 %v915
    %936 = vmatprep.subr.bf16.mxu0 0
    %937 = vmatpush1.bf16.msra.mxu0 %v916
    %938 = vmatprep.subr.bf16.mxu0 0
    %939 = vmatpush1.bf16.msra.mxu0 %v917
    %940 = vmatprep.subr.bf16.mxu0 0
    %941 = vmatpush1.bf16.msra.mxu0 %v918
    %942 = vmatprep.subr.bf16.mxu0 0
    %943 = vmatpush1.bf16.msra.mxu0 %v919
    %944 = vmatprep.subr.bf16.mxu0 0
    %945 = vmatpush1.bf16.msra.mxu0 0
    %946 = vmatprep.subr.bf16.mxu0 0
    %947 = vmatpush1.bf16.msra.mxu0 0
    %948 = vmatprep.subr.bf16.mxu0 0
    %949 = vmatpush1.bf16.msra.mxu0 0
    %950 = vmatprep.subr.bf16.mxu0 0
    %951 = vmatpush1.bf16.msra.mxu0 0
    %952 = vmatprep.subr.bf16.mxu0 0
    %953 = vmatpush1.bf16.msra.mxu0 0
    %954 = vmatprep.subr.bf16.mxu0 0
    %955 = vmatpush1.bf16.msra.mxu0 0
    %956 = vmatprep.subr.bf16.mxu0 0
    %957 = vmatpush1.bf16.msra.mxu0 0
    %958 = vmatprep.subr.bf16.mxu0 0
    %959 = vmatpush1.bf16.msra.mxu0 0
    %960 = vmatprep.mubr.bf16.mxu0 0
    %961 = vmatmul.mubr.bf16.gmra.mrb[0].mxu0 %v674
    %v962 = vpop.f32.mrb[0].mxu0
    %v963 = vadd.f32 %v874, %v962
    %v964 = vpop.f32.mrb[0].mxu0
    %v965 = vpop.f32.mrb[0].mxu0
    %v966 = vadd.f32 %v877, %v965
    %v967 = vpop.f32.mrb[0].mxu0
    %968 = vdwg.mxu0
    %v969 = vlaneseq
    %v970 = vshrl.u32 %v969, 7
    %v971 = vsub.s32 1, %v970
    %v972 = vrot.slane %v79, %v971
    %v973 = vadd.f32 %v963, %v972
    %v974 = vadd.f32 %v966, %v972
    %v975 = vunpack.c.l.bf16 %v78
    %v976 = vunpack.c.h.bf16 %v78
    %v977 = vadd.f32 %v975, %v973
    %v978 = vadd.f32 %v976, %v974
    %979 = vadd.xlane.f32.xlu0 %v977
    %v980 = vpop.xlane.xlu0 %979
    %981 = vadd.xlane.f32.xlu0 %v978
    %v982 = vpop.xlane.xlu0 %981
    %v983 = vmul.f32 %v980, %v47
    %v984 = vmul.f32 %v982, %v47
    %v985 = vsub.f32 %v977, %v983
    %v986 = vsub.f32 %v978, %v984
    %v987 = vmul.f32 %v985, %v985
    %v988 = vmul.f32 %v986, %v986
    %989 = vadd.xlane.f32.xlu0 %v987
    %v990 = vpop.xlane.xlu0 %989
    %991 = vadd.xlane.f32.xlu0 %v988
    %v992 = vpop.xlane.xlu0 %991
    %v993 = vmul.f32 %v990, %v47
    %v994 = vmul.f32 %v992, %v47
    %v995 = vadd.f32 %v993, 1e-12
    %v996 = vadd.f32 %v994, 1e-12
    %v997 = vrsqrt.pop %v995
    %v998 = vrsqrt.pop %v996
    %v999 = vmul.f32 %v985, %v997
    %v1000 = vmul.f32 %v986, %v998
    %v1001 = vlaneseq
    %v1002 = vshrl.u32 %v1001, 7
    %v1003 = vsub.s32 4, %v1002
    %v1004 = vrot.slane %v79, %v1003
    %v1005 = vmul.f32 %v999, %v1004
    %v1006 = vmul.f32 %v1000, %v1004
    %v1007 = vlaneseq
    %v1008 = vshrl.u32 %v1007, 7
    %v1009 = vsub.s32 5, %v1008
    %v1010 = vrot.slane %v79, %v1009
    %v1011 = vadd.f32 %v1005, %v1010
    %v1012 = vadd.f32 %v1006, %v1010
    %v1013 = vpack.c.bf16 %v1012, %v1011
    %v1014 = vld [vmem:[%s5] sm:$0xff]
    %v1015 = vld [vmem:[%s5 + $0x8] sm:$0xff]
    %v1016 = vld [vmem:[%s5 + $0x10] sm:$0xff]
    %v1017 = vld [vmem:[%s5 + $0x18] sm:$0xff]
    %v1018 = vld [vmem:[%s5 + $0x20] sm:$0xff]
    %v1019 = vld [vmem:[%s5 + $0x28] sm:$0xff]
    %v1020 = vld [vmem:[%s5 + $0x30] sm:$0xff]
    %v1021 = vld [vmem:[%s5 + $0x38] sm:$0xff]
    %v1022 = vld [vmem:[%s5 + $0x40] sm:$0xff]
    %v1023 = vld [vmem:[%s5 + $0x48] sm:$0xff]
    %v1024 = vld [vmem:[%s5 + $0x50] sm:$0xff]
    %v1025 = vld [vmem:[%s5 + $0x58] sm:$0xff]
    %v1026 = vld [vmem:[%s5 + $0x60] sm:$0xff]
    %v1027 = vld [vmem:[%s5 + $0x68] sm:$0xff]
    %v1028 = vld [vmem:[%s5 + $0x70] sm:$0xff]
    %v1029 = vld [vmem:[%s5 + $0x78] sm:$0xff]
    %v1030 = vlaneseq
    %v1031 = vshrl.u32 %v1030, 7
    %v1032 = vsub.s32 2, %v1031
    %v1033 = vrot.slane %v79, %v1032
    %v1034 = vlaneseq
    %v1035 = vshrl.u32 %v1034, 7
    %v1036 = vsub.s32 2, %v1035
    %v1037 = vrot.slane %v80, %v1036
    %v1054 = vunpack.c.l.b16 %v1014
    %v1055 = vunpack.c.h.b16 %v1014
    %v1056 = vunpack.c.l.b16 %v1015
    %v1057 = vunpack.c.h.b16 %v1015
    %v1058 = vunpack.c.l.b16 %v1016
    %v1059 = vunpack.c.h.b16 %v1016
    %v1060 = vunpack.c.l.b16 %v1017
    %v1061 = vunpack.c.h.b16 %v1017
    %v1062 = vunpack.c.l.b16 %v1018
    %v1063 = vunpack.c.h.b16 %v1018
    %v1064 = vunpack.c.l.b16 %v1019
    %v1065 = vunpack.c.h.b16 %v1019
    %v1066 = vunpack.c.l.b16 %v1020
    %v1067 = vunpack.c.h.b16 %v1020
    %v1068 = vunpack.c.l.b16 %v1021
    %v1069 = vunpack.c.h.b16 %v1021
    %v1070 = vunpack.c.l.b16 %v1022
    %v1071 = vunpack.c.h.b16 %v1022
    %v1072 = vunpack.c.l.b16 %v1023
    %v1073 = vunpack.c.h.b16 %v1023
    %v1074 = vunpack.c.l.b16 %v1024
    %v1075 = vunpack.c.h.b16 %v1024
    %v1076 = vunpack.c.l.b16 %v1025
    %v1077 = vunpack.c.h.b16 %v1025
    %v1078 = vunpack.c.l.b16 %v1026
    %v1079 = vunpack.c.h.b16 %v1026
    %v1080 = vunpack.c.l.b16 %v1027
    %v1081 = vunpack.c.h.b16 %v1027
    %v1082 = vunpack.c.l.b16 %v1028
    %v1083 = vunpack.c.h.b16 %v1028
    %v1084 = vunpack.c.l.b16 %v1029
    %v1085 = vunpack.c.h.b16 %v1029
    %v1086 = vpack.c.b16 %v1056, %v1054
    %v1087 = vpack.c.b16 %v1057, %v1055
    %v1088 = vpack.c.b16 %v1060, %v1058
    %v1089 = vpack.c.b16 %v1061, %v1059
    %v1090 = vpack.c.b16 %v1064, %v1062
    %v1091 = vpack.c.b16 %v1065, %v1063
    %v1092 = vpack.c.b16 %v1068, %v1066
    %v1093 = vpack.c.b16 %v1069, %v1067
    %v1094 = vpack.c.b16 %v1072, %v1070
    %v1095 = vpack.c.b16 %v1073, %v1071
    %v1096 = vpack.c.b16 %v1076, %v1074
    %v1097 = vpack.c.b16 %v1077, %v1075
    %v1098 = vpack.c.b16 %v1080, %v1078
    %v1099 = vpack.c.b16 %v1081, %v1079
    %v1100 = vpack.c.b16 %v1084, %v1082
    %v1101 = vpack.c.b16 %v1085, %v1083
    %1118 = vmatprep.subr.bf16.mxu0 %v1087
    %1119 = vmatpush1.bf16.msra.mxu0 %v1086
    %1120 = vmatprep.subr.bf16.mxu0 %v1089
    %1121 = vmatpush1.bf16.msra.mxu0 %v1088
    %1122 = vmatprep.subr.bf16.mxu0 %v1091
    %1123 = vmatpush1.bf16.msra.mxu0 %v1090
    %1124 = vmatprep.subr.bf16.mxu0 %v1093
    %1125 = vmatpush1.bf16.msra.mxu0 %v1092
    %1126 = vmatprep.subr.bf16.mxu0 %v1095
    %1127 = vmatpush1.bf16.msra.mxu0 %v1094
    %1128 = vmatprep.subr.bf16.mxu0 %v1097
    %1129 = vmatpush1.bf16.msra.mxu0 %v1096
    %1130 = vmatprep.subr.bf16.mxu0 %v1099
    %1131 = vmatpush1.bf16.msra.mxu0 %v1098
    %1132 = vmatprep.subr.bf16.mxu0 %v1101
    %1133 = vmatpush1.bf16.msra.mxu0 %v1100
    %1134 = vmatprep.subr.bf16.mxu0 0
    %1135 = vmatpush1.bf16.msra.mxu0 0
    %1136 = vmatprep.subr.bf16.mxu0 0
    %1137 = vmatpush1.bf16.msra.mxu0 0
    %1138 = vmatprep.subr.bf16.mxu0 0
    %1139 = vmatpush1.bf16.msra.mxu0 0
    %1140 = vmatprep.subr.bf16.mxu0 0
    %1141 = vmatpush1.bf16.msra.mxu0 0
    %1142 = vmatprep.subr.bf16.mxu0 0
    %1143 = vmatpush1.bf16.msra.mxu0 0
    %1144 = vmatprep.subr.bf16.mxu0 0
    %1145 = vmatpush1.bf16.msra.mxu0 0
    %1146 = vmatprep.subr.bf16.mxu0 0
    %1147 = vmatpush1.bf16.msra.mxu0 0
    %1148 = vmatprep.subr.bf16.mxu0 0
    %1149 = vmatpush1.bf16.msra.mxu0 0
    %1150 = vmatprep.mubr.bf16.mxu0 0
    %1151 = vmatmul.mubr.bf16.gmra.mrb[0].mxu0 %v1013
    %v1152 = vpop.f32.mrb[0].mxu0
    %v1153 = vadd.f32 %v1033, %v1152
    %v1154 = vpop.f32.mrb[0].mxu0
    %v1155 = vadd.f32 %v1037, %v1154
    %v1156 = vpop.f32.mrb[0].mxu0
    %v1157 = vadd.f32 %v1033, %v1156
    %v1158 = vpop.f32.mrb[0].mxu0
    %v1159 = vadd.f32 %v1037, %v1158
    %1160 = vdwg.mxu0
    %v1161 = vmul.f32 %v1153, %v1153
    %v1162 = vmul.f32 %v1155, %v1155
    %v1163 = vmul.f32 %v1157, %v1157
    %v1164 = vmul.f32 %v1159, %v1159
    %v1165 = vmul.f32 %v1153, %v1161
    %v1166 = vmul.f32 %v1155, %v1162
    %v1167 = vmul.f32 %v1157, %v1163
    %v1168 = vmul.f32 %v1159, %v1164
    %v1169 = vmul.f32 %v1165, 0.044715
    %v1170 = vmul.f32 %v1166, 0.044715
    %v1171 = vmul.f32 %v1167, 0.044715
    %v1172 = vmul.f32 %v1168, 0.044715
    %v1173 = vadd.f32 %v1153, %v1169
    %v1174 = vadd.f32 %v1155, %v1170
    %v1175 = vadd.f32 %v1157, %v1171
    %v1176 = vadd.f32 %v1159, %v1172
    %v1177 = vmul.f32 %v1173, 0.7978846
    %v1178 = vmul.f32 %v1174, 0.7978846
    %v1179 = vmul.f32 %v1175, 0.7978846
    %v1180 = vmul.f32 %v1176, 0.7978846
    %v1181 = vtanh.pop %v1177
    %v1182 = vtanh.pop %v1178
    %v1183 = vtanh.pop %v1179
    %v1184 = vtanh.pop %v1180
    %v1185 = vadd.f32 %v1181, 1.0
    %v1186 = vadd.f32 %v1182, 1.0
    %v1187 = vadd.f32 %v1183, 1.0
    %v1188 = vadd.f32 %v1184, 1.0
    %v1189 = vmul.f32 %v1185, 0.5
    %v1190 = vmul.f32 %v1186, 0.5
    %v1191 = vmul.f32 %v1187, 0.5
    %v1192 = vmul.f32 %v1188, 0.5
    %v1193 = vmul.f32 %v1153, %v1189
    %v1194 = vmul.f32 %v1155, %v1190
    %v1195 = vmul.f32 %v1157, %v1191
    %v1196 = vmul.f32 %v1159, %v1192
    %v1197 = vpack.c.bf16 %v1195, %v1193
    %v1198 = vpack.c.bf16 %v1196, %v1194
    %v1199 = vld [vmem:[%s6] sm:$0xf]
    %v1200 = vld [vmem:[%s6 + $0x4] sm:$0xf]
    %v1201 = vld [vmem:[%s6 + $0x8] sm:$0xf]
    %v1202 = vld [vmem:[%s6 + $0xc] sm:$0xf]
    %v1203 = vld [vmem:[%s6 + $0x10] sm:$0xf]
    %v1204 = vld [vmem:[%s6 + $0x14] sm:$0xf]
    %v1205 = vld [vmem:[%s6 + $0x18] sm:$0xf]
    %v1206 = vld [vmem:[%s6 + $0x1c] sm:$0xf]
    %v1207 = vld [vmem:[%s6 + $0x20] sm:$0xf]
    %v1208 = vld [vmem:[%s6 + $0x24] sm:$0xf]
    %v1209 = vld [vmem:[%s6 + $0x28] sm:$0xf]
    %v1210 = vld [vmem:[%s6 + $0x2c] sm:$0xf]
    %v1211 = vld [vmem:[%s6 + $0x30] sm:$0xf]
    %v1212 = vld [vmem:[%s6 + $0x34] sm:$0xf]
    %v1213 = vld [vmem:[%s6 + $0x38] sm:$0xf]
    %v1214 = vld [vmem:[%s6 + $0x3c] sm:$0xf]
    %v1215 = vld [vmem:[%s6 + $0x40] sm:$0xf]
    %v1216 = vld [vmem:[%s6 + $0x44] sm:$0xf]
    %v1217 = vld [vmem:[%s6 + $0x48] sm:$0xf]
    %v1218 = vld [vmem:[%s6 + $0x4c] sm:$0xf]
    %v1219 = vld [vmem:[%s6 + $0x50] sm:$0xf]
    %v1220 = vld [vmem:[%s6 + $0x54] sm:$0xf]
    %v1221 = vld [vmem:[%s6 + $0x58] sm:$0xf]
    %v1222 = vld [vmem:[%s6 + $0x5c] sm:$0xf]
    %v1223 = vld [vmem:[%s6 + $0x60] sm:$0xf]
    %v1224 = vld [vmem:[%s6 + $0x64] sm:$0xf]
    %v1225 = vld [vmem:[%s6 + $0x68] sm:$0xf]
    %v1226 = vld [vmem:[%s6 + $0x6c] sm:$0xf]
    %v1227 = vld [vmem:[%s6 + $0x70] sm:$0xf]
    %v1228 = vld [vmem:[%s6 + $0x74] sm:$0xf]
    %v1229 = vld [vmem:[%s6 + $0x78] sm:$0xf]
    %v1230 = vld [vmem:[%s6 + $0x7c] sm:$0xf]
    %v1231 = vlaneseq
    %v1232 = vshrl.u32 %v1231, 7
    %v1233 = vsub.s32 3, %v1232
    %v1234 = vrot.slane %v79, %v1233
    %v1267 = vunpack.c.l.b16 %v1199
    %v1268 = vunpack.c.l.b16 %v1200
    %v1269 = vunpack.c.l.b16 %v1201
    %v1270 = vunpack.c.l.b16 %v1202
    %v1271 = vunpack.c.l.b16 %v1203
    %v1272 = vunpack.c.l.b16 %v1204
    %v1273 = vunpack.c.l.b16 %v1205
    %v1274 = vunpack.c.l.b16 %v1206
    %v1275 = vunpack.c.l.b16 %v1207
    %v1276 = vunpack.c.l.b16 %v1208
    %v1277 = vunpack.c.l.b16 %v1209
    %v1278 = vunpack.c.l.b16 %v1210
    %v1279 = vunpack.c.l.b16 %v1211
    %v1280 = vunpack.c.l.b16 %v1212
    %v1281 = vunpack.c.l.b16 %v1213
    %v1282 = vunpack.c.l.b16 %v1214
    %v1283 = vunpack.c.l.b16 %v1215
    %v1284 = vunpack.c.l.b16 %v1216
    %v1285 = vunpack.c.l.b16 %v1217
    %v1286 = vunpack.c.l.b16 %v1218
    %v1287 = vunpack.c.l.b16 %v1219
    %v1288 = vunpack.c.l.b16 %v1220
    %v1289 = vunpack.c.l.b16 %v1221
    %v1290 = vunpack.c.l.b16 %v1222
    %v1291 = vunpack.c.l.b16 %v1223
    %v1292 = vunpack.c.l.b16 %v1224
    %v1293 = vunpack.c.l.b16 %v1225
    %v1294 = vunpack.c.l.b16 %v1226
    %v1295 = vunpack.c.l.b16 %v1227
    %v1296 = vunpack.c.l.b16 %v1228
    %v1297 = vunpack.c.l.b16 %v1229
    %v1298 = vunpack.c.l.b16 %v1230
    %v1299 = vpack.c.b16 %v1268, %v1267
    %v1300 = vpack.c.b16 %v1270, %v1269
    %v1301 = vpack.c.b16 %v1272, %v1271
    %v1302 = vpack.c.b16 %v1274, %v1273
    %v1303 = vpack.c.b16 %v1276, %v1275
    %v1304 = vpack.c.b16 %v1278, %v1277
    %v1305 = vpack.c.b16 %v1280, %v1279
    %v1306 = vpack.c.b16 %v1282, %v1281
    %v1307 = vpack.c.b16 %v1284, %v1283
    %v1308 = vpack.c.b16 %v1286, %v1285
    %v1309 = vpack.c.b16 %v1288, %v1287
    %v1310 = vpack.c.b16 %v1290, %v1289
    %v1311 = vpack.c.b16 %v1292, %v1291
    %v1312 = vpack.c.b16 %v1294, %v1293
    %v1313 = vpack.c.b16 %v1296, %v1295
    %v1314 = vpack.c.b16 %v1298, %v1297
    %1331 = vmatprep.subr.bf16.mxu0 0
    %1332 = vmatpush1.bf16.msra.mxu0 %v1299
    %1333 = vmatprep.subr.bf16.mxu0 0
    %1334 = vmatpush1.bf16.msra.mxu0 %v1300
    %1335 = vmatprep.subr.bf16.mxu0 0
    %1336 = vmatpush1.bf16.msra.mxu0 %v1301
    %1337 = vmatprep.subr.bf16.mxu0 0
    %1338 = vmatpush1.bf16.msra.mxu0 %v1302
    %1339 = vmatprep.subr.bf16.mxu0 0
    %1340 = vmatpush1.bf16.msra.mxu0 %v1303
    %1341 = vmatprep.subr.bf16.mxu0 0
    %1342 = vmatpush1.bf16.msra.mxu0 %v1304
    %1343 = vmatprep.subr.bf16.mxu0 0
    %1344 = vmatpush1.bf16.msra.mxu0 %v1305
    %1345 = vmatprep.subr.bf16.mxu0 0
    %1346 = vmatpush1.bf16.msra.mxu0 %v1306
    %1347 = vmatprep.subr.bf16.mxu0 0
    %1348 = vmatpush1.bf16.msra.mxu0 %v1307
    %1349 = vmatprep.subr.bf16.mxu0 0
    %1350 = vmatpush1.bf16.msra.mxu0 %v1308
    %1351 = vmatprep.subr.bf16.mxu0 0
    %1352 = vmatpush1.bf16.msra.mxu0 %v1309
    %1353 = vmatprep.subr.bf16.mxu0 0
    %1354 = vmatpush1.bf16.msra.mxu0 %v1310
    %1355 = vmatprep.subr.bf16.mxu0 0
    %1356 = vmatpush1.bf16.msra.mxu0 %v1311
    %1357 = vmatprep.subr.bf16.mxu0 0
    %1358 = vmatpush1.bf16.msra.mxu0 %v1312
    %1359 = vmatprep.subr.bf16.mxu0 0
    %1360 = vmatpush1.bf16.msra.mxu0 %v1313
    %1361 = vmatprep.subr.bf16.mxu0 0
    %1362 = vmatpush1.bf16.msra.mxu0 %v1314
    %1363 = vmatprep.mubr.bf16.mxu0 %v1198
    %1364 = vmatmul.mubr.bf16.gmra.mrb[0].mxu0 %v1197
    %v1365 = vpop.f32.mrb[0].mxu0
    %v1366 = vadd.f32 %v1234, %v1365
    %v1367 = vpop.f32.mrb[0].mxu0
    %v1368 = vpop.f32.mrb[0].mxu0
    %v1369 = vadd.f32 %v1234, %v1368
    %v1370 = vpop.f32.mrb[0].mxu0
    %1371 = vdwg.mxu0
    %v1372 = vunpack.c.l.bf16 %v1013
    %v1373 = vunpack.c.h.bf16 %v1013
    %v1374 = vadd.f32 %v1372, %v1366
    %v1375 = vadd.f32 %v1373, %v1369
    %1376 = vadd.xlane.f32.xlu0 %v1374
    %v1377 = vpop.xlane.xlu0 %1376
    %1378 = vadd.xlane.f32.xlu0 %v1375
    %v1379 = vpop.xlane.xlu0 %1378
    %v1380 = vmul.f32 %v1377, %v47
    %v1381 = vmul.f32 %v1379, %v47
    %v1382 = vsub.f32 %v1374, %v1380
    %v1383 = vsub.f32 %v1375, %v1381
    %v1384 = vmul.f32 %v1382, %v1382
    %v1385 = vmul.f32 %v1383, %v1383
    %1386 = vadd.xlane.f32.xlu0 %v1384
    %v1387 = vpop.xlane.xlu0 %1386
    %1388 = vadd.xlane.f32.xlu0 %v1385
    %v1389 = vpop.xlane.xlu0 %1388
    %v1390 = vmul.f32 %v1387, %v47
    %v1391 = vmul.f32 %v1389, %v47
    %v1392 = vadd.f32 %v1390, 1e-12
    %v1393 = vadd.f32 %v1391, 1e-12
    %v1394 = vrsqrt.pop %v1392
    %v1395 = vrsqrt.pop %v1393
    %v1396 = vmul.f32 %v1382, %v1394
    %v1397 = vmul.f32 %v1383, %v1395
    %v1398 = vlaneseq
    %v1399 = vshrl.u32 %v1398, 7
    %v1400 = vsub.s32 6, %v1399
    %v1401 = vrot.slane %v79, %v1400
    %v1402 = vmul.f32 %v1396, %v1401
    %v1403 = vmul.f32 %v1397, %v1401
    %v1404 = vlaneseq
    %v1405 = vshrl.u32 %v1404, 7
    %v1406 = vsub.s32 7, %v1405
    %v1407 = vrot.slane %v79, %v1406
    %v1408 = vadd.f32 %v1402, %v1407
    %v1409 = vadd.f32 %v1403, %v1407
    %v1410 = vpack.c.bf16 %v1409, %v1408
    %s1411 = scalar_lea.vmem %s7, 48
    %v1412 = vld [vmem:[%s1411] sm:$0xff]
    %v1413 = vld [vmem:[%s1411 + $0x8] sm:$0xff]
    %v1414 = vld [vmem:[%s1411 + $0x10] sm:$0xff]
    %v1415 = vld [vmem:[%s1411 + $0x18] sm:$0xff]
    %v1416 = vld [vmem:[%s1411 + $0x20] sm:$0xff]
    %v1417 = vld [vmem:[%s1411 + $0x28] sm:$0xff]
    %s1418 = scalar_lea.vmem %s3, 384
    %v1419 = vld [vmem:[%s1418] sm:$0xff]
    %v1420 = vld [vmem:[%s1418 + $0x8] sm:$0xff]
    %v1421 = vld [vmem:[%s1418 + $0x10] sm:$0xff]
    %v1422 = vld [vmem:[%s1418 + $0x18] sm:$0xff]
    %v1423 = vld [vmem:[%s1418 + $0x20] sm:$0xff]
    %v1424 = vld [vmem:[%s1418 + $0x28] sm:$0xff]
    %v1425 = vld [vmem:[%s1418 + $0x30] sm:$0xff]
    %v1426 = vld [vmem:[%s1418 + $0x38] sm:$0xff]
    %v1427 = vld [vmem:[%s1418 + $0x40] sm:$0xff]
    %v1428 = vld [vmem:[%s1418 + $0x48] sm:$0xff]
    %v1429 = vld [vmem:[%s1418 + $0x50] sm:$0xff]
    %v1430 = vld [vmem:[%s1418 + $0x58] sm:$0xff]
    %v1431 = vld [vmem:[%s1418 + $0x60] sm:$0xff]
    %v1432 = vld [vmem:[%s1418 + $0x68] sm:$0xff]
    %v1433 = vld [vmem:[%s1418 + $0x70] sm:$0xff]
    %v1434 = vld [vmem:[%s1418 + $0x78] sm:$0xff]
    %v1435 = vld [vmem:[%s1418 + $0x80] sm:$0xff]
    %v1436 = vld [vmem:[%s1418 + $0x88] sm:$0xff]
    %v1437 = vld [vmem:[%s1418 + $0x90] sm:$0xff]
    %v1438 = vld [vmem:[%s1418 + $0x98] sm:$0xff]
    %v1439 = vld [vmem:[%s1418 + $0xa0] sm:$0xff]
    %v1440 = vld [vmem:[%s1418 + $0xa8] sm:$0xff]
    %v1441 = vld [vmem:[%s1418 + $0xb0] sm:$0xff]
    %v1442 = vld [vmem:[%s1418 + $0xb8] sm:$0xff]
    %v1443 = vld [vmem:[%s1418 + $0xc0] sm:$0xff]
    %v1444 = vld [vmem:[%s1418 + $0xc8] sm:$0xff]
    %v1445 = vld [vmem:[%s1418 + $0xd0] sm:$0xff]
    %v1446 = vld [vmem:[%s1418 + $0xd8] sm:$0xff]
    %v1447 = vld [vmem:[%s1418 + $0xe0] sm:$0xff]
    %v1448 = vld [vmem:[%s1418 + $0xe8] sm:$0xff]
    %v1449 = vld [vmem:[%s1418 + $0xf0] sm:$0xff]
    %v1450 = vld [vmem:[%s1418 + $0xf8] sm:$0xff]
    %v1451 = vld [vmem:[%s1418 + $0x100] sm:$0xff]
    %v1452 = vld [vmem:[%s1418 + $0x108] sm:$0xff]
    %v1453 = vld [vmem:[%s1418 + $0x110] sm:$0xff]
    %v1454 = vld [vmem:[%s1418 + $0x118] sm:$0xff]
    %v1455 = vld [vmem:[%s1418 + $0x120] sm:$0xff]
    %v1456 = vld [vmem:[%s1418 + $0x128] sm:$0xff]
    %v1457 = vld [vmem:[%s1418 + $0x130] sm:$0xff]
    %v1458 = vld [vmem:[%s1418 + $0x138] sm:$0xff]
    %v1459 = vld [vmem:[%s1418 + $0x140] sm:$0xff]
    %v1460 = vld [vmem:[%s1418 + $0x148] sm:$0xff]
    %v1461 = vld [vmem:[%s1418 + $0x150] sm:$0xff]
    %v1462 = vld [vmem:[%s1418 + $0x158] sm:$0xff]
    %v1463 = vld [vmem:[%s1418 + $0x160] sm:$0xff]
    %v1464 = vld [vmem:[%s1418 + $0x168] sm:$0xff]
    %v1465 = vld [vmem:[%s1418 + $0x170] sm:$0xff]
    %v1466 = vld [vmem:[%s1418 + $0x178] sm:$0xff]
    %v1467 = vlaneseq
    %v1468 = vshrl.u32 %v1467, 7
    %v1469 = vsub.s32 0, %v1468
    %v1470 = vrot.slane %v1412, %v1469
    %v1471 = vlaneseq
    %v1472 = vshrl.u32 %v1471, 7
    %v1473 = vsub.s32 0, %v1472
    %v1474 = vrot.slane %v1413, %v1473
    %v1475 = vlaneseq
    %v1476 = vshrl.u32 %v1475, 7
    %v1477 = vsub.s32 0, %v1476
    %v1478 = vrot.slane %v1414, %v1477
    %v1479 = vlaneseq
    %v1480 = vshrl.u32 %v1479, 7
    %v1481 = vsub.s32 0, %v1480
    %v1482 = vrot.slane %v1415, %v1481
    %v1483 = vlaneseq
    %v1484 = vshrl.u32 %v1483, 7
    %v1485 = vsub.s32 0, %v1484
    %v1486 = vrot.slane %v1416, %v1485
    %v1487 = vlaneseq
    %v1488 = vshrl.u32 %v1487, 7
    %v1489 = vsub.s32 0, %v1488
    %v1490 = vrot.slane %v1417, %v1489
    %v1539 = vunpack.c.l.b16 %v1419
    %v1540 = vunpack.c.h.b16 %v1419
    %v1541 = vunpack.c.l.b16 %v1420
    %v1542 = vunpack.c.h.b16 %v1420
    %v1543 = vunpack.c.l.b16 %v1421
    %v1544 = vunpack.c.h.b16 %v1421
    %v1545 = vunpack.c.l.b16 %v1422
    %v1546 = vunpack.c.h.b16 %v1422
    %v1547 = vunpack.c.l.b16 %v1423
    %v1548 = vunpack.c.h.b16 %v1423
    %v1549 = vunpack.c.l.b16 %v1424
    %v1550 = vunpack.c.h.b16 %v1424
    %v1551 = vunpack.c.l.b16 %v1425
    %v1552 = vunpack.c.h.b16 %v1425
    %v1553 = vunpack.c.l.b16 %v1426
    %v1554 = vunpack.c.h.b16 %v1426
    %v1555 = vunpack.c.l.b16 %v1427
    %v1556 = vunpack.c.h.b16 %v1427
    %v1557 = vunpack.c.l.b16 %v1428
    %v1558 = vunpack.c.h.b16 %v1428
    %v1559 = vunpack.c.l.b16 %v1429
    %v1560 = vunpack.c.h.b16 %v1429
    %v1561 = vunpack.c.l.b16 %v1430
    %v1562 = vunpack.c.h.b16 %v1430
    %v1563 = vunpack.c.l.b16 %v1431
    %v1564 = vunpack.c.h.b16 %v1431
    %v1565 = vunpack.c.l.b16 %v1432
    %v1566 = vunpack.c.h.b16 %v1432
    %v1567 = vunpack.c.l.b16 %v1433
    %v1568 = vunpack.c.h.b16 %v1433
    %v1569 = vunpack.c.l.b16 %v1434
    %v1570 = vunpack.c.h.b16 %v1434
    %v1571 = vunpack.c.l.b16 %v1435
    %v1572 = vunpack.c.h.b16 %v1435
    %v1573 = vunpack.c.l.b16 %v1436
    %v1574 = vunpack.c.h.b16 %v1436
    %v1575 = vunpack.c.l.b16 %v1437
    %v1576 = vunpack.c.h.b16 %v1437
    %v1577 = vunpack.c.l.b16 %v1438
    %v1578 = vunpack.c.h.b16 %v1438
    %v1579 = vunpack.c.l.b16 %v1439
    %v1580 = vunpack.c.h.b16 %v1439
    %v1581 = vunpack.c.l.b16 %v1440
    %v1582 = vunpack.c.h.b16 %v1440
    %v1583 = vunpack.c.l.b16 %v1441
    %v1584 = vunpack.c.h.b16 %v1441
    %v1585 = vunpack.c.l.b16 %v1442
    %v1586 = vunpack.c.h.b16 %v1442
    %v1587 = vunpack.c.l.b16 %v1443
    %v1588 = vunpack.c.h.b16 %v1443
    %v1589 = vunpack.c.l.b16 %v1444
    %v1590 = vunpack.c.h.b16 %v1444
    %v1591 = vunpack.c.l.b16 %v1445
    %v1592 = vunpack.c.h.b16 %v1445
    %v1593 = vunpack.c.l.b16 %v1446
    %v1594 = vunpack.c.h.b16 %v1446
    %v1595 = vunpack.c.l.b16 %v1447
    %v1596 = vunpack.c.h.b16 %v1447
    %v1597 = vunpack.c.l.b16 %v1448
    %v1598 = vunpack.c.h.b16 %v1448
    %v1599 = vunpack.c.l.b16 %v1449
    %v1600 = vunpack.c.h.b16 %v1449
    %v1601 = vunpack.c.l.b16 %v1450
    %v1602 = vunpack.c.h.b16 %v1450
    %v1603 = vunpack.c.l.b16 %v1451
    %v1604 = vunpack.c.h.b16 %v1451
    %v1605 = vunpack.c.l.b16 %v1452
    %v1606 = vunpack.c.h.b16 %v1452
    %v1607 = vunpack.c.l.b16 %v1453
    %v1608 = vunpack.c.h.b16 %v1453
    %v1609 = vunpack.c.l.b16 %v1454
    %v1610 = vunpack.c.h.b16 %v1454
    %v1611 = vunpack.c.l.b16 %v1455
    %v1612 = vunpack.c.h.b16 %v1455
    %v1613 = vunpack.c.l.b16 %v1456
    %v1614 = vunpack.c.h.b16 %v1456
    %v1615 = vunpack.c.l.b16 %v1457
    %v1616 = vunpack.c.h.b16 %v1457
    %v1617 = vunpack.c.l.b16 %v1458
    %v1618 = vunpack.c.h.b16 %v1458
    %v1619 = vunpack.c.l.b16 %v1459
    %v1620 = vunpack.c.h.b16 %v1459
    %v1621 = vunpack.c.l.b16 %v1460
    %v1622 = vunpack.c.h.b16 %v1460
    %v1623 = vunpack.c.l.b16 %v1461
    %v1624 = vunpack.c.h.b16 %v1461
    %v1625 = vunpack.c.l.b16 %v1462
    %v1626 = vunpack.c.h.b16 %v1462
    %v1627 = vunpack.c.l.b16 %v1463
    %v1628 = vunpack.c.h.b16 %v1463
    %v1629 = vunpack.c.l.b16 %v1464
    %v1630 = vunpack.c.h.b16 %v1464
    %v1631 = vunpack.c.l.b16 %v1465
    %v1632 = vunpack.c.h.b16 %v1465
    %v1633 = vunpack.c.l.b16 %v1466
    %v1634 = vunpack.c.h.b16 %v1466
    %v1635 = vpack.c.b16 %v1545, %v1539
    %v1636 = vpack.c.b16 %v1546, %v1540
    %v1637 = vpack.c.b16 %v1547, %v1541
    %v1638 = vpack.c.b16 %v1548, %v1542
    %v1639 = vpack.c.b16 %v1549, %v1543
    %v1640 = vpack.c.b16 %v1550, %v1544
    %v1641 = vpack.c.b16 %v1557, %v1551
    %v1642 = vpack.c.b16 %v1558, %v1552
    %v1643 = vpack.c.b16 %v1559, %v1553
    %v1644 = vpack.c.b16 %v1560, %v1554
    %v1645 = vpack.c.b16 %v1561, %v1555
    %v1646 = vpack.c.b16 %v1562, %v1556
    %v1647 = vpack.c.b16 %v1569, %v1563
    %v1648 = vpack.c.b16 %v1570, %v1564
    %v1649 = vpack.c.b16 %v1571, %v1565
    %v1650 = vpack.c.b16 %v1572, %v1566
    %v1651 = vpack.c.b16 %v1573, %v1567
    %v1652 = vpack.c.b16 %v1574, %v1568
    %v1653 = vpack.c.b16 %v1581, %v1575
    %v1654 = vpack.c.b16 %v1582, %v1576
    %v1655 = vpack.c.b16 %v1583, %v1577
    %v1656 = vpack.c.b16 %v1584, %v1578
    %v1657 = vpack.c.b16 %v1585, %v1579
    %v1658 = vpack.c.b16 %v1586, %v1580
    %v1659 = vpack.c.b16 %v1593, %v1587
    %v1660 = vpack.c.b16 %v1594, %v1588
    %v1661 = vpack.c.b16 %v1595, %v1589
    %v1662 = vpack.c.b16 %v1596, %v1590
    %v1663 = vpack.c.b16 %v1597, %v1591
    %v1664 = vpack.c.b16 %v1598, %v1592
    %v1665 = vpack.c.b16 %v1605, %v1599
    %v1666 = vpack.c.b16 %v1606, %v1600
    %v1667 = vpack.c.b16 %v1607, %v1601
    %v1668 = vpack.c.b16 %v1608, %v1602
    %v1669 = vpack.c.b16 %v1609, %v1603
    %v1670 = vpack.c.b16 %v1610, %v1604
    %v1671 = vpack.c.b16 %v1617, %v1611
    %v1672 = vpack.c.b16 %v1618, %v1612
    %v1673 = vpack.c.b16 %v1619, %v1613
    %v1674 = vpack.c.b16 %v1620, %v1614
    %v1675 = vpack.c.b16 %v1621, %v1615
    %v1676 = vpack.c.b16 %v1622, %v1616
    %v1677 = vpack.c.b16 %v1629, %v1623
    %v1678 = vpack.c.b16 %v1630, %v1624
    %v1679 = vpack.c.b16 %v1631, %v1625
    %v1680 = vpack.c.b16 %v1632, %v1626
    %v1681 = vpack.c.b16 %v1633, %v1627
    %v1682 = vpack.c.b16 %v1634, %v1628
    %1731 = vmatprep.subr.bf16.mxu0 %v1636
    %1732 = vmatpush1.bf16.msra.mxu0 %v1635
    %1733 = vmatprep.subr.bf16.mxu0 %v1642
    %1734 = vmatpush1.bf16.msra.mxu0 %v1641
    %1735 = vmatprep.subr.bf16.mxu0 %v1648
    %1736 = vmatpush1.bf16.msra.mxu0 %v1647
    %1737 = vmatprep.subr.bf16.mxu0 %v1654
    %1738 = vmatpush1.bf16.msra.mxu0 %v1653
    %1739 = vmatprep.subr.bf16.mxu0 %v1660
    %1740 = vmatpush1.bf16.msra.mxu0 %v1659
    %1741 = vmatprep.subr.bf16.mxu0 %v1666
    %1742 = vmatpush1.bf16.msra.mxu0 %v1665
    %1743 = vmatprep.subr.bf16.mxu0 %v1672
    %1744 = vmatpush1.bf16.msra.mxu0 %v1671
    %1745 = vmatprep.subr.bf16.mxu0 %v1678
    %1746 = vmatpush1.bf16.msra.mxu0 %v1677
    %1747 = vmatprep.subr.bf16.mxu0 0
    %1748 = vmatpush1.bf16.msra.mxu0 0
    %1749 = vmatprep.subr.bf16.mxu0 0
    %1750 = vmatpush1.bf16.msra.mxu0 0
    %1751 = vmatprep.subr.bf16.mxu0 0
    %1752 = vmatpush1.bf16.msra.mxu0 0
    %1753 = vmatprep.subr.bf16.mxu0 0
    %1754 = vmatpush1.bf16.msra.mxu0 0
    %1755 = vmatprep.subr.bf16.mxu0 0
    %1756 = vmatpush1.bf16.msra.mxu0 0
    %1757 = vmatprep.subr.bf16.mxu0 0
    %1758 = vmatpush1.bf16.msra.mxu0 0
    %1759 = vmatprep.subr.bf16.mxu0 0
    %1760 = vmatpush1.bf16.msra.mxu0 0
    %1761 = vmatprep.subr.bf16.mxu0 0
    %1762 = vmatpush1.bf16.msra.mxu0 0
    %1763 = vmatprep.mubr.bf16.mxu0 0
    %1764 = vmatmul.mubr.bf16.gmra.mrb[0].mxu0 %v1410
    %v1765 = vpop.f32.mrb[0].mxu0
    %v1766 = vadd.f32 %v1470, %v1765
    %v1767 = vpop.f32.mrb[0].mxu0
    %v1768 = vadd.f32 %v1474, %v1767
    %v1769 = vpop.f32.mrb[0].mxu0
    %v1770 = vadd.f32 %v1470, %v1769
    %v1771 = vpop.f32.mrb[0].mxu0
    %v1772 = vadd.f32 %v1474, %v1771
    %1773 = vdwg.mxu0
    %1774 = vmatprep.subr.bf16.mxu0 %v1638
    %1775 = vmatpush1.bf16.msra.mxu0 %v1637
    %1776 = vmatprep.subr.bf16.mxu0 %v1644
    %1777 = vmatpush1.bf16.msra.mxu0 %v1643
    %1778 = vmatprep.subr.bf16.mxu0 %v1650
    %1779 = vmatpush1.bf16.msra.mxu0 %v1649
    %1780 = vmatprep.subr.bf16.mxu0 %v1656
    %1781 = vmatpush1.bf16.msra.mxu0 %v1655
    %1782 = vmatprep.subr.bf16.mxu0 %v1662
    %1783 = vmatpush1.bf16.msra.mxu0 %v1661
    %1784 = vmatprep.subr.bf16.mxu0 %v1668
    %1785 = vmatpush1.bf16.msra.mxu0 %v1667
    %1786 = vmatprep.subr.bf16.mxu0 %v1674
    %1787 = vmatpush1.bf16.msra.mxu0 %v1673
    %1788 = vmatprep.subr.bf16.mxu0 %v1680
    %1789 = vmatpush1.bf16.msra.mxu0 %v1679
    %1790 = vmatprep.subr.bf16.mxu0 0
    %1791 = vmatpush1.bf16.msra.mxu0 0
    %1792 = vmatprep.subr.bf16.mxu0 0
    %1793 = vmatpush1.bf16.msra.mxu0 0
    %1794 = vmatprep.subr.bf16.mxu0 0
    %1795 = vmatpush1.bf16.msra.mxu0 0
    %1796 = vmatprep.subr.bf16.mxu0 0
    %1797 = vmatpush1.bf16.msra.mxu0 0
    %1798 = vmatprep.subr.bf16.mxu0 0
    %1799 = vmatpush1.bf16.msra.mxu0 0
    %1800 = vmatprep.subr.bf16.mxu0 0
    %1801 = vmatpush1.bf16.msra.mxu0 0
    %1802 = vmatprep.subr.bf16.mxu0 0
    %1803 = vmatpush1.bf16.msra.mxu0 0
    %1804 = vmatprep.subr.bf16.mxu0 0
    %1805 = vmatpush1.bf16.msra.mxu0 0
    %1806 = vmatprep.mubr.bf16.mxu0 0
    %1807 = vmatmul.mubr.bf16.gmra.mrb[0].mxu0 %v1410
    %v1808 = vpop.f32.mrb[0].mxu0
    %v1809 = vadd.f32 %v1478, %v1808
    %v1810 = vpop.f32.mrb[0].mxu0
    %v1811 = vadd.f32 %v1482, %v1810
    %v1812 = vpop.f32.mrb[0].mxu0
    %v1813 = vadd.f32 %v1478, %v1812
    %v1814 = vpop.f32.mrb[0].mxu0
    %v1815 = vadd.f32 %v1482, %v1814
    %1816 = vdwg.mxu0
    %1817 = vmatprep.subr.bf16.mxu0 %v1640
    %1818 = vmatpush1.bf16.msra.mxu0 %v1639
    %1819 = vmatprep.subr.bf16.mxu0 %v1646
    %1820 = vmatpush1.bf16.msra.mxu0 %v1645
    %1821 = vmatprep.subr.bf16.mxu0 %v1652
    %1822 = vmatpush1.bf16.msra.mxu0 %v1651
    %1823 = vmatprep.subr.bf16.mxu0 %v1658
    %1824 = vmatpush1.bf16.msra.mxu0 %v1657
    %1825 = vmatprep.subr.bf16.mxu0 %v1664
    %1826 = vmatpush1.bf16.msra.mxu0 %v1663
    %1827 = vmatprep.subr.bf16.mxu0 %v1670
    %1828 = vmatpush1.bf16.msra.mxu0 %v1669
    %1829 = vmatprep.subr.bf16.mxu0 %v1676
    %1830 = vmatpush1.bf16.msra.mxu0 %v1675
    %1831 = vmatprep.subr.bf16.mxu0 %v1682
    %1832 = vmatpush1.bf16.msra.mxu0 %v1681
    %1833 = vmatprep.subr.bf16.mxu0 0
    %1834 = vmatpush1.bf16.msra.mxu0 0
    %1835 = vmatprep.subr.bf16.mxu0 0
    %1836 = vmatpush1.bf16.msra.mxu0 0
    %1837 = vmatprep.subr.bf16.mxu0 0
    %1838 = vmatpush1.bf16.msra.mxu0 0
    %1839 = vmatprep.subr.bf16.mxu0 0
    %1840 = vmatpush1.bf16.msra.mxu0 0
    %1841 = vmatprep.subr.bf16.mxu0 0
    %1842 = vmatpush1.bf16.msra.mxu0 0
    %1843 = vmatprep.subr.bf16.mxu0 0
    %1844 = vmatpush1.bf16.msra.mxu0 0
    %1845 = vmatprep.subr.bf16.mxu0 0
    %1846 = vmatpush1.bf16.msra.mxu0 0
    %1847 = vmatprep.subr.bf16.mxu0 0
    %1848 = vmatpush1.bf16.msra.mxu0 0
    %1849 = vmatprep.mubr.bf16.mxu0 0
    %1850 = vmatmul.mubr.bf16.gmra.mrb[0].mxu0 %v1410
    %v1851 = vpop.f32.mrb[0].mxu0
    %v1852 = vadd.f32 %v1486, %v1851
    %v1853 = vpop.f32.mrb[0].mxu0
    %v1854 = vadd.f32 %v1490, %v1853
    %v1855 = vpop.f32.mrb[0].mxu0
    %v1856 = vadd.f32 %v1486, %v1855
    %v1857 = vpop.f32.mrb[0].mxu0
    %v1858 = vadd.f32 %v1490, %v1857
    %1859 = vdwg.mxu0
    %s1860 = scalar_lea.vmem %s4, 128
    %v1861 = vld [vmem:[%s1860] sm:$0xf]
    %v1862 = vld [vmem:[%s1860 + $0x4] sm:$0xf]
    %v1863 = vld [vmem:[%s1860 + $0x8] sm:$0xf]
    %v1864 = vld [vmem:[%s1860 + $0xc] sm:$0xf]
    %v1865 = vld [vmem:[%s1860 + $0x10] sm:$0xf]
    %v1866 = vld [vmem:[%s1860 + $0x14] sm:$0xf]
    %v1867 = vld [vmem:[%s1860 + $0x18] sm:$0xf]
    %v1868 = vld [vmem:[%s1860 + $0x1c] sm:$0xf]
    %v1869 = vld [vmem:[%s1860 + $0x20] sm:$0xf]
    %v1870 = vld [vmem:[%s1860 + $0x24] sm:$0xf]
    %v1871 = vld [vmem:[%s1860 + $0x28] sm:$0xf]
    %v1872 = vld [vmem:[%s1860 + $0x2c] sm:$0xf]
    %v1873 = vld [vmem:[%s1860 + $0x30] sm:$0xf]
    %v1874 = vld [vmem:[%s1860 + $0x34] sm:$0xf]
    %v1875 = vld [vmem:[%s1860 + $0x38] sm:$0xf]
    %v1876 = vld [vmem:[%s1860 + $0x3c] sm:$0xf]
    %v1877 = vld [vmem:[%s1860 + $0x40] sm:$0xf]
    %v1878 = vld [vmem:[%s1860 + $0x44] sm:$0xf]
    %v1879 = vld [vmem:[%s1860 + $0x48] sm:$0xf]
    %v1880 = vld [vmem:[%s1860 + $0x4c] sm:$0xf]
    %v1881 = vld [vmem:[%s1860 + $0x50] sm:$0xf]
    %v1882 = vld [vmem:[%s1860 + $0x54] sm:$0xf]
    %v1883 = vld [vmem:[%s1860 + $0x58] sm:$0xf]
    %v1884 = vld [vmem:[%s1860 + $0x5c] sm:$0xf]
    %v1885 = vld [vmem:[%s1860 + $0x60] sm:$0xf]
    %v1886 = vld [vmem:[%s1860 + $0x64] sm:$0xf]
    %v1887 = vld [vmem:[%s1860 + $0x68] sm:$0xf]
    %v1888 = vld [vmem:[%s1860 + $0x6c] sm:$0xf]
    %v1889 = vld [vmem:[%s1860 + $0x70] sm:$0xf]
    %v1890 = vld [vmem:[%s1860 + $0x74] sm:$0xf]
    %v1891 = vld [vmem:[%s1860 + $0x78] sm:$0xf]
    %v1892 = vld [vmem:[%s1860 + $0x7c] sm:$0xf]
    %v1893 = vpack.c.bf16 %v1770, %v1766
    %v1894 = vpack.c.bf16 %v1813, %v1809
    %v1895 = vpack.c.bf16 %v1856, %v1852
    %1896 = vmatprep.subr.bf16.mxu0 0
    %1897 = vmatpush1.bf16.xpose.msra.mxu0 %v1894
    %1898 = vmatprep.subr.bf16.mxu0 0
    %1899 = vmatpush1.bf16.xpose.msra.mxu0 0
    %1900 = vmatprep.subr.bf16.mxu0 0
    %1901 = vmatpush1.bf16.xpose.msra.mxu0 0
    %1902 = vmatprep.subr.bf16.mxu0 0
    %1903 = vmatpush1.bf16.xpose.msra.mxu0 0
    %1904 = vmatprep.subr.bf16.mxu0 0
    %1905 = vmatpush1.bf16.xpose.msra.mxu0 0
    %1906 = vmatprep.subr.bf16.mxu0 0
    %1907 = vmatpush1.bf16.xpose.msra.mxu0 0
    %1908 = vmatprep.subr.bf16.mxu0 0
    %1909 = vmatpush1.bf16.xpose.msra.mxu0 0
    %1910 = vmatprep.subr.bf16.mxu0 0
    %1911 = vmatpush1.bf16.xpose.msra.mxu0 0
    %1912 = vmatprep.subr.bf16.mxu0 0
    %1913 = vmatpush1.bf16.xpose.msra.mxu0 0
    %1914 = vmatprep.subr.bf16.mxu0 0
    %1915 = vmatpush1.bf16.xpose.msra.mxu0 0
    %1916 = vmatprep.subr.bf16.mxu0 0
    %1917 = vmatpush1.bf16.xpose.msra.mxu0 0
    %1918 = vmatprep.subr.bf16.mxu0 0
    %1919 = vmatpush1.bf16.xpose.msra.mxu0 0
    %1920 = vmatprep.subr.bf16.mxu0 0
    %1921 = vmatpush1.bf16.xpose.msra.mxu0 0
    %1922 = vmatprep.subr.bf16.mxu0 0
    %1923 = vmatpush1.bf16.xpose.msra.mxu0 0
    %1924 = vmatprep.subr.bf16.mxu0 0
    %1925 = vmatpush1.bf16.xpose.msra.mxu0 0
    %1926 = vmatprep.subr.bf16.mxu0 0
    %1927 = vmatpush1.bf16.xpose.msra.mxu0 0
    %1928 = vmatprep.mubr.bf16.mxu0 0
    %1929 = vmatmul.mubr.bf16.gmra.mrb[0].mxu0 %v1893
    %v1930 = vpop.f32.mrb[0].mxu0
    %v1931 = vadd.f32 0.0, %v1930
    %v1932 = vpop.f32.mrb[0].mxu0
    %v1933 = vpop.f32.mrb[0].mxu0
    %v1934 = vadd.f32 0.0, %v1933
    %v1935 = vpop.f32.mrb[0].mxu0
    %1936 = vdwg.mxu0
    %v1937 = vmul.f32 %v1931, 0.125
    %v1938 = vmul.f32 %v1934, 0.125
    %v1939 = vadd.f32 %v1937, %v37
    %v1940 = vadd.f32 %v1938, %v38
    %v1941 = vsel %vm606, %v1939, -inf
    %1942 = vmax.xlane.f32.xlu0 %v1941
    %v1943 = vpop.xlane.xlu0 %1942
    %v1944 = vsel %vm606, %v1940, -inf
    %1945 = vmax.xlane.f32.xlu0 %v1944
    %v1946 = vpop.xlane.xlu0 %1945
    %v1947 = vsub.f32 %v1939, %v1943
    %v1948 = vsub.f32 %v1940, %v1946
    %v1949 = vmul.f32 %v1947, 1.442695
    %v1950 = vpow.pop %v1949
    %v1951 = vmul.f32 %v1948, 1.442695
    %v1952 = vpow.pop %v1951
    %v1953 = vsel %vm606, %v1950, 0.0
    %1954 = vadd.xlane.f32.xlu0 %v1953
    %v1955 = vpop.xlane.xlu0 %1954
    %v1956 = vsel %vm606, %v1952, 0.0
    %1957 = vadd.xlane.f32.xlu0 %v1956
    %v1958 = vpop.xlane.xlu0 %1957
    %v1959 = vrcp.pop %v1955
    %v1960 = vmul.f32 %v1950, %v1959
    %v1961 = vrcp.pop %v1958
    %v1962 = vmul.f32 %v1952, %v1961
    %v1963 = vpack.c.bf16 %v1962, %v1960
    %v1965 = vsel %vm606, %v1963, 0
    %1967 = vmatprep.subr.bf16.mxu0 0
    %1968 = vmatpush1.bf16.msra.mxu0 %v1895
    %1969 = vmatprep.subr.bf16.mxu0 0
    %1970 = vmatpush1.bf16.msra.mxu0 0
    %1971 = vmatprep.subr.bf16.mxu0 0
    %1972 = vmatpush1.bf16.msra.mxu0 0
    %1973 = vmatprep.subr.bf16.mxu0 0
    %1974 = vmatpush1.bf16.msra.mxu0 0
    %1975 = vmatprep.subr.bf16.mxu0 0
    %1976 = vmatpush1.bf16.msra.mxu0 0
    %1977 = vmatprep.subr.bf16.mxu0 0
    %1978 = vmatpush1.bf16.msra.mxu0 0
    %1979 = vmatprep.subr.bf16.mxu0 0
    %1980 = vmatpush1.bf16.msra.mxu0 0
    %1981 = vmatprep.subr.bf16.mxu0 0
    %1982 = vmatpush1.bf16.msra.mxu0 0
    %1983 = vmatprep.subr.bf16.mxu0 0
    %1984 = vmatpush1.bf16.msra.mxu0 0
    %1985 = vmatprep.subr.bf16.mxu0 0
    %1986 = vmatpush1.bf16.msra.mxu0 0
    %1987 = vmatprep.subr.bf16.mxu0 0
    %1988 = vmatpush1.bf16.msra.mxu0 0
    %1989 = vmatprep.subr.bf16.mxu0 0
    %1990 = vmatpush1.bf16.msra.mxu0 0
    %1991 = vmatprep.subr.bf16.mxu0 0
    %1992 = vmatpush1.bf16.msra.mxu0 0
    %1993 = vmatprep.subr.bf16.mxu0 0
    %1994 = vmatpush1.bf16.msra.mxu0 0
    %1995 = vmatprep.subr.bf16.mxu0 0
    %1996 = vmatpush1.bf16.msra.mxu0 0
    %1997 = vmatprep.subr.bf16.mxu0 0
    %1998 = vmatpush1.bf16.msra.mxu0 0
    %1999 = vmatprep.mubr.bf16.mxu0 0
    %2000 = vmatmul.mubr.bf16.gmra.mrb[0].mxu0 %v1965
    %v2001 = vpop.f32.mrb[0].mxu0
    %v2002 = vadd.f32 0.0, %v2001
    %v2003 = vpop.f32.mrb[0].mxu0
    %v2004 = vpop.f32.mrb[0].mxu0
    %v2005 = vadd.f32 0.0, %v2004
    %v2006 = vpop.f32.mrb[0].mxu0
    %2007 = vdwg.mxu0
    %v2008 = vpack.c.bf16 %v2005, %v2002
    %v2009 = vpack.c.bf16 %v1772, %v1768
    %v2010 = vpack.c.bf16 %v1815, %v1811
    %v2011 = vpack.c.bf16 %v1858, %v1854
    %2012 = vmatprep.subr.bf16.mxu0 0
    %2013 = vmatpush1.bf16.xpose.msra.mxu0 %v2010
    %2014 = vmatprep.subr.bf16.mxu0 0
    %2015 = vmatpush1.bf16.xpose.msra.mxu0 0
    %2016 = vmatprep.subr.bf16.mxu0 0
    %2017 = vmatpush1.bf16.xpose.msra.mxu0 0
    %2018 = vmatprep.subr.bf16.mxu0 0
    %2019 = vmatpush1.bf16.xpose.msra.mxu0 0
    %2020 = vmatprep.subr.bf16.mxu0 0
    %2021 = vmatpush1.bf16.xpose.msra.mxu0 0
    %2022 = vmatprep.subr.bf16.mxu0 0
    %2023 = vmatpush1.bf16.xpose.msra.mxu0 0
    %2024 = vmatprep.subr.bf16.mxu0 0
    %2025 = vmatpush1.bf16.xpose.msra.mxu0 0
    %2026 = vmatprep.subr.bf16.mxu0 0
    %2027 = vmatpush1.bf16.xpose.msra.mxu0 0
    %2028 = vmatprep.subr.bf16.mxu0 0
    %2029 = vmatpush1.bf16.xpose.msra.mxu0 0
    %2030 = vmatprep.subr.bf16.mxu0 0
    %2031 = vmatpush1.bf16.xpose.msra.mxu0 0
    %2032 = vmatprep.subr.bf16.mxu0 0
    %2033 = vmatpush1.bf16.xpose.msra.mxu0 0
    %2034 = vmatprep.subr.bf16.mxu0 0
    %2035 = vmatpush1.bf16.xpose.msra.mxu0 0
    %2036 = vmatprep.subr.bf16.mxu0 0
    %2037 = vmatpush1.bf16.xpose.msra.mxu0 0
    %2038 = vmatprep.subr.bf16.mxu0 0
    %2039 = vmatpush1.bf16.xpose.msra.mxu0 0
    %2040 = vmatprep.subr.bf16.mxu0 0
    %2041 = vmatpush1.bf16.xpose.msra.mxu0 0
    %2042 = vmatprep.subr.bf16.mxu0 0
    %2043 = vmatpush1.bf16.xpose.msra.mxu0 0
    %2044 = vmatprep.mubr.bf16.mxu0 0
    %2045 = vmatmul.mubr.bf16.gmra.mrb[0].mxu0 %v2009
    %v2046 = vpop.f32.mrb[0].mxu0
    %v2047 = vadd.f32 0.0, %v2046
    %v2048 = vpop.f32.mrb[0].mxu0
    %v2049 = vpop.f32.mrb[0].mxu0
    %v2050 = vadd.f32 0.0, %v2049
    %v2051 = vpop.f32.mrb[0].mxu0
    %2052 = vdwg.mxu0
    %v2053 = vmul.f32 %v2047, 0.125
    %v2054 = vmul.f32 %v2050, 0.125
    %v2055 = vadd.f32 %v2053, %v37
    %v2056 = vadd.f32 %v2054, %v38
    %v2057 = vsel %vm606, %v2055, -inf
    %2058 = vmax.xlane.f32.xlu0 %v2057
    %v2059 = vpop.xlane.xlu0 %2058
    %v2060 = vsel %vm606, %v2056, -inf
    %2061 = vmax.xlane.f32.xlu0 %v2060
    %v2062 = vpop.xlane.xlu0 %2061
    %v2063 = vsub.f32 %v2055, %v2059
    %v2064 = vsub.f32 %v2056, %v2062
    %v2065 = vmul.f32 %v2063, 1.442695
    %v2066 = vpow.pop %v2065
    %v2067 = vmul.f32 %v2064, 1.442695
    %v2068 = vpow.pop %v2067
    %v2069 = vsel %vm606, %v2066, 0.0
    %2070 = vadd.xlane.f32.xlu0 %v2069
    %v2071 = vpop.xlane.xlu0 %2070
    %v2072 = vsel %vm606, %v2068, 0.0
    %2073 = vadd.xlane.f32.xlu0 %v2072
    %v2074 = vpop.xlane.xlu0 %2073
    %v2075 = vrcp.pop %v2071
    %v2076 = vmul.f32 %v2066, %v2075
    %v2077 = vrcp.pop %v2074
    %v2078 = vmul.f32 %v2068, %v2077
    %v2079 = vpack.c.bf16 %v2078, %v2076
    %v2081 = vsel %vm606, %v2079, 0
    %2083 = vmatprep.subr.bf16.mxu0 0
    %2084 = vmatpush1.bf16.msra.mxu0 %v2011
    %2085 = vmatprep.subr.bf16.mxu0 0
    %2086 = vmatpush1.bf16.msra.mxu0 0
    %2087 = vmatprep.subr.bf16.mxu0 0
    %2088 = vmatpush1.bf16.msra.mxu0 0
    %2089 = vmatprep.subr.bf16.mxu0 0
    %2090 = vmatpush1.bf16.msra.mxu0 0
    %2091 = vmatprep.subr.bf16.mxu0 0
    %2092 = vmatpush1.bf16.msra.mxu0 0
    %2093 = vmatprep.subr.bf16.mxu0 0
    %2094 = vmatpush1.bf16.msra.mxu0 0
    %2095 = vmatprep.subr.bf16.mxu0 0
    %2096 = vmatpush1.bf16.msra.mxu0 0
    %2097 = vmatprep.subr.bf16.mxu0 0
    %2098 = vmatpush1.bf16.msra.mxu0 0
    %2099 = vmatprep.subr.bf16.mxu0 0
    %2100 = vmatpush1.bf16.msra.mxu0 0
    %2101 = vmatprep.subr.bf16.mxu0 0
    %2102 = vmatpush1.bf16.msra.mxu0 0
    %2103 = vmatprep.subr.bf16.mxu0 0
    %2104 = vmatpush1.bf16.msra.mxu0 0
    %2105 = vmatprep.subr.bf16.mxu0 0
    %2106 = vmatpush1.bf16.msra.mxu0 0
    %2107 = vmatprep.subr.bf16.mxu0 0
    %2108 = vmatpush1.bf16.msra.mxu0 0
    %2109 = vmatprep.subr.bf16.mxu0 0
    %2110 = vmatpush1.bf16.msra.mxu0 0
    %2111 = vmatprep.subr.bf16.mxu0 0
    %2112 = vmatpush1.bf16.msra.mxu0 0
    %2113 = vmatprep.subr.bf16.mxu0 0
    %2114 = vmatpush1.bf16.msra.mxu0 0
    %2115 = vmatprep.mubr.bf16.mxu0 0
    %2116 = vmatmul.mubr.bf16.gmra.mrb[0].mxu0 %v2081
    %v2117 = vpop.f32.mrb[0].mxu0
    %v2118 = vadd.f32 0.0, %v2117
    %v2119 = vpop.f32.mrb[0].mxu0
    %v2120 = vpop.f32.mrb[0].mxu0
    %v2121 = vadd.f32 0.0, %v2120
    %v2122 = vpop.f32.mrb[0].mxu0
    %2123 = vdwg.mxu0
    %v2124 = vpack.c.bf16 %v2121, %v2118
    %v2141 = vunpack.c.l.b16 %v1877
    %v2142 = vunpack.c.l.b16 %v1878
    %v2143 = vunpack.c.l.b16 %v1879
    %v2144 = vunpack.c.l.b16 %v1880
    %v2145 = vunpack.c.l.b16 %v1881
    %v2146 = vunpack.c.l.b16 %v1882
    %v2147 = vunpack.c.l.b16 %v1883
    %v2148 = vunpack.c.l.b16 %v1884
    %v2149 = vunpack.c.l.b16 %v1885
    %v2150 = vunpack.c.l.b16 %v1886
    %v2151 = vunpack.c.l.b16 %v1887
    %v2152 = vunpack.c.l.b16 %v1888
    %v2153 = vunpack.c.l.b16 %v1889
    %v2154 = vunpack.c.l.b16 %v1890
    %v2155 = vunpack.c.l.b16 %v1891
    %v2156 = vunpack.c.l.b16 %v1892
    %v2157 = vpack.c.b16 %v2142, %v2141
    %v2158 = vpack.c.b16 %v2144, %v2143
    %v2159 = vpack.c.b16 %v2146, %v2145
    %v2160 = vpack.c.b16 %v2148, %v2147
    %v2161 = vpack.c.b16 %v2150, %v2149
    %v2162 = vpack.c.b16 %v2152, %v2151
    %v2163 = vpack.c.b16 %v2154, %v2153
    %v2164 = vpack.c.b16 %v2156, %v2155
    %2173 = vmatprep.subr.bf16.mxu0 0
    %2174 = vmatpush1.bf16.msra.mxu0 %v2157
    %2175 = vmatprep.subr.bf16.mxu0 0
    %2176 = vmatpush1.bf16.msra.mxu0 %v2158
    %2177 = vmatprep.subr.bf16.mxu0 0
    %2178 = vmatpush1.bf16.msra.mxu0 %v2159
    %2179 = vmatprep.subr.bf16.mxu0 0
    %2180 = vmatpush1.bf16.msra.mxu0 %v2160
    %2181 = vmatprep.subr.bf16.mxu0 0
    %2182 = vmatpush1.bf16.msra.mxu0 %v2161
    %2183 = vmatprep.subr.bf16.mxu0 0
    %2184 = vmatpush1.bf16.msra.mxu0 %v2162
    %2185 = vmatprep.subr.bf16.mxu0 0
    %2186 = vmatpush1.bf16.msra.mxu0 %v2163
    %2187 = vmatprep.subr.bf16.mxu0 0
    %2188 = vmatpush1.bf16.msra.mxu0 %v2164
    %2189 = vmatprep.subr.bf16.mxu0 0
    %2190 = vmatpush1.bf16.msra.mxu0 0
    %2191 = vmatprep.subr.bf16.mxu0 0
    %2192 = vmatpush1.bf16.msra.mxu0 0
    %2193 = vmatprep.subr.bf16.mxu0 0
    %2194 = vmatpush1.bf16.msra.mxu0 0
    %2195 = vmatprep.subr.bf16.mxu0 0
    %2196 = vmatpush1.bf16.msra.mxu0 0
    %2197 = vmatprep.subr.bf16.mxu0 0
    %2198 = vmatpush1.bf16.msra.mxu0 0
    %2199 = vmatprep.subr.bf16.mxu0 0
    %2200 = vmatpush1.bf16.msra.mxu0 0
    %2201 = vmatprep.subr.bf16.mxu0 0
    %2202 = vmatpush1.bf16.msra.mxu0 0
    %2203 = vmatprep.subr.bf16.mxu0 0
    %2204 = vmatpush1.bf16.msra.mxu0 0
    %2205 = vmatprep.mubr.bf16.mxu0 0
    %2206 = vmatmul.mubr.bf16.gmra.mrb[0].mxu0 %v2124
    %v2207 = vpop.f32.mrb[0].mxu0
    %v2208 = vadd.f32 0.0, %v2207
    %v2209 = vpop.f32.mrb[0].mxu0
    %v2210 = vpop.f32.mrb[0].mxu0
    %v2211 = vadd.f32 0.0, %v2210
    %v2212 = vpop.f32.mrb[0].mxu0
    %2213 = vdwg.mxu0
    %v2230 = vunpack.c.l.b16 %v1861
    %v2231 = vunpack.c.l.b16 %v1862
    %v2232 = vunpack.c.l.b16 %v1863
    %v2233 = vunpack.c.l.b16 %v1864
    %v2234 = vunpack.c.l.b16 %v1865
    %v2235 = vunpack.c.l.b16 %v1866
    %v2236 = vunpack.c.l.b16 %v1867
    %v2237 = vunpack.c.l.b16 %v1868
    %v2238 = vunpack.c.l.b16 %v1869
    %v2239 = vunpack.c.l.b16 %v1870
    %v2240 = vunpack.c.l.b16 %v1871
    %v2241 = vunpack.c.l.b16 %v1872
    %v2242 = vunpack.c.l.b16 %v1873
    %v2243 = vunpack.c.l.b16 %v1874
    %v2244 = vunpack.c.l.b16 %v1875
    %v2245 = vunpack.c.l.b16 %v1876
    %v2246 = vpack.c.b16 %v2231, %v2230
    %v2247 = vpack.c.b16 %v2233, %v2232
    %v2248 = vpack.c.b16 %v2235, %v2234
    %v2249 = vpack.c.b16 %v2237, %v2236
    %v2250 = vpack.c.b16 %v2239, %v2238
    %v2251 = vpack.c.b16 %v2241, %v2240
    %v2252 = vpack.c.b16 %v2243, %v2242
    %v2253 = vpack.c.b16 %v2245, %v2244
    %2262 = vmatprep.subr.bf16.mxu0 0
    %2263 = vmatpush1.bf16.msra.mxu0 %v2246
    %2264 = vmatprep.subr.bf16.mxu0 0
    %2265 = vmatpush1.bf16.msra.mxu0 %v2247
    %2266 = vmatprep.subr.bf16.mxu0 0
    %2267 = vmatpush1.bf16.msra.mxu0 %v2248
    %2268 = vmatprep.subr.bf16.mxu0 0
    %2269 = vmatpush1.bf16.msra.mxu0 %v2249
    %2270 = vmatprep.subr.bf16.mxu0 0
    %2271 = vmatpush1.bf16.msra.mxu0 %v2250
    %2272 = vmatprep.subr.bf16.mxu0 0
    %2273 = vmatpush1.bf16.msra.mxu0 %v2251
    %2274 = vmatprep.subr.bf16.mxu0 0
    %2275 = vmatpush1.bf16.msra.mxu0 %v2252
    %2276 = vmatprep.subr.bf16.mxu0 0
    %2277 = vmatpush1.bf16.msra.mxu0 %v2253
    %2278 = vmatprep.subr.bf16.mxu0 0
    %2279 = vmatpush1.bf16.msra.mxu0 0
    %2280 = vmatprep.subr.bf16.mxu0 0
    %2281 = vmatpush1.bf16.msra.mxu0 0
    %2282 = vmatprep.subr.bf16.mxu0 0
    %2283 = vmatpush1.bf16.msra.mxu0 0
    %2284 = vmatprep.subr.bf16.mxu0 0
    %2285 = vmatpush1.bf16.msra.mxu0 0
    %2286 = vmatprep.subr.bf16.mxu0 0
    %2287 = vmatpush1.bf16.msra.mxu0 0
    %2288 = vmatprep.subr.bf16.mxu0 0
    %2289 = vmatpush1.bf16.msra.mxu0 0
    %2290 = vmatprep.subr.bf16.mxu0 0
    %2291 = vmatpush1.bf16.msra.mxu0 0
    %2292 = vmatprep.subr.bf16.mxu0 0
    %2293 = vmatpush1.bf16.msra.mxu0 0
    %2294 = vmatprep.mubr.bf16.mxu0 0
    %2295 = vmatmul.mubr.bf16.gmra.mrb[0].mxu0 %v2008
    %v2296 = vpop.f32.mrb[0].mxu0
    %v2297 = vadd.f32 %v2208, %v2296
    %v2298 = vpop.f32.mrb[0].mxu0
    %v2299 = vpop.f32.mrb[0].mxu0
    %v2300 = vadd.f32 %v2211, %v2299
    %v2301 = vpop.f32.mrb[0].mxu0
    %2302 = vdwg.mxu0
    %v2303 = vlaneseq
    %v2304 = vshrl.u32 %v2303, 7
    %v2305 = vsub.s32 1, %v2304
    %v2306 = vrot.slane %v1412, %v2305
    %v2307 = vadd.f32 %v2297, %v2306
    %v2308 = vadd.f32 %v2300, %v2306
    %v2309 = vunpack.c.l.bf16 %v1410
    %v2310 = vunpack.c.h.bf16 %v1410
    %v2311 = vadd.f32 %v2309, %v2307
    %v2312 = vadd.f32 %v2310, %v2308
    %2313 = vadd.xlane.f32.xlu0 %v2311
    %v2314 = vpop.xlane.xlu0 %2313
    %2315 = vadd.xlane.f32.xlu0 %v2312
    %v2316 = vpop.xlane.xlu0 %2315
    %v2317 = vmul.f32 %v2314, %v47
    %v2318 = vmul.f32 %v2316, %v47
    %v2319 = vsub.f32 %v2311, %v2317
    %v2320 = vsub.f32 %v2312, %v2318
    %v2321 = vmul.f32 %v2319, %v2319
    %v2322 = vmul.f32 %v2320, %v2320
    %2323 = vadd.xlane.f32.xlu0 %v2321
    %v2324 = vpop.xlane.xlu0 %2323
    %2325 = vadd.xlane.f32.xlu0 %v2322
    %v2326 = vpop.xlane.xlu0 %2325
    %v2327 = vmul.f32 %v2324, %v47
    %v2328 = vmul.f32 %v2326, %v47
    %v2329 = vadd.f32 %v2327, 1e-12
    %v2330 = vadd.f32 %v2328, 1e-12
    %v2331 = vrsqrt.pop %v2329
    %v2332 = vrsqrt.pop %v2330
    %v2333 = vmul.f32 %v2319, %v2331
    %v2334 = vmul.f32 %v2320, %v2332
    %v2335 = vlaneseq
    %v2336 = vshrl.u32 %v2335, 7
    %v2337 = vsub.s32 4, %v2336
    %v2338 = vrot.slane %v1412, %v2337
    %v2339 = vmul.f32 %v2333, %v2338
    %v2340 = vmul.f32 %v2334, %v2338
    %v2341 = vlaneseq
    %v2342 = vshrl.u32 %v2341, 7
    %v2343 = vsub.s32 5, %v2342
    %v2344 = vrot.slane %v1412, %v2343
    %v2345 = vadd.f32 %v2339, %v2344
    %v2346 = vadd.f32 %v2340, %v2344
    %v2347 = vpack.c.bf16 %v2346, %v2345
    %s2348 = scalar_lea.vmem %s5, 128
    %v2349 = vld [vmem:[%s2348] sm:$0xff]
    %v2350 = vld [vmem:[%s2348 + $0x8] sm:$0xff]
    %v2351 = vld [vmem:[%s2348 + $0x10] sm:$0xff]
    %v2352 = vld [vmem:[%s2348 + $0x18] sm:$0xff]
    %v2353 = vld [vmem:[%s2348 + $0x20] sm:$0xff]
    %v2354 = vld [vmem:[%s2348 + $0x28] sm:$0xff]
    %v2355 = vld [vmem:[%s2348 + $0x30] sm:$0xff]
    %v2356 = vld [vmem:[%s2348 + $0x38] sm:$0xff]
    %v2357 = vld [vmem:[%s2348 + $0x40] sm:$0xff]
    %v2358 = vld [vmem:[%s2348 + $0x48] sm:$0xff]
    %v2359 = vld [vmem:[%s2348 + $0x50] sm:$0xff]
    %v2360 = vld [vmem:[%s2348 + $0x58] sm:$0xff]
    %v2361 = vld [vmem:[%s2348 + $0x60] sm:$0xff]
    %v2362 = vld [vmem:[%s2348 + $0x68] sm:$0xff]
    %v2363 = vld [vmem:[%s2348 + $0x70] sm:$0xff]
    %v2364 = vld [vmem:[%s2348 + $0x78] sm:$0xff]
    %v2365 = vlaneseq
    %v2366 = vshrl.u32 %v2365, 7
    %v2367 = vsub.s32 2, %v2366
    %v2368 = vrot.slane %v1412, %v2367
    %v2369 = vlaneseq
    %v2370 = vshrl.u32 %v2369, 7
    %v2371 = vsub.s32 2, %v2370
    %v2372 = vrot.slane %v1413, %v2371
    %v2389 = vunpack.c.l.b16 %v2349
    %v2390 = vunpack.c.h.b16 %v2349
    %v2391 = vunpack.c.l.b16 %v2350
    %v2392 = vunpack.c.h.b16 %v2350
    %v2393 = vunpack.c.l.b16 %v2351
    %v2394 = vunpack.c.h.b16 %v2351
    %v2395 = vunpack.c.l.b16 %v2352
    %v2396 = vunpack.c.h.b16 %v2352
    %v2397 = vunpack.c.l.b16 %v2353
    %v2398 = vunpack.c.h.b16 %v2353
    %v2399 = vunpack.c.l.b16 %v2354
    %v2400 = vunpack.c.h.b16 %v2354
    %v2401 = vunpack.c.l.b16 %v2355
    %v2402 = vunpack.c.h.b16 %v2355
    %v2403 = vunpack.c.l.b16 %v2356
    %v2404 = vunpack.c.h.b16 %v2356
    %v2405 = vunpack.c.l.b16 %v2357
    %v2406 = vunpack.c.h.b16 %v2357
    %v2407 = vunpack.c.l.b16 %v2358
    %v2408 = vunpack.c.h.b16 %v2358
    %v2409 = vunpack.c.l.b16 %v2359
    %v2410 = vunpack.c.h.b16 %v2359
    %v2411 = vunpack.c.l.b16 %v2360
    %v2412 = vunpack.c.h.b16 %v2360
    %v2413 = vunpack.c.l.b16 %v2361
    %v2414 = vunpack.c.h.b16 %v2361
    %v2415 = vunpack.c.l.b16 %v2362
    %v2416 = vunpack.c.h.b16 %v2362
    %v2417 = vunpack.c.l.b16 %v2363
    %v2418 = vunpack.c.h.b16 %v2363
    %v2419 = vunpack.c.l.b16 %v2364
    %v2420 = vunpack.c.h.b16 %v2364
    %v2421 = vpack.c.b16 %v2391, %v2389
    %v2422 = vpack.c.b16 %v2392, %v2390
    %v2423 = vpack.c.b16 %v2395, %v2393
    %v2424 = vpack.c.b16 %v2396, %v2394
    %v2425 = vpack.c.b16 %v2399, %v2397
    %v2426 = vpack.c.b16 %v2400, %v2398
    %v2427 = vpack.c.b16 %v2403, %v2401
    %v2428 = vpack.c.b16 %v2404, %v2402
    %v2429 = vpack.c.b16 %v2407, %v2405
    %v2430 = vpack.c.b16 %v2408, %v2406
    %v2431 = vpack.c.b16 %v2411, %v2409
    %v2432 = vpack.c.b16 %v2412, %v2410
    %v2433 = vpack.c.b16 %v2415, %v2413
    %v2434 = vpack.c.b16 %v2416, %v2414
    %v2435 = vpack.c.b16 %v2419, %v2417
    %v2436 = vpack.c.b16 %v2420, %v2418
    %2453 = vmatprep.subr.bf16.mxu0 %v2422
    %2454 = vmatpush1.bf16.msra.mxu0 %v2421
    %2455 = vmatprep.subr.bf16.mxu0 %v2424
    %2456 = vmatpush1.bf16.msra.mxu0 %v2423
    %2457 = vmatprep.subr.bf16.mxu0 %v2426
    %2458 = vmatpush1.bf16.msra.mxu0 %v2425
    %2459 = vmatprep.subr.bf16.mxu0 %v2428
    %2460 = vmatpush1.bf16.msra.mxu0 %v2427
    %2461 = vmatprep.subr.bf16.mxu0 %v2430
    %2462 = vmatpush1.bf16.msra.mxu0 %v2429
    %2463 = vmatprep.subr.bf16.mxu0 %v2432
    %2464 = vmatpush1.bf16.msra.mxu0 %v2431
    %2465 = vmatprep.subr.bf16.mxu0 %v2434
    %2466 = vmatpush1.bf16.msra.mxu0 %v2433
    %2467 = vmatprep.subr.bf16.mxu0 %v2436
    %2468 = vmatpush1.bf16.msra.mxu0 %v2435
    %2469 = vmatprep.subr.bf16.mxu0 0
    %2470 = vmatpush1.bf16.msra.mxu0 0
    %2471 = vmatprep.subr.bf16.mxu0 0
    %2472 = vmatpush1.bf16.msra.mxu0 0
    %2473 = vmatprep.subr.bf16.mxu0 0
    %2474 = vmatpush1.bf16.msra.mxu0 0
    %2475 = vmatprep.subr.bf16.mxu0 0
    %2476 = vmatpush1.bf16.msra.mxu0 0
    %2477 = vmatprep.subr.bf16.mxu0 0
    %2478 = vmatpush1.bf16.msra.mxu0 0
    %2479 = vmatprep.subr.bf16.mxu0 0
    %2480 = vmatpush1.bf16.msra.mxu0 0
    %2481 = vmatprep.subr.bf16.mxu0 0
    %2482 = vmatpush1.bf16.msra.mxu0 0
    %2483 = vmatprep.subr.bf16.mxu0 0
    %2484 = vmatpush1.bf16.msra.mxu0 0
    %2485 = vmatprep.mubr.bf16.mxu0 0
    %2486 = vmatmul.mubr.bf16.gmra.mrb[0].mxu0 %v2347
    %v2487 = vpop.f32.mrb[0].mxu0
    %v2488 = vadd.f32 %v2368, %v2487
    %v2489 = vpop.f32.mrb[0].mxu0
    %v2490 = vadd.f32 %v2372, %v2489
    %v2491 = vpop.f32.mrb[0].mxu0
    %v2492 = vadd.f32 %v2368, %v2491
    %v2493 = vpop.f32.mrb[0].mxu0
    %v2494 = vadd.f32 %v2372, %v2493
    %2495 = vdwg.mxu0
    %v2496 = vmul.f32 %v2488, %v2488
    %v2497 = vmul.f32 %v2490, %v2490
    %v2498 = vmul.f32 %v2492, %v2492
    %v2499 = vmul.f32 %v2494, %v2494
    %v2500 = vmul.f32 %v2488, %v2496
    %v2501 = vmul.f32 %v2490, %v2497
    %v2502 = vmul.f32 %v2492, %v2498
    %v2503 = vmul.f32 %v2494, %v2499
    %v2504 = vmul.f32 %v2500, 0.044715
    %v2505 = vmul.f32 %v2501, 0.044715
    %v2506 = vmul.f32 %v2502, 0.044715
    %v2507 = vmul.f32 %v2503, 0.044715
    %v2508 = vadd.f32 %v2488, %v2504
    %v2509 = vadd.f32 %v2490, %v2505
    %v2510 = vadd.f32 %v2492, %v2506
    %v2511 = vadd.f32 %v2494, %v2507
    %v2512 = vmul.f32 %v2508, 0.7978846
    %v2513 = vmul.f32 %v2509, 0.7978846
    %v2514 = vmul.f32 %v2510, 0.7978846
    %v2515 = vmul.f32 %v2511, 0.7978846
    %v2516 = vtanh.pop %v2512
    %v2517 = vtanh.pop %v2513
    %v2518 = vtanh.pop %v2514
    %v2519 = vtanh.pop %v2515
    %v2520 = vadd.f32 %v2516, 1.0
    %v2521 = vadd.f32 %v2517, 1.0
    %v2522 = vadd.f32 %v2518, 1.0
    %v2523 = vadd.f32 %v2519, 1.0
    %v2524 = vmul.f32 %v2520, 0.5
    %v2525 = vmul.f32 %v2521, 0.5
    %v2526 = vmul.f32 %v2522, 0.5
    %v2527 = vmul.f32 %v2523, 0.5
    %v2528 = vmul.f32 %v2488, %v2524
    %v2529 = vmul.f32 %v2490, %v2525
    %v2530 = vmul.f32 %v2492, %v2526
    %v2531 = vmul.f32 %v2494, %v2527
    %v2532 = vpack.c.bf16 %v2530, %v2528
    %v2533 = vpack.c.bf16 %v2531, %v2529
    %s2534 = scalar_lea.vmem %s6, 128
    %v2535 = vld [vmem:[%s2534] sm:$0xf]
    %v2536 = vld [vmem:[%s2534 + $0x4] sm:$0xf]
    %v2537 = vld [vmem:[%s2534 + $0x8] sm:$0xf]
    %v2538 = vld [vmem:[%s2534 + $0xc] sm:$0xf]
    %v2539 = vld [vmem:[%s2534 + $0x10] sm:$0xf]
    %v2540 = vld [vmem:[%s2534 + $0x14] sm:$0xf]
    %v2541 = vld [vmem:[%s2534 + $0x18] sm:$0xf]
    %v2542 = vld [vmem:[%s2534 + $0x1c] sm:$0xf]
    %v2543 = vld [vmem:[%s2534 + $0x20] sm:$0xf]
    %v2544 = vld [vmem:[%s2534 + $0x24] sm:$0xf]
    %v2545 = vld [vmem:[%s2534 + $0x28] sm:$0xf]
    %v2546 = vld [vmem:[%s2534 + $0x2c] sm:$0xf]
    %v2547 = vld [vmem:[%s2534 + $0x30] sm:$0xf]
    %v2548 = vld [vmem:[%s2534 + $0x34] sm:$0xf]
    %v2549 = vld [vmem:[%s2534 + $0x38] sm:$0xf]
    %v2550 = vld [vmem:[%s2534 + $0x3c] sm:$0xf]
    %v2551 = vld [vmem:[%s2534 + $0x40] sm:$0xf]
    %v2552 = vld [vmem:[%s2534 + $0x44] sm:$0xf]
    %v2553 = vld [vmem:[%s2534 + $0x48] sm:$0xf]
    %v2554 = vld [vmem:[%s2534 + $0x4c] sm:$0xf]
    %v2555 = vld [vmem:[%s2534 + $0x50] sm:$0xf]
    %v2556 = vld [vmem:[%s2534 + $0x54] sm:$0xf]
    %v2557 = vld [vmem:[%s2534 + $0x58] sm:$0xf]
    %v2558 = vld [vmem:[%s2534 + $0x5c] sm:$0xf]
    %v2559 = vld [vmem:[%s2534 + $0x60] sm:$0xf]
    %v2560 = vld [vmem:[%s2534 + $0x64] sm:$0xf]
    %v2561 = vld [vmem:[%s2534 + $0x68] sm:$0xf]
    %v2562 = vld [vmem:[%s2534 + $0x6c] sm:$0xf]
    %v2563 = vld [vmem:[%s2534 + $0x70] sm:$0xf]
    %v2564 = vld [vmem:[%s2534 + $0x74] sm:$0xf]
    %v2565 = vld [vmem:[%s2534 + $0x78] sm:$0xf]
    %v2566 = vld [vmem:[%s2534 + $0x7c] sm:$0xf]
    %v2567 = vlaneseq
    %v2568 = vshrl.u32 %v2567, 7
    %v2569 = vsub.s32 3, %v2568
    %v2570 = vrot.slane %v1412, %v2569
    %v2603 = vunpack.c.l.b16 %v2535
    %v2604 = vunpack.c.l.b16 %v2536
    %v2605 = vunpack.c.l.b16 %v2537
    %v2606 = vunpack.c.l.b16 %v2538
    %v2607 = vunpack.c.l.b16 %v2539
    %v2608 = vunpack.c.l.b16 %v2540
    %v2609 = vunpack.c.l.b16 %v2541
    %v2610 = vunpack.c.l.b16 %v2542
    %v2611 = vunpack.c.l.b16 %v2543
    %v2612 = vunpack.c.l.b16 %v2544
    %v2613 = vunpack.c.l.b16 %v2545
    %v2614 = vunpack.c.l.b16 %v2546
    %v2615 = vunpack.c.l.b16 %v2547
    %v2616 = vunpack.c.l.b16 %v2548
    %v2617 = vunpack.c.l.b16 %v2549
    %v2618 = vunpack.c.l.b16 %v2550
    %v2619 = vunpack.c.l.b16 %v2551
    %v2620 = vunpack.c.l.b16 %v2552
    %v2621 = vunpack.c.l.b16 %v2553
    %v2622 = vunpack.c.l.b16 %v2554
    %v2623 = vunpack.c.l.b16 %v2555
    %v2624 = vunpack.c.l.b16 %v2556
    %v2625 = vunpack.c.l.b16 %v2557
    %v2626 = vunpack.c.l.b16 %v2558
    %v2627 = vunpack.c.l.b16 %v2559
    %v2628 = vunpack.c.l.b16 %v2560
    %v2629 = vunpack.c.l.b16 %v2561
    %v2630 = vunpack.c.l.b16 %v2562
    %v2631 = vunpack.c.l.b16 %v2563
    %v2632 = vunpack.c.l.b16 %v2564
    %v2633 = vunpack.c.l.b16 %v2565
    %v2634 = vunpack.c.l.b16 %v2566
    %v2635 = vpack.c.b16 %v2604, %v2603
    %v2636 = vpack.c.b16 %v2606, %v2605
    %v2637 = vpack.c.b16 %v2608, %v2607
    %v2638 = vpack.c.b16 %v2610, %v2609
    %v2639 = vpack.c.b16 %v2612, %v2611
    %v2640 = vpack.c.b16 %v2614, %v2613
    %v2641 = vpack.c.b16 %v2616, %v2615
    %v2642 = vpack.c.b16 %v2618, %v2617
    %v2643 = vpack.c.b16 %v2620, %v2619
    %v2644 = vpack.c.b16 %v2622, %v2621
    %v2645 = vpack.c.b16 %v2624, %v2623
    %v2646 = vpack.c.b16 %v2626, %v2625
    %v2647 = vpack.c.b16 %v2628, %v2627
    %v2648 = vpack.c.b16 %v2630, %v2629
    %v2649 = vpack.c.b16 %v2632, %v2631
    %v2650 = vpack.c.b16 %v2634, %v2633
    %2667 = vmatprep.subr.bf16.mxu0 0
    %2668 = vmatpush1.bf16.msra.mxu0 %v2635
    %2669 = vmatprep.subr.bf16.mxu0 0
    %2670 = vmatpush1.bf16.msra.mxu0 %v2636
    %2671 = vmatprep.subr.bf16.mxu0 0
    %2672 = vmatpush1.bf16.msra.mxu0 %v2637
    %2673 = vmatprep.subr.bf16.mxu0 0
    %2674 = vmatpush1.bf16.msra.mxu0 %v2638
    %2675 = vmatprep.subr.bf16.mxu0 0
    %2676 = vmatpush1.bf16.msra.mxu0 %v2639
    %2677 = vmatprep.subr.bf16.mxu0 0
    %2678 = vmatpush1.bf16.msra.mxu0 %v2640
    %2679 = vmatprep.subr.bf16.mxu0 0
    %2680 = vmatpush1.bf16.msra.mxu0 %v2641
    %2681 = vmatprep.subr.bf16.mxu0 0
    %2682 = vmatpush1.bf16.msra.mxu0 %v2642
    %2683 = vmatprep.subr.bf16.mxu0 0
    %2684 = vmatpush1.bf16.msra.mxu0 %v2643
    %2685 = vmatprep.subr.bf16.mxu0 0
    %2686 = vmatpush1.bf16.msra.mxu0 %v2644
    %2687 = vmatprep.subr.bf16.mxu0 0
    %2688 = vmatpush1.bf16.msra.mxu0 %v2645
    %2689 = vmatprep.subr.bf16.mxu0 0
    %2690 = vmatpush1.bf16.msra.mxu0 %v2646
    %2691 = vmatprep.subr.bf16.mxu0 0
    %2692 = vmatpush1.bf16.msra.mxu0 %v2647
    %2693 = vmatprep.subr.bf16.mxu0 0
    %2694 = vmatpush1.bf16.msra.mxu0 %v2648
    %2695 = vmatprep.subr.bf16.mxu0 0
    %2696 = vmatpush1.bf16.msra.mxu0 %v2649
    %2697 = vmatprep.subr.bf16.mxu0 0
    %2698 = vmatpush1.bf16.msra.mxu0 %v2650
    %2699 = vmatprep.mubr.bf16.mxu0 %v2533
    %2700 = vmatmul.mubr.bf16.gmra.mrb[0].mxu0 %v2532
    %v2701 = vpop.f32.mrb[0].mxu0
    %v2702 = vadd.f32 %v2570, %v2701
    %v2703 = vpop.f32.mrb[0].mxu0
    %v2704 = vpop.f32.mrb[0].mxu0
    %v2705 = vadd.f32 %v2570, %v2704
    %v2706 = vpop.f32.mrb[0].mxu0
    %2707 = vdwg.mxu0
    %v2708 = vunpack.c.l.bf16 %v2347
    %v2709 = vunpack.c.h.bf16 %v2347
    %v2710 = vadd.f32 %v2708, %v2702
    %v2711 = vadd.f32 %v2709, %v2705
    %2712 = vadd.xlane.f32.xlu0 %v2710
    %v2713 = vpop.xlane.xlu0 %2712
    %2714 = vadd.xlane.f32.xlu0 %v2711
    %v2715 = vpop.xlane.xlu0 %2714
    %v2716 = vmul.f32 %v2713, %v47
    %v2717 = vmul.f32 %v2715, %v47
    %v2718 = vsub.f32 %v2710, %v2716
    %v2719 = vsub.f32 %v2711, %v2717
    %v2720 = vmul.f32 %v2718, %v2718
    %v2721 = vmul.f32 %v2719, %v2719
    %2722 = vadd.xlane.f32.xlu0 %v2720
    %v2723 = vpop.xlane.xlu0 %2722
    %2724 = vadd.xlane.f32.xlu0 %v2721
    %v2725 = vpop.xlane.xlu0 %2724
    %v2726 = vmul.f32 %v2723, %v47
    %v2727 = vmul.f32 %v2725, %v47
    %v2728 = vadd.f32 %v2726, 1e-12
    %v2729 = vadd.f32 %v2727, 1e-12
    %v2730 = vrsqrt.pop %v2728
    %v2731 = vrsqrt.pop %v2729
    %v2732 = vmul.f32 %v2718, %v2730
    %v2733 = vmul.f32 %v2719, %v2731
    %v2734 = vlaneseq
    %v2735 = vshrl.u32 %v2734, 7
    %v2736 = vsub.s32 6, %v2735
    %v2737 = vrot.slane %v1412, %v2736
    %v2738 = vmul.f32 %v2732, %v2737
    %v2739 = vmul.f32 %v2733, %v2737
    %v2740 = vlaneseq
    %v2741 = vshrl.u32 %v2740, 7
    %v2742 = vsub.s32 7, %v2741
    %v2743 = vrot.slane %v1412, %v2742
    %v2744 = vadd.f32 %v2738, %v2743
    %v2745 = vadd.f32 %v2739, %v2743
    %v2746 = vpack.c.bf16 %v2745, %v2744
    %v2747 = vld [vmem:[%s8] sm:$0xf]
    %v2748 = vld [vmem:[%s8 + $0x4] sm:$0xf]
    %v2749 = vld [vmem:[%s8 + $0x8] sm:$0xf]
    %v2750 = vld [vmem:[%s8 + $0xc] sm:$0xf]
    %v2751 = vld [vmem:[%s8 + $0x10] sm:$0xf]
    %v2752 = vld [vmem:[%s8 + $0x14] sm:$0xf]
    %v2753 = vld [vmem:[%s8 + $0x18] sm:$0xf]
    %v2754 = vld [vmem:[%s8 + $0x1c] sm:$0xf]
    %v2755 = vld [vmem:[%s8 + $0x20] sm:$0xf]
    %v2756 = vld [vmem:[%s8 + $0x24] sm:$0xf]
    %v2757 = vld [vmem:[%s8 + $0x28] sm:$0xf]
    %v2758 = vld [vmem:[%s8 + $0x2c] sm:$0xf]
    %v2759 = vld [vmem:[%s8 + $0x30] sm:$0xf]
    %v2760 = vld [vmem:[%s8 + $0x34] sm:$0xf]
    %v2761 = vld [vmem:[%s8 + $0x38] sm:$0xf]
    %v2762 = vld [vmem:[%s8 + $0x3c] sm:$0xf]
    %v2763 = vld [vmem:[%s9] sm:$0x1]
    %v2780 = vunpack.c.l.b16 %v2747
    %v2781 = vunpack.c.l.b16 %v2748
    %v2782 = vunpack.c.l.b16 %v2749
    %v2783 = vunpack.c.l.b16 %v2750
    %v2784 = vunpack.c.l.b16 %v2751
    %v2785 = vunpack.c.l.b16 %v2752
    %v2786 = vunpack.c.l.b16 %v2753
    %v2787 = vunpack.c.l.b16 %v2754
    %v2788 = vunpack.c.l.b16 %v2755
    %v2789 = vunpack.c.l.b16 %v2756
    %v2790 = vunpack.c.l.b16 %v2757
    %v2791 = vunpack.c.l.b16 %v2758
    %v2792 = vunpack.c.l.b16 %v2759
    %v2793 = vunpack.c.l.b16 %v2760
    %v2794 = vunpack.c.l.b16 %v2761
    %v2795 = vunpack.c.l.b16 %v2762
    %v2796 = vpack.c.b16 %v2781, %v2780
    %v2797 = vpack.c.b16 %v2783, %v2782
    %v2798 = vpack.c.b16 %v2785, %v2784
    %v2799 = vpack.c.b16 %v2787, %v2786
    %v2800 = vpack.c.b16 %v2789, %v2788
    %v2801 = vpack.c.b16 %v2791, %v2790
    %v2802 = vpack.c.b16 %v2793, %v2792
    %v2803 = vpack.c.b16 %v2795, %v2794
    %2812 = vmatprep.subr.bf16.mxu0 0
    %2813 = vmatpush1.bf16.msra.mxu0 %v2796
    %2814 = vmatprep.subr.bf16.mxu0 0
    %2815 = vmatpush1.bf16.msra.mxu0 %v2797
    %2816 = vmatprep.subr.bf16.mxu0 0
    %2817 = vmatpush1.bf16.msra.mxu0 %v2798
    %2818 = vmatprep.subr.bf16.mxu0 0
    %2819 = vmatpush1.bf16.msra.mxu0 %v2799
    %2820 = vmatprep.subr.bf16.mxu0 0
    %2821 = vmatpush1.bf16.msra.mxu0 %v2800
    %2822 = vmatprep.subr.bf16.mxu0 0
    %2823 = vmatpush1.bf16.msra.mxu0 %v2801
    %2824 = vmatprep.subr.bf16.mxu0 0
    %2825 = vmatpush1.bf16.msra.mxu0 %v2802
    %2826 = vmatprep.subr.bf16.mxu0 0
    %2827 = vmatpush1.bf16.msra.mxu0 %v2803
    %2828 = vmatprep.subr.bf16.mxu0 0
    %2829 = vmatpush1.bf16.msra.mxu0 0
    %2830 = vmatprep.subr.bf16.mxu0 0
    %2831 = vmatpush1.bf16.msra.mxu0 0
    %2832 = vmatprep.subr.bf16.mxu0 0
    %2833 = vmatpush1.bf16.msra.mxu0 0
    %2834 = vmatprep.subr.bf16.mxu0 0
    %2835 = vmatpush1.bf16.msra.mxu0 0
    %2836 = vmatprep.subr.bf16.mxu0 0
    %2837 = vmatpush1.bf16.msra.mxu0 0
    %2838 = vmatprep.subr.bf16.mxu0 0
    %2839 = vmatpush1.bf16.msra.mxu0 0
    %2840 = vmatprep.subr.bf16.mxu0 0
    %2841 = vmatpush1.bf16.msra.mxu0 0
    %2842 = vmatprep.subr.bf16.mxu0 0
    %2843 = vmatpush1.bf16.msra.mxu0 0
    %2844 = vmatprep.mubr.bf16.mxu0 0
    %2845 = vmatmul.mubr.bf16.gmra.mrb[0].mxu0 %v2746
    %v2846 = vpop.f32.mrb[0].mxu0
    %v2847 = vadd.f32 %v2763, %v2846
    %v2848 = vpop.f32.mrb[0].mxu0
    %v2849 = vpop.f32.mrb[0].mxu0
    %v2850 = vpop.f32.mrb[0].mxu0
    %2851 = vdwg.mxu0
    %2852 = vst [vmem:[#allocation2] sm:$0x1] %v2847
    // Predicated region
    $region42: #{bert_for_multilabel_forward.1} parent=1 // pred_check
      _
    $region43: #{bert_for_multilabel_forward.1} parent=1 // pred_check_branch
      %2854 = sbr.rel (0) target = $region45
    $region44: #{bert_for_multilabel_forward.1} parent=1 // pred_region
      %s2856 = ssub.s32 16, 16
      %2857 = vsyncadd [#allocation3], %s2856
      %s2859 = sshll.u32 [#allocation2], 4
      %s2860 = int_to_ptr.vmem [resolvable:$true] %s2859
      %2862 = dma.vmem_to_hbm [thread:$0]  %s2860, 16, %s10, [#allocation3]
    $region45: #{bert_for_multilabel_forward.1} parent=1 // pred_fallthru
      _
    // Predicated region
    $region46: #{bert_for_multilabel_forward.1} parent=1 // pred_check
      _
    $region47: #{bert_for_multilabel_forward.1} parent=1 // pred_check_branch
      %2864 = sbr.rel (0) target = $region49
    $region48: #{bert_for_multilabel_forward.1} parent=1 // pred_region
      %2865 = dma.done [#allocation3], 16
    $region49: #{bert_for_multilabel_forward.1} parent=1 // pred_fallthru
      _
    %2866 = vsyncpa [#allocation3], 1

</llo_original>
